<compile_context>
chip_gen: v7x
topology: tpu7x:2x2x1
jax: 0.10.0
libtpu: 0.0.40
codegen_flags: <defaults>
</compile_context>

<pallas_src>
import numpy as np
import jax
import jax.numpy as jnp
from jax.experimental import pallas as pl
from jax.experimental.pallas import tpu as pltpu

# size_dict['resnet50'] = [1024, 512, 256]
D_IN, D_H, D_A = 1024, 512, 256
N_CLASSES = 2
K_SAMPLE = 8
D_FUSED = 2 * D_A          # 512: [attention_a | attention_b] (classifier on VPU)
OUT_W = 128                # lane-dense output slab (col 0 = A_raw, cols 1:3 = scores)


def _round_up(x, m):
    return (x + m - 1) // m * m


def _tpu_config():
    """Per-generation row-tile cap and scoped-VMEM budget.

    v5e/v6e have 128 MiB VMEM -> 2048-row tiles / 64 MiB scoped limit.
    v7x has only 64 MiB VMEM per TensorCore -> cap at 1024 rows / 32 MiB.
    """
    tile, vmem = 2048, 64 << 20
    try:
        kind = jax.devices()[0].device_kind.lower()
        if "v7" in kind:
            tile, vmem = 1024, 32 << 20
    except Exception:
        pass
    try:  # belt-and-braces for any 64 MiB-VMEM part
        cap = pltpu.get_tpu_info().vmem_capacity_bytes
        if cap and cap <= (64 << 20):
            tile, vmem = min(tile, 1024), 32 << 20
    except Exception:
        pass
    return tile, vmem


MAX_TILE_N, VMEM_LIMIT = _tpu_config()


def _pick_tile(n):
    """Row-tile size: multiple of 8 sublanes; for medium/large bags prefer
    >=2 grid steps so the 'parallel' axis shards across both v7x TensorCores."""
    n_eff = max(n, 16)
    if n_eff <= 256:
        return _round_up(n_eff, 16)
    return min(MAX_TILE_N, _round_up(pl.cdiv(n_eff, 2), 256))


# ----------------------------------------------------------------------------
# Pallas kernel (one N-tile): in-kernel bf16 cast -> fc+ReLU ->
# fused [attn_a | attn_b] matmul -> tanh/sigmoid gate -> attention logit ->
# VPU classifier logits -> single full-width packed output store.
# ----------------------------------------------------------------------------
def clam_tile_kernel(h_ref, w1_ref, b1_ref, wf_ref, bf_ref, wc_ref, bc_ref,
                     wcls_ref, bcls_ref, out_ref):
    # f32 -> bf16 cast in-kernel (VPU op hidden under the MXU); avoids a
    # separate wrapper-side astype pass over the whole bag.
    hb = h_ref[...].astype(jnp.bfloat16)

    # attention_net[0..1]: Linear(1024, 512) + ReLU  (bf16 MXU, f32 accumulate)
    hfc = jnp.maximum(
        jnp.dot(hb, w1_ref[...], preferred_element_type=jnp.float32)
        + b1_ref[...], 0.0)                                        # (T, 512) f32

    # Fused gated-attention matmul: [attention_a | attention_b] in one MXU pass.
    z = jnp.dot(hfc.astype(jnp.bfloat16), wf_ref[...],
                preferred_element_type=jnp.float32) + bf_ref[...]  # (T, 512) f32
    a = jnp.tanh(z[:, 0:D_A])                                      # (T, 256)
    g = jax.nn.sigmoid(z[:, D_A:2 * D_A])                          # (T, 256)

    # attention_c Linear(256, 1): VPU multiply + XLU lane reduce (no width-1 MXU).
    A = jnp.sum(a * g * wc_ref[...], axis=-1, keepdims=True) + bc_ref[...]  # (T,1)

    # classifiers Linear(512, 2): VPU multiply + lane reduce on the f32 hfc
    # (keeps zero-padded classifier columns out of the MXU matmul).
    wcls = wcls_ref[...]                                           # (2, 512) f32
    s0 = jnp.sum(hfc * wcls[0:1, :], axis=-1, keepdims=True) + bcls_ref[:, 0:1]
    s1 = jnp.sum(hfc * wcls[1:2, :], axis=-1, keepdims=True) + bcls_ref[:, 1:2]

    # One full-width unmasked lane-dense store (no zero-init + masked sub-stores).
    t = out_ref.shape[0]
    col = jax.lax.broadcasted_iota(jnp.int32, (t, OUT_W), 1)
    out_ref[...] = jnp.where(col == 0, A,
                   jnp.where(col == 1, s0,
                   jnp.where(col == 2, s1, 0.0)))


@jax.jit
def clam_core(h2, w1_bf, b1, wf_bf, bf, wc_t, bc, wcls_t, bcls):
    """h2: (N, 1024) f32.  Returns (A_raw, A_softmax, instance_scores, preds)."""
    n = h2.shape[0]
    tile_n = _pick_tile(n)
    n_pad = _round_up(n, tile_n)
    hp = h2 if n_pad == n else jnp.pad(h2, ((0, n_pad - n), (0, 0)))

    slab = pl.pallas_call(
        clam_tile_kernel,
        out_shape=jax.ShapeDtypeStruct((n_pad, OUT_W), jnp.float32),
        grid=(n_pad // tile_n,),
        in_specs=[
            pl.BlockSpec((tile_n, D_IN), lambda i: (i, 0)),     # h tile (f32)
            pl.BlockSpec((D_IN, D_H), lambda i: (0, 0)),        # w1 bf16 (resident)
            pl.BlockSpec((1, D_H), lambda i: (0, 0)),           # b1 f32
            pl.BlockSpec((D_H, D_FUSED), lambda i: (0, 0)),     # [attn_a|attn_b] bf16
            pl.BlockSpec((1, D_FUSED), lambda i: (0, 0)),       # fused bias f32
            pl.BlockSpec((1, D_A), lambda i: (0, 0)),           # attn_c weight row
            pl.BlockSpec((1, 1), lambda i: (0, 0)),             # attn_c bias
            pl.BlockSpec((N_CLASSES, D_H), lambda i: (0, 0)),   # classifier W^T
            pl.BlockSpec((1, N_CLASSES), lambda i: (0, 0)),     # classifier b
        ],
        out_specs=pl.BlockSpec((tile_n, OUT_W), lambda i: (i, 0)),
        compiler_params=pltpu.CompilerParams(
            dimension_semantics=("parallel",),
            vmem_limit_bytes=VMEM_LIMIT),
    )(hp, w1_bf, b1, wf_bf, bf, wc_t, bc, wcls_t, bcls)

    # Padded rows hold finite garbage logits; they are sliced off HERE, before
    # the instance-axis softmax (do NOT fuse the softmax without masking them).
    A_raw = slab[:n, 0:1]                                  # (N, 1)
    scores = slab[:n, 1:1 + N_CLASSES]                     # (N, 2)

    # Softmax over instances + attention-weighted pooling: tiny (N,3) slab,
    # cheap plain JAX (matches F.softmax(A, dim=0) and the pooled preds).
    A_sm = jax.nn.softmax(A_raw, axis=0)                   # (N, 1)
    num = jnp.sum(scores * A_sm, axis=0)                   # (2,)
    den = jnp.sum(A_sm, axis=0)                            # (1,) (~1.0, kept to match)
    preds = (num / den)[None, :]                           # (1, 2)
    return A_raw, A_sm, scores, preds


# ----------------------------------------------------------------------------
# Instance-level eval (top-k select + tiny classifier + CE loss): plain JAX.
# The 16 required fc+ReLU rows are recomputed in f32 here so the big kernel
# never writes the (N, 512) hfc slab back to HBM.
# ----------------------------------------------------------------------------
# TODO(synk): topk / index_select / CrossEntropyLoss have no clean Pallas
# equivalent at k=8; kept as plain-JAX glue on a 16x1024 gathered slab.
def _cross_entropy(logits, targets):
    logp = jax.nn.log_softmax(logits, axis=1)
    return -jnp.mean(logp[jnp.arange(logits.shape[0]), targets])


@jax.jit
def _inst_eval(A_sm, h2, w1, b1, wi, bi):
    a = A_sm[:, 0]                                   # source of torch.topk(A_tp, k)
    _, top_p_ids = jax.lax.top_k(a, K_SAMPLE)
    _, top_n_ids = jax.lax.top_k(-a, K_SAMPLE)
    ids = jnp.concatenate([top_p_ids, top_n_ids], axis=0)
    hsel = jnp.maximum(h2[ids] @ w1 + b1, 0.0)       # recompute fc+ReLU on 16 rows (f32)
    targets = jnp.concatenate([jnp.ones((K_SAMPLE,), jnp.int32),
                               jnp.zeros((K_SAMPLE,), jnp.int32)], axis=0)
    logits = hsel @ wi + bi
    preds = jnp.argmax(logits, axis=1)
    return _cross_entropy(logits, targets), preds, targets


@jax.jit
def _inst_eval_out(A_sm, h2, w1, b1, wi, bi):
    a = A_sm[:, 0]
    _, top_p_ids = jax.lax.top_k(a, K_SAMPLE)
    hsel = jnp.maximum(h2[top_p_ids] @ w1 + b1, 0.0)
    targets = jnp.zeros((K_SAMPLE,), jnp.int32)
    logits = hsel @ wi + bi
    preds = jnp.argmax(logits, axis=1)
    return _cross_entropy(logits, targets), preds, targets


# ----------------------------------------------------------------------------
# Full forward, mirroring CLAM_Instance.forward
# ----------------------------------------------------------------------------
def clam_instance_forward(h, label, params, instance_eval=True,
                          return_features=False, attention_only=False,
                          subtyping=False):
    h2 = h[0]                                        # h.squeeze(0) -> (N, 1024)
    kp = params['kernel']
    A_raw, A_sm, instance_scores, preds = clam_core(
        h2, kp['w1_bf'], kp['b1'], kp['wf_bf'], kp['bf'], kp['wc_t'], kp['bc'],
        kp['wcls_t'], kp['bcls'])
    if attention_only:
        return A_raw

    results = {}
    if instance_eval:
        w1, b1 = params['fc']
        total_inst_loss = 0.0
        all_preds, all_targets = [], []
        inst_labels = np.eye(N_CLASSES, dtype=np.int32)[int(label)]   # one_hot
        for i in range(N_CLASSES):
            wi, bi = params['inst'][i]
            if inst_labels[i] == 1:
                loss, pr, tg = _inst_eval(A_sm, h2, w1, b1, wi, bi)
            elif subtyping:
                loss, pr, tg = _inst_eval_out(A_sm, h2, w1, b1, wi, bi)
            else:
                continue
            all_preds.append(pr)                     # keep on-device, no host sync
            all_targets.append(tg)
            total_inst_loss = total_inst_loss + loss
        if subtyping:
            total_inst_loss = total_inst_loss / N_CLASSES
        inst_preds = (jnp.concatenate(all_preds, axis=0)
                      if all_preds else jnp.zeros((0,), jnp.int32))
        inst_targets = (jnp.concatenate(all_targets, axis=0)
                        if all_targets else jnp.zeros((0,), jnp.int32))
        results = {'instance_loss': total_inst_loss,
                   'inst_labels': inst_targets,
                   'inst_preds': inst_preds}
    if return_features:
        # TODO(synk): hfc is not written by the kernel (saves ~1/3 of HBM
        # traffic); recomputed in plain JAX only when features are requested.
        w1, b1 = params['fc']
        results['features'] = jnp.maximum(h2 @ w1 + b1, 0.0)
    return preds, instance_scores, A_raw, results


# ----------------------------------------------------------------------------
# Deterministic parameter init (xavier-ish normals, zero biases) + kernel-ready
# fused / bf16 weight preparation (done once).
# ----------------------------------------------------------------------------
def init_params(key):
    ks = jax.random.split(key, 8)

    def lin(k, fan_in, fan_out):
        scale = jnp.sqrt(2.0 / (fan_in + fan_out)).astype(jnp.float32)
        w = jax.random.normal(k, (fan_in, fan_out), jnp.float32) * scale
        b = jnp.zeros((1, fan_out), jnp.float32)
        return w, b

    w1, b1 = lin(ks[0], D_IN, D_H)            # fc Linear(1024, 512)
    wa, ba = lin(ks[1], D_H, D_A)             # attention_a Linear(512, 256)
    wb, bb = lin(ks[2], D_H, D_A)             # attention_b Linear(512, 256)
    wc, bc = lin(ks[3], D_A, 1)               # attention_c Linear(256, 1)
    wcls, bcls = lin(ks[4], D_H, N_CLASSES)   # classifiers Linear(512, 2)
    inst = []
    for i in range(N_CLASSES):
        wi, bi = lin(ks[5 + i], D_H, 2)       # instance_classifiers[i]
        inst.append((wi, bi[0]))

    # Fused gated-attention slab (no zero-padded classifier columns).
    wf = jnp.concatenate([wa, wb], axis=1)    # (512, 512)
    bf = jnp.concatenate([ba, bb], axis=1)    # (1, 512)
    kernel = {
        'w1_bf': w1.astype(jnp.bfloat16),     # bf16 MXU operands
        'b1': b1,                             # f32 bias (f32 accumulation)
        'wf_bf': wf.astype(jnp.bfloat16),
        'bf': bf,
        'wc_t': wc.T,                         # (1, 256) f32  (VPU mul + reduce)
        'bc': bc,                             # (1, 1)   f32
        'wcls_t': wcls.T,                     # (2, 512) f32  (VPU mul + reduce)
        'bcls': bcls,                         # (1, 2)   f32
    }
    return {'fc': (w1, b1), 'kernel': kernel, 'inst': inst}


if __name__ == "__main__":
    key = jax.random.PRNGKey(0)
    k_param, k_data = jax.random.split(key)
    params = init_params(k_param)

    # Bag 1: small bag, full forward with instance-level eval.
    N = 64
    h = jax.random.normal(k_data, (1, N, D_IN), jnp.float32)
    label = 1

    preds, instance_scores, A_raw, results = clam_instance_forward(
        h, label, params, instance_eval=True)
    jax.block_until_ready((preds, instance_scores, A_raw,
                           results['instance_loss']))

    assert preds.shape == (1, N_CLASSES)
    assert instance_scores.shape == (N, N_CLASSES)
    assert A_raw.shape == (N, 1)
    assert results['inst_labels'].shape == (2 * K_SAMPLE,)
    assert bool(jnp.all(jnp.isfinite(preds)))
    assert bool(jnp.isfinite(results['instance_loss']))

    # Bag 2: exercises the multi-step grid + row-padding path (attention only).
    N2 = 600
    h_big = jax.random.normal(jax.random.PRNGKey(1), (1, N2, D_IN), jnp.float32)
    A_big = clam_instance_forward(h_big, 0, params, instance_eval=False,
                                  attention_only=True)
    jax.block_until_ready(A_big)
    assert A_big.shape == (N2, 1)
    assert bool(jnp.all(jnp.isfinite(A_big)))

    print("KERNEL_OK")
</pallas_src>

<mosaic_0001>
module attributes {stable_mosaic.version = 11 : i64} {
  func.func @clam_tile_kernel(%arg0: i32, %arg1: memref<64x1024xf32, #tpu.memory_space<vmem>>, %arg2: memref<1024x512xbf16, #tpu.memory_space<vmem>>, %arg3: memref<1x512xf32, #tpu.memory_space<vmem>>, %arg4: memref<512x512xbf16, #tpu.memory_space<vmem>>, %arg5: memref<1x512xf32, #tpu.memory_space<vmem>>, %arg6: memref<1x256xf32, #tpu.memory_space<vmem>>, %arg7: memref<1x1xf32, #tpu.memory_space<vmem>>, %arg8: memref<2x512xf32, #tpu.memory_space<vmem>>, %arg9: memref<1x2xf32, #tpu.memory_space<vmem>>, %arg10: memref<64x128xf32, #tpu.memory_space<vmem>>) attributes {dimension_semantics = [#tpu.dimension_semantics<parallel>], iteration_bounds = array<i64: 1>, scalar_prefetch = 0 : i64, scratch_operands = 0 : i64, tpu.core_type = #tpu.core_type<tc>, window_params = [{transform_indices = @transform_0, window_bounds = array<i64: 64, 1024>}, {pipeline_mode = #tpu.pipeline_mode<synchronous>, transform_indices = @transform_1, window_bounds = array<i64: 1024, 512>}, {pipeline_mode = #tpu.pipeline_mode<synchronous>, transform_indices = @transform_2, window_bounds = array<i64: 1, 512>}, {pipeline_mode = #tpu.pipeline_mode<synchronous>, transform_indices = @transform_3, window_bounds = array<i64: 512, 512>}, {pipeline_mode = #tpu.pipeline_mode<synchronous>, transform_indices = @transform_4, window_bounds = array<i64: 1, 512>}, {pipeline_mode = #tpu.pipeline_mode<synchronous>, transform_indices = @transform_5, window_bounds = array<i64: 1, 256>}, {pipeline_mode = #tpu.pipeline_mode<synchronous>, transform_indices = @transform_6, window_bounds = array<i64: 1, 1>}, {pipeline_mode = #tpu.pipeline_mode<synchronous>, transform_indices = @transform_7, window_bounds = array<i64: 2, 512>}, {pipeline_mode = #tpu.pipeline_mode<synchronous>, transform_indices = @transform_8, window_bounds = array<i64: 1, 2>}, {transform_indices = @transform_9, window_bounds = array<i64: 64, 128>}]} {
    %c0 = arith.constant 0 : index
    %c0_0 = arith.constant 0 : index
    %0 = vector.load %arg1[%c0, %c0_0] : memref<64x1024xf32, #tpu.memory_space<vmem>>, vector<64x1024xf32>
    %1 = arith.truncf %0 : vector<64x1024xf32> to vector<64x1024xbf16>
    %c0_1 = arith.constant 0 : index
    %c0_2 = arith.constant 0 : index
    %2 = vector.load %arg2[%c0_1, %c0_2] : memref<1024x512xbf16, #tpu.memory_space<vmem>>, vector<1024x512xbf16>
    %cst = arith.constant dense<0.000000e+00> : vector<64x512xf32>
    %3 = tpu.matmul %1, %2, %cst {dimension_numbers = #tpu.dot_dimension_numbers<[1], [0], [0], [1], [0, 0, 1, 1], [], []>} : vector<64x1024xbf16>, vector<1024x512xbf16>, vector<64x512xf32> -> vector<64x512xf32>
    %c0_3 = arith.constant 0 : index
    %c0_4 = arith.constant 0 : index
    %4 = vector.load %arg3[%c0_3, %c0_4] : memref<1x512xf32, #tpu.memory_space<vmem>>, vector<1x512xf32>
    %5 = vector.broadcast %4 : vector<1x512xf32> to vector<64x512xf32>
    %6 = arith.addf %3, %5 : vector<64x512xf32>
    %cst_5 = arith.constant 0.000000e+00 : f32
    %7 = vector.broadcast %cst_5 : f32 to vector<64x512xf32>
    %8 = arith.maximumf %6, %7 : vector<64x512xf32>
    %9 = arith.truncf %8 : vector<64x512xf32> to vector<64x512xbf16>
    %c0_6 = arith.constant 0 : index
    %c0_7 = arith.constant 0 : index
    %10 = vector.load %arg4[%c0_6, %c0_7] : memref<512x512xbf16, #tpu.memory_space<vmem>>, vector<512x512xbf16>
    %cst_8 = arith.constant dense<0.000000e+00> : vector<64x512xf32>
    %11 = tpu.matmul %9, %10, %cst_8 {dimension_numbers = #tpu.dot_dimension_numbers<[1], [0], [0], [1], [0, 0, 1, 1], [], []>} : vector<64x512xbf16>, vector<512x512xbf16>, vector<64x512xf32> -> vector<64x512xf32>
    %c0_9 = arith.constant 0 : index
    %c0_10 = arith.constant 0 : index
    %12 = vector.load %arg5[%c0_9, %c0_10] : memref<1x512xf32, #tpu.memory_space<vmem>>, vector<1x512xf32>
    %13 = vector.broadcast %12 : vector<1x512xf32> to vector<64x512xf32>
    %14 = arith.addf %11, %13 : vector<64x512xf32>
    %15 = vector.extract_strided_slice %14 {offsets = [0, 0], sizes = [64, 256], strides = [1, 1]} : vector<64x512xf32> to vector<64x256xf32>
    %16 = math.tanh %15 : vector<64x256xf32>
    %17 = vector.extract_strided_slice %14 {offsets = [0, 256], sizes = [64, 256], strides = [1, 1]} : vector<64x512xf32> to vector<64x256xf32>
    %18 = arith.negf %17 : vector<64x256xf32>
    %19 = math.exp %18 : vector<64x256xf32>
    %cst_11 = arith.constant 1.000000e+00 : f32
    %20 = vector.broadcast %cst_11 : f32 to vector<64x256xf32>
    %21 = arith.addf %20, %19 : vector<64x256xf32>
    %22 = arith.divf %20, %21 : vector<64x256xf32>
    %23 = arith.mulf %16, %22 : vector<64x256xf32>
    %c0_12 = arith.constant 0 : index
    %c0_13 = arith.constant 0 : index
    %24 = vector.load %arg6[%c0_12, %c0_13] : memref<1x256xf32, #tpu.memory_space<vmem>>, vector<1x256xf32>
    %25 = vector.broadcast %24 : vector<1x256xf32> to vector<64x256xf32>
    %26 = arith.mulf %23, %25 : vector<64x256xf32>
    %cst_14 = arith.constant dense<0.000000e+00> : vector<64xf32>
    %27 = vector.multi_reduction <add>, %26, %cst_14 [1] : vector<64x256xf32> to vector<64xf32>
    %28 = vector.shape_cast %27 : vector<64xf32> to vector<64x1xf32>
    %c0_15 = arith.constant 0 : index
    %c0_16 = arith.constant 0 : index
    %29 = vector.load %arg7[%c0_15, %c0_16] : memref<1x1xf32, #tpu.memory_space<vmem>>, vector<1x1xf32>
    %30 = vector.broadcast %29 : vector<1x1xf32> to vector<64x1xf32>
    %31 = arith.addf %28, %30 : vector<64x1xf32>
    %c0_17 = arith.constant 0 : index
    %c0_18 = arith.constant 0 : index
    %32 = vector.load %arg8[%c0_17, %c0_18] : memref<2x512xf32, #tpu.memory_space<vmem>>, vector<2x512xf32>
    %33 = vector.extract_strided_slice %32 {offsets = [0, 0], sizes = [1, 512], strides = [1, 1]} : vector<2x512xf32> to vector<1x512xf32>
    %34 = vector.broadcast %33 : vector<1x512xf32> to vector<64x512xf32>
    %35 = arith.mulf %8, %34 : vector<64x512xf32>
    %cst_19 = arith.constant dense<0.000000e+00> : vector<64xf32>
    %36 = vector.multi_reduction <add>, %35, %cst_19 [1] : vector<64x512xf32> to vector<64xf32>
    %37 = vector.shape_cast %36 : vector<64xf32> to vector<64x1xf32>
    %c0_20 = arith.constant 0 : index
    %c0_21 = arith.constant 0 : index
    %38 = vector.load %arg9[%c0_20, %c0_21] : memref<1x2xf32, #tpu.memory_space<vmem>>, vector<1x1xf32>
    %39 = vector.broadcast %38 : vector<1x1xf32> to vector<64x1xf32>
    %40 = arith.addf %37, %39 : vector<64x1xf32>
    %41 = vector.extract_strided_slice %32 {offsets = [1, 0], sizes = [1, 512], strides = [1, 1]} : vector<2x512xf32> to vector<1x512xf32>
    %42 = vector.broadcast %41 : vector<1x512xf32> to vector<64x512xf32>
    %43 = arith.mulf %8, %42 : vector<64x512xf32>
    %cst_22 = arith.constant dense<0.000000e+00> : vector<64xf32>
    %44 = vector.multi_reduction <add>, %43, %cst_22 [1] : vector<64x512xf32> to vector<64xf32>
    %45 = vector.shape_cast %44 : vector<64xf32> to vector<64x1xf32>
    %c0_23 = arith.constant 0 : index
    %c1 = arith.constant 1 : index
    %46 = vector.load %arg9[%c0_23, %c1] : memref<1x2xf32, #tpu.memory_space<vmem>>, vector<1x1xf32>
    %47 = vector.broadcast %46 : vector<1x1xf32> to vector<64x1xf32>
    %48 = arith.addf %45, %47 : vector<64x1xf32>
    %49 = tpu.iota {dimensions = array<i32: 1>} : vector<64x128xi32>
    %c0_i32 = arith.constant 0 : i32
    %50 = vector.broadcast %c0_i32 : i32 to vector<64x128xi32>
    %51 = arith.cmpi eq, %49, %50 : vector<64x128xi32>
    %c1_i32 = arith.constant 1 : i32
    %52 = vector.broadcast %c1_i32 : i32 to vector<64x128xi32>
    %53 = arith.cmpi eq, %49, %52 : vector<64x128xi32>
    %c2_i32 = arith.constant 2 : i32
    %54 = vector.broadcast %c2_i32 : i32 to vector<64x128xi32>
    %55 = arith.cmpi eq, %49, %54 : vector<64x128xi32>
    %cst_24 = arith.constant 0.000000e+00 : f32
    %56 = vector.shape_cast %48 : vector<64x1xf32> to vector<64x1xf32>
    %57 = vector.broadcast %56 : vector<64x1xf32> to vector<64x128xf32>
    %58 = vector.broadcast %cst_24 : f32 to vector<64x128xf32>
    %59 = arith.select %55, %57, %58 : vector<64x128xi1>, vector<64x128xf32>
    %60 = vector.shape_cast %40 : vector<64x1xf32> to vector<64x1xf32>
    %61 = vector.broadcast %60 : vector<64x1xf32> to vector<64x128xf32>
    %62 = arith.select %53, %61, %59 : vector<64x128xi1>, vector<64x128xf32>
    %63 = vector.shape_cast %31 : vector<64x1xf32> to vector<64x1xf32>
    %64 = vector.broadcast %63 : vector<64x1xf32> to vector<64x128xf32>
    %65 = arith.select %51, %64, %62 : vector<64x128xi1>, vector<64x128xf32>
    %c0_25 = arith.constant 0 : index
    %c0_26 = arith.constant 0 : index
    %66 = vector.load %arg10[%c0_25, %c0_26] : memref<64x128xf32, #tpu.memory_space<vmem>>, vector<64x128xf32>
    tpu.vector_store %arg10[%c0_25, %c0_26], %65 {strides = array<i32>} : memref<64x128xf32, #tpu.memory_space<vmem>>, vector<64x128xf32>,
    return
  }
  func.func @transform_0(%arg0: i32) -> (i32, i32) {
    %c0_i32 = arith.constant 0 : i32
    %c0_i32_0 = arith.constant 0 : i32
    return %arg0, %c0_i32 : i32, i32
  }
  func.func @transform_1(%arg0: i32) -> (i32, i32) {
    %c0_i32 = arith.constant 0 : i32
    %c0_i32_0 = arith.constant 0 : i32
    %c0_i32_1 = arith.constant 0 : i32
    return %c0_i32, %c0_i32_0 : i32, i32
  }
  func.func @transform_2(%arg0: i32) -> (i32, i32) {
    %c0_i32 = arith.constant 0 : i32
    %c0_i32_0 = arith.constant 0 : i32
    %c0_i32_1 = arith.constant 0 : i32
    return %c0_i32, %c0_i32_0 : i32, i32
  }
  func.func @transform_3(%arg0: i32) -> (i32, i32) {
    %c0_i32 = arith.constant 0 : i32
    %c0_i32_0 = arith.constant 0 : i32
    %c0_i32_1 = arith.constant 0 : i32
    return %c0_i32, %c0_i32_0 : i32, i32
  }
  func.func @transform_4(%arg0: i32) -> (i32, i32) {
    %c0_i32 = arith.constant 0 : i32
    %c0_i32_0 = arith.constant 0 : i32
    %c0_i32_1 = arith.constant 0 : i32
    return %c0_i32, %c0_i32_0 : i32, i32
  }
  func.func @transform_5(%arg0: i32) -> (i32, i32) {
    %c0_i32 = arith.constant 0 : i32
    %c0_i32_0 = arith.constant 0 : i32
    %c0_i32_1 = arith.constant 0 : i32
    return %c0_i32, %c0_i32_0 : i32, i32
  }
  func.func @transform_6(%arg0: i32) -> (i32, i32) {
    %c0_i32 = arith.constant 0 : i32
    %c0_i32_0 = arith.constant 0 : i32
    %c0_i32_1 = arith.constant 0 : i32
    return %c0_i32, %c0_i32_0 : i32, i32
  }
  func.func @transform_7(%arg0: i32) -> (i32, i32) {
    %c0_i32 = arith.constant 0 : i32
    %c0_i32_0 = arith.constant 0 : i32
    %c0_i32_1 = arith.constant 0 : i32
    return %c0_i32, %c0_i32_0 : i32, i32
  }
  func.func @transform_8(%arg0: i32) -> (i32, i32) {
    %c0_i32 = arith.constant 0 : i32
    %c0_i32_0 = arith.constant 0 : i32
    %c0_i32_1 = arith.constant 0 : i32
    return %c0_i32, %c0_i32_0 : i32, i32
  }
  func.func @transform_9(%arg0: i32) -> (i32, i32) {
    %c0_i32 = arith.constant 0 : i32
    %c0_i32_0 = arith.constant 0 : i32
    return %arg0, %c0_i32 : i32, i32
  }
}

</mosaic_0001>

<llo_original>
// kernel: clam_core.1
$region0: #{clam_core.1}
  #allocation0 [shape = 'u32[]', space=smem, size = 0x4, offset = 0x4, fixed_abs, tag = 'smem constant byte address 0x4 - core index']
  #allocation1 [shape = 'u32[144,128]{1,0:T(1,128)}', space=vmem, size = 0x12000, scoped, tag = 'internal scratch']
  #allocation2 [shape = 'f32[1,1]{1,0:T(1,128)S(1)}', space=vmem, size = 0x200, scoped, tag = 'scoped memory for clam_core.1']
  %s0 = inlined_call_operand.hbm [shape: f32[64,1024], index: 0, kind: input, shape index: {}]
  %s1 = inlined_call_operand.hbm [shape: bf16[1024,512], index: 1, kind: input, shape index: {}]
  %s2 = inlined_call_operand.hbm [shape: f32[1,512], index: 2, kind: input, shape index: {}]
  %s3 = inlined_call_operand.hbm [shape: bf16[512,512], index: 3, kind: input, shape index: {}]
  %s4 = inlined_call_operand.hbm [shape: f32[1,512], index: 4, kind: input, shape index: {}]
  %s5 = inlined_call_operand.hbm [shape: f32[1,256], index: 5, kind: input, shape index: {}]
  %s6 = inlined_call_operand.<no memory space> [shape: f32[1,1], index: 6, kind: input, shape index: {}]
  %s7 = inlined_call_operand.hbm [shape: f32[2,512], index: 7, kind: input, shape index: {}]
  %s8 = inlined_call_operand.hbm [shape: f32[1,2], index: 8, kind: input, shape index: {}]
  %s9 = inlined_call_operand.hbm [shape: f32[64,128], index: 9, kind: output, shape index: {}]
  %s10 = sld [smem:[#allocation0]]
  $region78: #{clam_core.1} parent=0
    _
  %s12 = ssub.s32 1, %s10
  %s13 = scalar_select 0, %s12, %s10
  %v14 = vstv %s6
  %15 = vst [vmem:[#allocation2] sm:$0x1] %v14
  $region1: #{clam_core.1} parent=0
    #allocation3 [shape = 'u8[262144]{0}', space=vmem, size = 0x40000, scoped, tag = 'input window, operand 0, single buffered']
    #allocation4 [shape = 's32[1]{0}', space=sflag, size = 0x4, scoped, tag = 'scoped memory for clam_core.1']
    #allocation5 [shape = 's32[1]{0}', space=sflag, size = 0x4, scoped, tag = 'scoped memory for clam_core.1']
    #allocation6 [shape = 'u8[1048576]{0}', space=vmem, size = 0x100000, scoped, tag = 'input window, operand 1, single buffered']
    #allocation7 [shape = 's32[1]{0}', space=sflag, size = 0x4, scoped, tag = 'scoped memory for clam_core.1']
    #allocation8 [shape = 'u8[2048]{0}', space=vmem, size = 0x800, scoped, tag = 'input window, operand 2, single buffered']
    #allocation9 [shape = 'u8[524288]{0}', space=vmem, size = 0x80000, scoped, tag = 'input window, operand 3, single buffered']
    #allocation10 [shape = 's32[1]{0}', space=sflag, size = 0x4, scoped, tag = 'scoped memory for clam_core.1']
    #allocation11 [shape = 'u8[2048]{0}', space=vmem, size = 0x800, scoped, tag = 'input window, operand 4, single buffered']
    #allocation12 [shape = 'u8[1024]{0}', space=vmem, size = 0x400, scoped, tag = 'input window, operand 5, single buffered']
    #allocation13 [shape = 's32[1]{0}', space=sflag, size = 0x4, scoped, tag = 'scoped memory for clam_core.1']
    #allocation14 [shape = 'u8[4096]{0}', space=vmem, size = 0x1000, scoped, tag = 'input window, operand 7, single buffered']
    #allocation15 [shape = 'u8[512]{0}', space=vmem, size = 0x400, scoped, tag = 'input window, operand 8, single buffered']
    #allocation16 [shape = 's32[1]{0}', space=sflag, size = 0x4, scoped, tag = 'scoped memory for clam_core.1']
    #allocation17 [shape = 'u8[32768]{0}', space=vmem, size = 0x8000, scoped, tag = 'output window, operand 0, single buffered']
    %16 = vsyncpa [#allocation4], 0
    %17 = vsyncpa [#allocation7], 0
    %18 = vsyncpa [#allocation10], 0
    %19 = vsyncpa [#allocation13], 0
    %20 = vsyncpa [#allocation16], 0
    %21 = vsyncpa [#allocation5], 0
    // Predicated region
    $region2: #{clam_core.1} parent=1 // pred_check
      _
    $region3: #{clam_core.1} parent=1 // pred_check_branch
      %23 = sbr.rel (0) target = $region5
    $region4: #{clam_core.1} parent=1 // pred_region
      %s25 = ssub.s32 8192, 8192
      %26 = vsyncadd [#allocation4], %s25
      %s27 = sshll.u32 [#allocation3], 4
      %s28 = int_to_ptr.vmem [resolvable:$true] %s27
      %33 = dma.hbm_to_vmem [thread:$0]  %s0, 8192, %s28, [#allocation4], 1024, 1024, 64
    $region5: #{clam_core.1} parent=1 // pred_fallthru
      _
    // Predicated region
    $region6: #{clam_core.1} parent=1 // pred_check
      _
    $region7: #{clam_core.1} parent=1 // pred_check_branch
      %35 = sbr.rel (0) target = $region9
    $region8: #{clam_core.1} parent=1 // pred_region
      %s37 = ssub.s32 32768, 32768
      %38 = vsyncadd [#allocation7], %s37
      %s39 = sshll.u32 [#allocation6], 4
      %s40 = int_to_ptr.vmem [resolvable:$true] %s39
      %45 = dma.hbm_to_vmem [thread:$0]  %s1, 32768, %s40, [#allocation7], 256, 256, 16
    $region9: #{clam_core.1} parent=1 // pred_fallthru
      _
    // Predicated region
    $region10: #{clam_core.1} parent=1 // pred_check
      _
    $region11: #{clam_core.1} parent=1 // pred_check_branch
      %47 = sbr.rel (0) target = $region13
    $region12: #{clam_core.1} parent=1 // pred_region
      %s49 = ssub.s32 64, 64
      %50 = vsyncadd [#allocation7], %s49
      %s52 = sshll.u32 [#allocation8], 4
      %s53 = int_to_ptr.vmem [resolvable:$true] %s52
      %55 = dma.hbm_to_vmem [thread:$0]  %s2, 64, %s53, [#allocation7]
    $region13: #{clam_core.1} parent=1 // pred_fallthru
      _
    // Predicated region
    $region14: #{clam_core.1} parent=1 // pred_check
      _
    $region15: #{clam_core.1} parent=1 // pred_check_branch
      %57 = sbr.rel (0) target = $region17
    $region16: #{clam_core.1} parent=1 // pred_region
      %s59 = ssub.s32 16384, 16384
      %60 = vsyncadd [#allocation10], %s59
      %s61 = sshll.u32 [#allocation9], 4
      %s62 = int_to_ptr.vmem [resolvable:$true] %s61
      %67 = dma.hbm_to_vmem [thread:$0]  %s3, 16384, %s62, [#allocation10], 256, 256, 16
    $region17: #{clam_core.1} parent=1 // pred_fallthru
      _
    // Predicated region
    $region18: #{clam_core.1} parent=1 // pred_check
      _
    $region19: #{clam_core.1} parent=1 // pred_check_branch
      %69 = sbr.rel (0) target = $region21
    $region20: #{clam_core.1} parent=1 // pred_region
      %s71 = ssub.s32 64, 64
      %72 = vsyncadd [#allocation10], %s71
      %s74 = sshll.u32 [#allocation11], 4
      %s75 = int_to_ptr.vmem [resolvable:$true] %s74
      %77 = dma.hbm_to_vmem [thread:$0]  %s4, 64, %s75, [#allocation10]
    $region21: #{clam_core.1} parent=1 // pred_fallthru
      _
    // Predicated region
    $region22: #{clam_core.1} parent=1 // pred_check
      _
    $region23: #{clam_core.1} parent=1 // pred_check_branch
      %79 = sbr.rel (0) target = $region25
    $region24: #{clam_core.1} parent=1 // pred_region
      %s81 = ssub.s32 32, 32
      %82 = vsyncadd [#allocation13], %s81
      %s84 = sshll.u32 [#allocation12], 4
      %s85 = int_to_ptr.vmem [resolvable:$true] %s84
      %87 = dma.hbm_to_vmem [thread:$0]  %s5, 32, %s85, [#allocation13]
    $region25: #{clam_core.1} parent=1 // pred_fallthru
      _
    // Predicated region
    $region26: #{clam_core.1} parent=1 // pred_check
      _
    $region27: #{clam_core.1} parent=1 // pred_check_branch
      %89 = sbr.rel (0) target = $region29
    $region28: #{clam_core.1} parent=1 // pred_region
      _
    $region29: #{clam_core.1} parent=1 // pred_fallthru
      _
    // Predicated region
    $region30: #{clam_core.1} parent=1 // pred_check
      _
    $region31: #{clam_core.1} parent=1 // pred_check_branch
      %91 = sbr.rel (0) target = $region33
    $region32: #{clam_core.1} parent=1 // pred_region
      %s93 = ssub.s32 128, 128
      %94 = vsyncadd [#allocation13], %s93
      %s96 = sshll.u32 [#allocation14], 4
      %s97 = int_to_ptr.vmem [resolvable:$true] %s96
      %99 = dma.hbm_to_vmem [thread:$0]  %s7, 128, %s97, [#allocation13]
    $region33: #{clam_core.1} parent=1 // pred_fallthru
      _
    // Predicated region
    $region34: #{clam_core.1} parent=1 // pred_check
      _
    $region35: #{clam_core.1} parent=1 // pred_check_branch
      %101 = sbr.rel (0) target = $region37
    $region36: #{clam_core.1} parent=1 // pred_region
      %s103 = ssub.s32 16, 16
      %104 = vsyncadd [#allocation16], %s103
      %s106 = sshll.u32 [#allocation15], 4
      %s107 = int_to_ptr.vmem [resolvable:$true] %s106
      %109 = dma.hbm_to_vmem [thread:$0]  %s8, 16, %s107, [#allocation16]
    $region37: #{clam_core.1} parent=1 // pred_fallthru
      _
    // Predicated region
    $region38: #{clam_core.1} parent=1 // pred_check
      _
    $region39: #{clam_core.1} parent=1 // pred_check_branch
      %111 = sbr.rel (0) target = $region41
    $region40: #{clam_core.1} parent=1 // pred_region
      %112 = dma.done [#allocation4], 8192
    $region41: #{clam_core.1} parent=1 // pred_fallthru
      _
    // Predicated region
    $region42: #{clam_core.1} parent=1 // pred_check
      _
    $region43: #{clam_core.1} parent=1 // pred_check_branch
      %114 = sbr.rel (0) target = $region45
    $region44: #{clam_core.1} parent=1 // pred_region
      %115 = dma.done [#allocation7], 32768
    $region45: #{clam_core.1} parent=1 // pred_fallthru
      _
    // Predicated region
    $region46: #{clam_core.1} parent=1 // pred_check
      _
    $region47: #{clam_core.1} parent=1 // pred_check_branch
      %117 = sbr.rel (0) target = $region49
    $region48: #{clam_core.1} parent=1 // pred_region
      %118 = dma.done [#allocation7], 64
    $region49: #{clam_core.1} parent=1 // pred_fallthru
      _
    // Predicated region
    $region50: #{clam_core.1} parent=1 // pred_check
      _
    $region51: #{clam_core.1} parent=1 // pred_check_branch
      %120 = sbr.rel (0) target = $region53
    $region52: #{clam_core.1} parent=1 // pred_region
      %121 = dma.done [#allocation10], 16384
    $region53: #{clam_core.1} parent=1 // pred_fallthru
      _
    // Predicated region
    $region54: #{clam_core.1} parent=1 // pred_check
      _
    $region55: #{clam_core.1} parent=1 // pred_check_branch
      %123 = sbr.rel (0) target = $region57
    $region56: #{clam_core.1} parent=1 // pred_region
      %124 = dma.done [#allocation10], 64
    $region57: #{clam_core.1} parent=1 // pred_fallthru
      _
    // Predicated region
    $region58: #{clam_core.1} parent=1 // pred_check
      _
    $region59: #{clam_core.1} parent=1 // pred_check_branch
      %126 = sbr.rel (0) target = $region61
    $region60: #{clam_core.1} parent=1 // pred_region
      %127 = dma.done [#allocation13], 32
    $region61: #{clam_core.1} parent=1 // pred_fallthru
      _
    // Predicated region
    $region62: #{clam_core.1} parent=1 // pred_check
      _
    $region63: #{clam_core.1} parent=1 // pred_check_branch
      %129 = sbr.rel (0) target = $region65
    $region64: #{clam_core.1} parent=1 // pred_region
      %130 = dma.done [#allocation13], 128
    $region65: #{clam_core.1} parent=1 // pred_fallthru
      _
    // Predicated region
    $region66: #{clam_core.1} parent=1 // pred_check
      _
    $region67: #{clam_core.1} parent=1 // pred_check_branch
      %132 = sbr.rel (0) target = $region69
    $region68: #{clam_core.1} parent=1 // pred_region
      %133 = dma.done [#allocation16], 16
    $region69: #{clam_core.1} parent=1 // pred_fallthru
      _
    %v134 = vld [vmem:[#allocation3] sm:$0xff]
    %v135 = vld [vmem:[#allocation3 + $0x8] sm:$0xff]
    %v136 = vld [vmem:[#allocation3 + $0x10] sm:$0xff]
    %v137 = vld [vmem:[#allocation3 + $0x18] sm:$0xff]
    %v138 = vld [vmem:[#allocation3 + $0x20] sm:$0xff]
    %v139 = vld [vmem:[#allocation3 + $0x28] sm:$0xff]
    %v140 = vld [vmem:[#allocation3 + $0x30] sm:$0xff]
    %v141 = vld [vmem:[#allocation3 + $0x38] sm:$0xff]
    %v142 = vld [vmem:[#allocation3 + $0x40] sm:$0xff]
    %v143 = vld [vmem:[#allocation3 + $0x48] sm:$0xff]
    %v144 = vld [vmem:[#allocation3 + $0x50] sm:$0xff]
    %v145 = vld [vmem:[#allocation3 + $0x58] sm:$0xff]
    %v146 = vld [vmem:[#allocation3 + $0x60] sm:$0xff]
    %v147 = vld [vmem:[#allocation3 + $0x68] sm:$0xff]
    %v148 = vld [vmem:[#allocation3 + $0x70] sm:$0xff]
    %v149 = vld [vmem:[#allocation3 + $0x78] sm:$0xff]
    %v150 = vld [vmem:[#allocation3 + $0x80] sm:$0xff]
    %v151 = vld [vmem:[#allocation3 + $0x88] sm:$0xff]
    %v152 = vld [vmem:[#allocation3 + $0x90] sm:$0xff]
    %v153 = vld [vmem:[#allocation3 + $0x98] sm:$0xff]
    %v154 = vld [vmem:[#allocation3 + $0xa0] sm:$0xff]
    %v155 = vld [vmem:[#allocation3 + $0xa8] sm:$0xff]
    %v156 = vld [vmem:[#allocation3 + $0xb0] sm:$0xff]
    %v157 = vld [vmem:[#allocation3 + $0xb8] sm:$0xff]
    %v158 = vld [vmem:[#allocation3 + $0xc0] sm:$0xff]
    %v159 = vld [vmem:[#allocation3 + $0xc8] sm:$0xff]
    %v160 = vld [vmem:[#allocation3 + $0xd0] sm:$0xff]
    %v161 = vld [vmem:[#allocation3 + $0xd8] sm:$0xff]
    %v162 = vld [vmem:[#allocation3 + $0xe0] sm:$0xff]
    %v163 = vld [vmem:[#allocation3 + $0xe8] sm:$0xff]
    %v164 = vld [vmem:[#allocation3 + $0xf0] sm:$0xff]
    %v165 = vld [vmem:[#allocation3 + $0xf8] sm:$0xff]
    %v166 = vld [vmem:[#allocation3 + $0x100] sm:$0xff]
    %v167 = vld [vmem:[#allocation3 + $0x108] sm:$0xff]
    %v168 = vld [vmem:[#allocation3 + $0x110] sm:$0xff]
    %v169 = vld [vmem:[#allocation3 + $0x118] sm:$0xff]
    %v170 = vld [vmem:[#allocation3 + $0x120] sm:$0xff]
    %v171 = vld [vmem:[#allocation3 + $0x128] sm:$0xff]
    %v172 = vld [vmem:[#allocation3 + $0x130] sm:$0xff]
    %v173 = vld [vmem:[#allocation3 + $0x138] sm:$0xff]
    %v174 = vld [vmem:[#allocation3 + $0x140] sm:$0xff]
    %v175 = vld [vmem:[#allocation3 + $0x148] sm:$0xff]
    %v176 = vld [vmem:[#allocation3 + $0x150] sm:$0xff]
    %v177 = vld [vmem:[#allocation3 + $0x158] sm:$0xff]
    %v178 = vld [vmem:[#allocation3 + $0x160] sm:$0xff]
    %v179 = vld [vmem:[#allocation3 + $0x168] sm:$0xff]
    %v180 = vld [vmem:[#allocation3 + $0x170] sm:$0xff]
    %v181 = vld [vmem:[#allocation3 + $0x178] sm:$0xff]
    %v182 = vld [vmem:[#allocation3 + $0x180] sm:$0xff]
    %v183 = vld [vmem:[#allocation3 + $0x188] sm:$0xff]
    %v184 = vld [vmem:[#allocation3 + $0x190] sm:$0xff]
    %v185 = vld [vmem:[#allocation3 + $0x198] sm:$0xff]
    %v186 = vld [vmem:[#allocation3 + $0x1a0] sm:$0xff]
    %v187 = vld [vmem:[#allocation3 + $0x1a8] sm:$0xff]
    %v188 = vld [vmem:[#allocation3 + $0x1b0] sm:$0xff]
    %v189 = vld [vmem:[#allocation3 + $0x1b8] sm:$0xff]
    %v190 = vld [vmem:[#allocation3 + $0x1c0] sm:$0xff]
    %v191 = vld [vmem:[#allocation3 + $0x1c8] sm:$0xff]
    %v192 = vld [vmem:[#allocation3 + $0x1d0] sm:$0xff]
    %v193 = vld [vmem:[#allocation3 + $0x1d8] sm:$0xff]
    %v194 = vld [vmem:[#allocation3 + $0x1e0] sm:$0xff]
    %v195 = vld [vmem:[#allocation3 + $0x1e8] sm:$0xff]
    %v196 = vld [vmem:[#allocation3 + $0x1f0] sm:$0xff]
    %v197 = vld [vmem:[#allocation3 + $0x1f8] sm:$0xff]
    %v198 = vpack.c.bf16 %v142, %v134
    %v199 = vpack.c.bf16 %v143, %v135
    %v200 = vpack.c.bf16 %v144, %v136
    %v201 = vpack.c.bf16 %v145, %v137
    %v202 = vpack.c.bf16 %v146, %v138
    %v203 = vpack.c.bf16 %v147, %v139
    %v204 = vpack.c.bf16 %v148, %v140
    %v205 = vpack.c.bf16 %v149, %v141
    %v206 = vpack.c.bf16 %v158, %v150
    %v207 = vpack.c.bf16 %v159, %v151
    %v208 = vpack.c.bf16 %v160, %v152
    %v209 = vpack.c.bf16 %v161, %v153
    %v210 = vpack.c.bf16 %v162, %v154
    %v211 = vpack.c.bf16 %v163, %v155
    %v212 = vpack.c.bf16 %v164, %v156
    %v213 = vpack.c.bf16 %v165, %v157
    %v214 = vpack.c.bf16 %v174, %v166
    %v215 = vpack.c.bf16 %v175, %v167
    %v216 = vpack.c.bf16 %v176, %v168
    %v217 = vpack.c.bf16 %v177, %v169
    %v218 = vpack.c.bf16 %v178, %v170
    %v219 = vpack.c.bf16 %v179, %v171
    %v220 = vpack.c.bf16 %v180, %v172
    %v221 = vpack.c.bf16 %v181, %v173
    %v222 = vpack.c.bf16 %v190, %v182
    %v223 = vpack.c.bf16 %v191, %v183
    %v224 = vpack.c.bf16 %v192, %v184
    %v225 = vpack.c.bf16 %v193, %v185
    %v226 = vpack.c.bf16 %v194, %v186
    %v227 = vpack.c.bf16 %v195, %v187
    %v228 = vpack.c.bf16 %v196, %v188
    %v229 = vpack.c.bf16 %v197, %v189
    %v230 = vld [vmem:[#allocation6] sm:$0xff]
    %v231 = vld [vmem:[#allocation6 + $0x8] sm:$0xff]
    %v232 = vld [vmem:[#allocation6 + $0x10] sm:$0xff]
    %v233 = vld [vmem:[#allocation6 + $0x18] sm:$0xff]
    %v234 = vld [vmem:[#allocation6 + $0x20] sm:$0xff]
    %v235 = vld [vmem:[#allocation6 + $0x28] sm:$0xff]
    %v236 = vld [vmem:[#allocation6 + $0x30] sm:$0xff]
    %v237 = vld [vmem:[#allocation6 + $0x38] sm:$0xff]
    %v238 = vld [vmem:[#allocation6 + $0x40] sm:$0xff]
    %v239 = vld [vmem:[#allocation6 + $0x48] sm:$0xff]
    %v240 = vld [vmem:[#allocation6 + $0x50] sm:$0xff]
    %v241 = vld [vmem:[#allocation6 + $0x58] sm:$0xff]
    %v242 = vld [vmem:[#allocation6 + $0x60] sm:$0xff]
    %v243 = vld [vmem:[#allocation6 + $0x68] sm:$0xff]
    %v244 = vld [vmem:[#allocation6 + $0x70] sm:$0xff]
    %v245 = vld [vmem:[#allocation6 + $0x78] sm:$0xff]
    %v246 = vld [vmem:[#allocation6 + $0x80] sm:$0xff]
    %v247 = vld [vmem:[#allocation6 + $0x88] sm:$0xff]
    %v248 = vld [vmem:[#allocation6 + $0x90] sm:$0xff]
    %v249 = vld [vmem:[#allocation6 + $0x98] sm:$0xff]
    %v250 = vld [vmem:[#allocation6 + $0xa0] sm:$0xff]
    %v251 = vld [vmem:[#allocation6 + $0xa8] sm:$0xff]
    %v252 = vld [vmem:[#allocation6 + $0xb0] sm:$0xff]
    %v253 = vld [vmem:[#allocation6 + $0xb8] sm:$0xff]
    %v254 = vld [vmem:[#allocation6 + $0xc0] sm:$0xff]
    %v255 = vld [vmem:[#allocation6 + $0xc8] sm:$0xff]
    %v256 = vld [vmem:[#allocation6 + $0xd0] sm:$0xff]
    %v257 = vld [vmem:[#allocation6 + $0xd8] sm:$0xff]
    %v258 = vld [vmem:[#allocation6 + $0xe0] sm:$0xff]
    %v259 = vld [vmem:[#allocation6 + $0xe8] sm:$0xff]
    %v260 = vld [vmem:[#allocation6 + $0xf0] sm:$0xff]
    %v261 = vld [vmem:[#allocation6 + $0xf8] sm:$0xff]
    %v262 = vld [vmem:[#allocation6 + $0x100] sm:$0xff]
    %v263 = vld [vmem:[#allocation6 + $0x108] sm:$0xff]
    %v264 = vld [vmem:[#allocation6 + $0x110] sm:$0xff]
    %v265 = vld [vmem:[#allocation6 + $0x118] sm:$0xff]
    %v266 = vld [vmem:[#allocation6 + $0x120] sm:$0xff]
    %v267 = vld [vmem:[#allocation6 + $0x128] sm:$0xff]
    %v268 = vld [vmem:[#allocation6 + $0x130] sm:$0xff]
    %v269 = vld [vmem:[#allocation6 + $0x138] sm:$0xff]
    %v270 = vld [vmem:[#allocation6 + $0x140] sm:$0xff]
    %v271 = vld [vmem:[#allocation6 + $0x148] sm:$0xff]
    %v272 = vld [vmem:[#allocation6 + $0x150] sm:$0xff]
    %v273 = vld [vmem:[#allocation6 + $0x158] sm:$0xff]
    %v274 = vld [vmem:[#allocation6 + $0x160] sm:$0xff]
    %v275 = vld [vmem:[#allocation6 + $0x168] sm:$0xff]
    %v276 = vld [vmem:[#allocation6 + $0x170] sm:$0xff]
    %v277 = vld [vmem:[#allocation6 + $0x178] sm:$0xff]
    %v278 = vld [vmem:[#allocation6 + $0x180] sm:$0xff]
    %v279 = vld [vmem:[#allocation6 + $0x188] sm:$0xff]
    %v280 = vld [vmem:[#allocation6 + $0x190] sm:$0xff]
    %v281 = vld [vmem:[#allocation6 + $0x198] sm:$0xff]
    %v282 = vld [vmem:[#allocation6 + $0x1a0] sm:$0xff]
    %v283 = vld [vmem:[#allocation6 + $0x1a8] sm:$0xff]
    %v284 = vld [vmem:[#allocation6 + $0x1b0] sm:$0xff]
    %v285 = vld [vmem:[#allocation6 + $0x1b8] sm:$0xff]
    %v286 = vld [vmem:[#allocation6 + $0x1c0] sm:$0xff]
    %v287 = vld [vmem:[#allocation6 + $0x1c8] sm:$0xff]
    %v288 = vld [vmem:[#allocation6 + $0x1d0] sm:$0xff]
    %v289 = vld [vmem:[#allocation6 + $0x1d8] sm:$0xff]
    %v290 = vld [vmem:[#allocation6 + $0x1e0] sm:$0xff]
    %v291 = vld [vmem:[#allocation6 + $0x1e8] sm:$0xff]
    %v292 = vld [vmem:[#allocation6 + $0x1f0] sm:$0xff]
    %v293 = vld [vmem:[#allocation6 + $0x1f8] sm:$0xff]
    %v294 = vld [vmem:[#allocation6 + $0x200] sm:$0xff]
    %v295 = vld [vmem:[#allocation6 + $0x208] sm:$0xff]
    %v296 = vld [vmem:[#allocation6 + $0x210] sm:$0xff]
    %v297 = vld [vmem:[#allocation6 + $0x218] sm:$0xff]
    %v298 = vld [vmem:[#allocation6 + $0x220] sm:$0xff]
    %v299 = vld [vmem:[#allocation6 + $0x228] sm:$0xff]
    %v300 = vld [vmem:[#allocation6 + $0x230] sm:$0xff]
    %v301 = vld [vmem:[#allocation6 + $0x238] sm:$0xff]
    %v302 = vld [vmem:[#allocation6 + $0x240] sm:$0xff]
    %v303 = vld [vmem:[#allocation6 + $0x248] sm:$0xff]
    %v304 = vld [vmem:[#allocation6 + $0x250] sm:$0xff]
    %v305 = vld [vmem:[#allocation6 + $0x258] sm:$0xff]
    %v306 = vld [vmem:[#allocation6 + $0x260] sm:$0xff]
    %v307 = vld [vmem:[#allocation6 + $0x268] sm:$0xff]
    %v308 = vld [vmem:[#allocation6 + $0x270] sm:$0xff]
    %v309 = vld [vmem:[#allocation6 + $0x278] sm:$0xff]
    %v310 = vld [vmem:[#allocation6 + $0x280] sm:$0xff]
    %v311 = vld [vmem:[#allocation6 + $0x288] sm:$0xff]
    %v312 = vld [vmem:[#allocation6 + $0x290] sm:$0xff]
    %v313 = vld [vmem:[#allocation6 + $0x298] sm:$0xff]
    %v314 = vld [vmem:[#allocation6 + $0x2a0] sm:$0xff]
    %v315 = vld [vmem:[#allocation6 + $0x2a8] sm:$0xff]
    %v316 = vld [vmem:[#allocation6 + $0x2b0] sm:$0xff]
    %v317 = vld [vmem:[#allocation6 + $0x2b8] sm:$0xff]
    %v318 = vld [vmem:[#allocation6 + $0x2c0] sm:$0xff]
    %v319 = vld [vmem:[#allocation6 + $0x2c8] sm:$0xff]
    %v320 = vld [vmem:[#allocation6 + $0x2d0] sm:$0xff]
    %v321 = vld [vmem:[#allocation6 + $0x2d8] sm:$0xff]
    %v322 = vld [vmem:[#allocation6 + $0x2e0] sm:$0xff]
    %v323 = vld [vmem:[#allocation6 + $0x2e8] sm:$0xff]
    %v324 = vld [vmem:[#allocation6 + $0x2f0] sm:$0xff]
    %v325 = vld [vmem:[#allocation6 + $0x2f8] sm:$0xff]
    %v326 = vld [vmem:[#allocation6 + $0x300] sm:$0xff]
    %v327 = vld [vmem:[#allocation6 + $0x308] sm:$0xff]
    %v328 = vld [vmem:[#allocation6 + $0x310] sm:$0xff]
    %v329 = vld [vmem:[#allocation6 + $0x318] sm:$0xff]
    %v330 = vld [vmem:[#allocation6 + $0x320] sm:$0xff]
    %v331 = vld [vmem:[#allocation6 + $0x328] sm:$0xff]
    %v332 = vld [vmem:[#allocation6 + $0x330] sm:$0xff]
    %v333 = vld [vmem:[#allocation6 + $0x338] sm:$0xff]
    %v334 = vld [vmem:[#allocation6 + $0x340] sm:$0xff]
    %v335 = vld [vmem:[#allocation6 + $0x348] sm:$0xff]
    %v336 = vld [vmem:[#allocation6 + $0x350] sm:$0xff]
    %v337 = vld [vmem:[#allocation6 + $0x358] sm:$0xff]
    %v338 = vld [vmem:[#allocation6 + $0x360] sm:$0xff]
    %v339 = vld [vmem:[#allocation6 + $0x368] sm:$0xff]
    %v340 = vld [vmem:[#allocation6 + $0x370] sm:$0xff]
    %v341 = vld [vmem:[#allocation6 + $0x378] sm:$0xff]
    %v342 = vld [vmem:[#allocation6 + $0x380] sm:$0xff]
    %v343 = vld [vmem:[#allocation6 + $0x388] sm:$0xff]
    %v344 = vld [vmem:[#allocation6 + $0x390] sm:$0xff]
    %v345 = vld [vmem:[#allocation6 + $0x398] sm:$0xff]
    %v346 = vld [vmem:[#allocation6 + $0x3a0] sm:$0xff]
    %v347 = vld [vmem:[#allocation6 + $0x3a8] sm:$0xff]
    %v348 = vld [vmem:[#allocation6 + $0x3b0] sm:$0xff]
    %v349 = vld [vmem:[#allocation6 + $0x3b8] sm:$0xff]
    %v350 = vld [vmem:[#allocation6 + $0x3c0] sm:$0xff]
    %v351 = vld [vmem:[#allocation6 + $0x3c8] sm:$0xff]
    %v352 = vld [vmem:[#allocation6 + $0x3d0] sm:$0xff]
    %v353 = vld [vmem:[#allocation6 + $0x3d8] sm:$0xff]
    %v354 = vld [vmem:[#allocation6 + $0x3e0] sm:$0xff]
    %v355 = vld [vmem:[#allocation6 + $0x3e8] sm:$0xff]
    %v356 = vld [vmem:[#allocation6 + $0x3f0] sm:$0xff]
    %v357 = vld [vmem:[#allocation6 + $0x3f8] sm:$0xff]
    %v358 = vld [vmem:[#allocation6 + $0x400] sm:$0xff]
    %v359 = vld [vmem:[#allocation6 + $0x408] sm:$0xff]
    %v360 = vld [vmem:[#allocation6 + $0x410] sm:$0xff]
    %v361 = vld [vmem:[#allocation6 + $0x418] sm:$0xff]
    %v362 = vld [vmem:[#allocation6 + $0x420] sm:$0xff]
    %v363 = vld [vmem:[#allocation6 + $0x428] sm:$0xff]
    %v364 = vld [vmem:[#allocation6 + $0x430] sm:$0xff]
    %v365 = vld [vmem:[#allocation6 + $0x438] sm:$0xff]
    %v366 = vld [vmem:[#allocation6 + $0x440] sm:$0xff]
    %v367 = vld [vmem:[#allocation6 + $0x448] sm:$0xff]
    %v368 = vld [vmem:[#allocation6 + $0x450] sm:$0xff]
    %v369 = vld [vmem:[#allocation6 + $0x458] sm:$0xff]
    %v370 = vld [vmem:[#allocation6 + $0x460] sm:$0xff]
    %v371 = vld [vmem:[#allocation6 + $0x468] sm:$0xff]
    %v372 = vld [vmem:[#allocation6 + $0x470] sm:$0xff]
    %v373 = vld [vmem:[#allocation6 + $0x478] sm:$0xff]
    %v374 = vld [vmem:[#allocation6 + $0x480] sm:$0xff]
    %v375 = vld [vmem:[#allocation6 + $0x488] sm:$0xff]
    %v376 = vld [vmem:[#allocation6 + $0x490] sm:$0xff]
    %v377 = vld [vmem:[#allocation6 + $0x498] sm:$0xff]
    %v378 = vld [vmem:[#allocation6 + $0x4a0] sm:$0xff]
    %v379 = vld [vmem:[#allocation6 + $0x4a8] sm:$0xff]
    %v380 = vld [vmem:[#allocation6 + $0x4b0] sm:$0xff]
    %v381 = vld [vmem:[#allocation6 + $0x4b8] sm:$0xff]
    %v382 = vld [vmem:[#allocation6 + $0x4c0] sm:$0xff]
    %v383 = vld [vmem:[#allocation6 + $0x4c8] sm:$0xff]
    %v384 = vld [vmem:[#allocation6 + $0x4d0] sm:$0xff]
    %v385 = vld [vmem:[#allocation6 + $0x4d8] sm:$0xff]
    %v386 = vld [vmem:[#allocation6 + $0x4e0] sm:$0xff]
    %v387 = vld [vmem:[#allocation6 + $0x4e8] sm:$0xff]
    %v388 = vld [vmem:[#allocation6 + $0x4f0] sm:$0xff]
    %v389 = vld [vmem:[#allocation6 + $0x4f8] sm:$0xff]
    %v390 = vld [vmem:[#allocation6 + $0x500] sm:$0xff]
    %v391 = vld [vmem:[#allocation6 + $0x508] sm:$0xff]
    %v392 = vld [vmem:[#allocation6 + $0x510] sm:$0xff]
    %v393 = vld [vmem:[#allocation6 + $0x518] sm:$0xff]
    %v394 = vld [vmem:[#allocation6 + $0x520] sm:$0xff]
    %v395 = vld [vmem:[#allocation6 + $0x528] sm:$0xff]
    %v396 = vld [vmem:[#allocation6 + $0x530] sm:$0xff]
    %v397 = vld [vmem:[#allocation6 + $0x538] sm:$0xff]
    %v398 = vld [vmem:[#allocation6 + $0x540] sm:$0xff]
    %v399 = vld [vmem:[#allocation6 + $0x548] sm:$0xff]
    %v400 = vld [vmem:[#allocation6 + $0x550] sm:$0xff]
    %v401 = vld [vmem:[#allocation6 + $0x558] sm:$0xff]
    %v402 = vld [vmem:[#allocation6 + $0x560] sm:$0xff]
    %v403 = vld [vmem:[#allocation6 + $0x568] sm:$0xff]
    %v404 = vld [vmem:[#allocation6 + $0x570] sm:$0xff]
    %v405 = vld [vmem:[#allocation6 + $0x578] sm:$0xff]
    %v406 = vld [vmem:[#allocation6 + $0x580] sm:$0xff]
    %v407 = vld [vmem:[#allocation6 + $0x588] sm:$0xff]
    %v408 = vld [vmem:[#allocation6 + $0x590] sm:$0xff]
    %v409 = vld [vmem:[#allocation6 + $0x598] sm:$0xff]
    %v410 = vld [vmem:[#allocation6 + $0x5a0] sm:$0xff]
    %v411 = vld [vmem:[#allocation6 + $0x5a8] sm:$0xff]
    %v412 = vld [vmem:[#allocation6 + $0x5b0] sm:$0xff]
    %v413 = vld [vmem:[#allocation6 + $0x5b8] sm:$0xff]
    %v414 = vld [vmem:[#allocation6 + $0x5c0] sm:$0xff]
    %v415 = vld [vmem:[#allocation6 + $0x5c8] sm:$0xff]
    %v416 = vld [vmem:[#allocation6 + $0x5d0] sm:$0xff]
    %v417 = vld [vmem:[#allocation6 + $0x5d8] sm:$0xff]
    %v418 = vld [vmem:[#allocation6 + $0x5e0] sm:$0xff]
    %v419 = vld [vmem:[#allocation6 + $0x5e8] sm:$0xff]
    %v420 = vld [vmem:[#allocation6 + $0x5f0] sm:$0xff]
    %v421 = vld [vmem:[#allocation6 + $0x5f8] sm:$0xff]
    %v422 = vld [vmem:[#allocation6 + $0x600] sm:$0xff]
    %v423 = vld [vmem:[#allocation6 + $0x608] sm:$0xff]
    %v424 = vld [vmem:[#allocation6 + $0x610] sm:$0xff]
    %v425 = vld [vmem:[#allocation6 + $0x618] sm:$0xff]
    %v426 = vld [vmem:[#allocation6 + $0x620] sm:$0xff]
    %v427 = vld [vmem:[#allocation6 + $0x628] sm:$0xff]
    %v428 = vld [vmem:[#allocation6 + $0x630] sm:$0xff]
    %v429 = vld [vmem:[#allocation6 + $0x638] sm:$0xff]
    %v430 = vld [vmem:[#allocation6 + $0x640] sm:$0xff]
    %v431 = vld [vmem:[#allocation6 + $0x648] sm:$0xff]
    %v432 = vld [vmem:[#allocation6 + $0x650] sm:$0xff]
    %v433 = vld [vmem:[#allocation6 + $0x658] sm:$0xff]
    %v434 = vld [vmem:[#allocation6 + $0x660] sm:$0xff]
    %v435 = vld [vmem:[#allocation6 + $0x668] sm:$0xff]
    %v436 = vld [vmem:[#allocation6 + $0x670] sm:$0xff]
    %v437 = vld [vmem:[#allocation6 + $0x678] sm:$0xff]
    %v438 = vld [vmem:[#allocation6 + $0x680] sm:$0xff]
    %v439 = vld [vmem:[#allocation6 + $0x688] sm:$0xff]
    %v440 = vld [vmem:[#allocation6 + $0x690] sm:$0xff]
    %v441 = vld [vmem:[#allocation6 + $0x698] sm:$0xff]
    %v442 = vld [vmem:[#allocation6 + $0x6a0] sm:$0xff]
    %v443 = vld [vmem:[#allocation6 + $0x6a8] sm:$0xff]
    %v444 = vld [vmem:[#allocation6 + $0x6b0] sm:$0xff]
    %v445 = vld [vmem:[#allocation6 + $0x6b8] sm:$0xff]
    %v446 = vld [vmem:[#allocation6 + $0x6c0] sm:$0xff]
    %v447 = vld [vmem:[#allocation6 + $0x6c8] sm:$0xff]
    %v448 = vld [vmem:[#allocation6 + $0x6d0] sm:$0xff]
    %v449 = vld [vmem:[#allocation6 + $0x6d8] sm:$0xff]
    %v450 = vld [vmem:[#allocation6 + $0x6e0] sm:$0xff]
    %v451 = vld [vmem:[#allocation6 + $0x6e8] sm:$0xff]
    %v452 = vld [vmem:[#allocation6 + $0x6f0] sm:$0xff]
    %v453 = vld [vmem:[#allocation6 + $0x6f8] sm:$0xff]
    %v454 = vld [vmem:[#allocation6 + $0x700] sm:$0xff]
    %v455 = vld [vmem:[#allocation6 + $0x708] sm:$0xff]
    %v456 = vld [vmem:[#allocation6 + $0x710] sm:$0xff]
    %v457 = vld [vmem:[#allocation6 + $0x718] sm:$0xff]
    %v458 = vld [vmem:[#allocation6 + $0x720] sm:$0xff]
    %v459 = vld [vmem:[#allocation6 + $0x728] sm:$0xff]
    %v460 = vld [vmem:[#allocation6 + $0x730] sm:$0xff]
    %v461 = vld [vmem:[#allocation6 + $0x738] sm:$0xff]
    %v462 = vld [vmem:[#allocation6 + $0x740] sm:$0xff]
    %v463 = vld [vmem:[#allocation6 + $0x748] sm:$0xff]
    %v464 = vld [vmem:[#allocation6 + $0x750] sm:$0xff]
    %v465 = vld [vmem:[#allocation6 + $0x758] sm:$0xff]
    %v466 = vld [vmem:[#allocation6 + $0x760] sm:$0xff]
    %v467 = vld [vmem:[#allocation6 + $0x768] sm:$0xff]
    %v468 = vld [vmem:[#allocation6 + $0x770] sm:$0xff]
    %v469 = vld [vmem:[#allocation6 + $0x778] sm:$0xff]
    %v470 = vld [vmem:[#allocation6 + $0x780] sm:$0xff]
    %v471 = vld [vmem:[#allocation6 + $0x788] sm:$0xff]
    %v472 = vld [vmem:[#allocation6 + $0x790] sm:$0xff]
    %v473 = vld [vmem:[#allocation6 + $0x798] sm:$0xff]
    %v474 = vld [vmem:[#allocation6 + $0x7a0] sm:$0xff]
    %v475 = vld [vmem:[#allocation6 + $0x7a8] sm:$0xff]
    %v476 = vld [vmem:[#allocation6 + $0x7b0] sm:$0xff]
    %v477 = vld [vmem:[#allocation6 + $0x7b8] sm:$0xff]
    %v478 = vld [vmem:[#allocation6 + $0x7c0] sm:$0xff]
    %v479 = vld [vmem:[#allocation6 + $0x7c8] sm:$0xff]
    %v480 = vld [vmem:[#allocation6 + $0x7d0] sm:$0xff]
    %v481 = vld [vmem:[#allocation6 + $0x7d8] sm:$0xff]
    %v482 = vld [vmem:[#allocation6 + $0x7e0] sm:$0xff]
    %v483 = vld [vmem:[#allocation6 + $0x7e8] sm:$0xff]
    %v484 = vld [vmem:[#allocation6 + $0x7f0] sm:$0xff]
    %v485 = vld [vmem:[#allocation6 + $0x7f8] sm:$0xff]
    %v486 = vld [vmem:[#allocation8] sm:$0xf]
    %v488 = vlaneseq
    %v489 = vshrl.u32 %v488, 7
    %v490 = vsub.s32 0, %v489
    %v491 = vrot.slane %v486, %v490
    %v492 = vlaneseq
    %v493 = vshrl.u32 %v492, 7
    %v494 = vsub.s32 1, %v493
    %v495 = vrot.slane %v486, %v494
    %v496 = vlaneseq
    %v497 = vshrl.u32 %v496, 7
    %v498 = vsub.s32 2, %v497
    %v499 = vrot.slane %v486, %v498
    %v500 = vlaneseq
    %v501 = vshrl.u32 %v500, 7
    %v502 = vsub.s32 3, %v501
    %v503 = vrot.slane %v486, %v502
    %v764 = vunpack.c.l.b16 %v230
    %v765 = vunpack.c.h.b16 %v230
    %v766 = vunpack.c.l.b16 %v231
    %v767 = vunpack.c.h.b16 %v231
    %v768 = vunpack.c.l.b16 %v232
    %v769 = vunpack.c.h.b16 %v232
    %v770 = vunpack.c.l.b16 %v233
    %v771 = vunpack.c.h.b16 %v233
    %v772 = vunpack.c.l.b16 %v234
    %v773 = vunpack.c.h.b16 %v234
    %v774 = vunpack.c.l.b16 %v235
    %v775 = vunpack.c.h.b16 %v235
    %v776 = vunpack.c.l.b16 %v236
    %v777 = vunpack.c.h.b16 %v236
    %v778 = vunpack.c.l.b16 %v237
    %v779 = vunpack.c.h.b16 %v237
    %v780 = vunpack.c.l.b16 %v238
    %v781 = vunpack.c.h.b16 %v238
    %v782 = vunpack.c.l.b16 %v239
    %v783 = vunpack.c.h.b16 %v239
    %v784 = vunpack.c.l.b16 %v240
    %v785 = vunpack.c.h.b16 %v240
    %v786 = vunpack.c.l.b16 %v241
    %v787 = vunpack.c.h.b16 %v241
    %v788 = vunpack.c.l.b16 %v242
    %v789 = vunpack.c.h.b16 %v242
    %v790 = vunpack.c.l.b16 %v243
    %v791 = vunpack.c.h.b16 %v243
    %v792 = vunpack.c.l.b16 %v244
    %v793 = vunpack.c.h.b16 %v244
    %v794 = vunpack.c.l.b16 %v245
    %v795 = vunpack.c.h.b16 %v245
    %v796 = vunpack.c.l.b16 %v246
    %v797 = vunpack.c.h.b16 %v246
    %v798 = vunpack.c.l.b16 %v247
    %v799 = vunpack.c.h.b16 %v247
    %v800 = vunpack.c.l.b16 %v248
    %v801 = vunpack.c.h.b16 %v248
    %v802 = vunpack.c.l.b16 %v249
    %v803 = vunpack.c.h.b16 %v249
    %v804 = vunpack.c.l.b16 %v250
    %v805 = vunpack.c.h.b16 %v250
    %v806 = vunpack.c.l.b16 %v251
    %v807 = vunpack.c.h.b16 %v251
    %v808 = vunpack.c.l.b16 %v252
    %v809 = vunpack.c.h.b16 %v252
    %v810 = vunpack.c.l.b16 %v253
    %v811 = vunpack.c.h.b16 %v253
    %v812 = vunpack.c.l.b16 %v254
    %v813 = vunpack.c.h.b16 %v254
    %v814 = vunpack.c.l.b16 %v255
    %v815 = vunpack.c.h.b16 %v255
    %v816 = vunpack.c.l.b16 %v256
    %v817 = vunpack.c.h.b16 %v256
    %v818 = vunpack.c.l.b16 %v257
    %v819 = vunpack.c.h.b16 %v257
    %v820 = vunpack.c.l.b16 %v258
    %v821 = vunpack.c.h.b16 %v258
    %v822 = vunpack.c.l.b16 %v259
    %v823 = vunpack.c.h.b16 %v259
    %v824 = vunpack.c.l.b16 %v260
    %v825 = vunpack.c.h.b16 %v260
    %v826 = vunpack.c.l.b16 %v261
    %v827 = vunpack.c.h.b16 %v261
    %v828 = vunpack.c.l.b16 %v262
    %v829 = vunpack.c.h.b16 %v262
    %v830 = vunpack.c.l.b16 %v263
    %v831 = vunpack.c.h.b16 %v263
    %v832 = vunpack.c.l.b16 %v264
    %v833 = vunpack.c.h.b16 %v264
    %v834 = vunpack.c.l.b16 %v265
    %v835 = vunpack.c.h.b16 %v265
    %v836 = vunpack.c.l.b16 %v266
    %v837 = vunpack.c.h.b16 %v266
    %v838 = vunpack.c.l.b16 %v267
    %v839 = vunpack.c.h.b16 %v267
    %v840 = vunpack.c.l.b16 %v268
    %v841 = vunpack.c.h.b16 %v268
    %v842 = vunpack.c.l.b16 %v269
    %v843 = vunpack.c.h.b16 %v269
    %v844 = vunpack.c.l.b16 %v270
    %v845 = vunpack.c.h.b16 %v270
    %v846 = vunpack.c.l.b16 %v271
    %v847 = vunpack.c.h.b16 %v271
    %v848 = vunpack.c.l.b16 %v272
    %v849 = vunpack.c.h.b16 %v272
    %v850 = vunpack.c.l.b16 %v273
    %v851 = vunpack.c.h.b16 %v273
    %v852 = vunpack.c.l.b16 %v274
    %v853 = vunpack.c.h.b16 %v274
    %v854 = vunpack.c.l.b16 %v275
    %v855 = vunpack.c.h.b16 %v275
    %v856 = vunpack.c.l.b16 %v276
    %v857 = vunpack.c.h.b16 %v276
    %v858 = vunpack.c.l.b16 %v277
    %v859 = vunpack.c.h.b16 %v277
    %v860 = vunpack.c.l.b16 %v278
    %v861 = vunpack.c.h.b16 %v278
    %v862 = vunpack.c.l.b16 %v279
    %v863 = vunpack.c.h.b16 %v279
    %v864 = vunpack.c.l.b16 %v280
    %v865 = vunpack.c.h.b16 %v280
    %v866 = vunpack.c.l.b16 %v281
    %v867 = vunpack.c.h.b16 %v281
    %v868 = vunpack.c.l.b16 %v282
    %v869 = vunpack.c.h.b16 %v282
    %v870 = vunpack.c.l.b16 %v283
    %v871 = vunpack.c.h.b16 %v283
    %v872 = vunpack.c.l.b16 %v284
    %v873 = vunpack.c.h.b16 %v284
    %v874 = vunpack.c.l.b16 %v285
    %v875 = vunpack.c.h.b16 %v285
    %v876 = vunpack.c.l.b16 %v286
    %v877 = vunpack.c.h.b16 %v286
    %v878 = vunpack.c.l.b16 %v287
    %v879 = vunpack.c.h.b16 %v287
    %v880 = vunpack.c.l.b16 %v288
    %v881 = vunpack.c.h.b16 %v288
    %v882 = vunpack.c.l.b16 %v289
    %v883 = vunpack.c.h.b16 %v289
    %v884 = vunpack.c.l.b16 %v290
    %v885 = vunpack.c.h.b16 %v290
    %v886 = vunpack.c.l.b16 %v291
    %v887 = vunpack.c.h.b16 %v291
    %v888 = vunpack.c.l.b16 %v292
    %v889 = vunpack.c.h.b16 %v292
    %v890 = vunpack.c.l.b16 %v293
    %v891 = vunpack.c.h.b16 %v293
    %v892 = vunpack.c.l.b16 %v294
    %v893 = vunpack.c.h.b16 %v294
    %v894 = vunpack.c.l.b16 %v295
    %v895 = vunpack.c.h.b16 %v295
    %v896 = vunpack.c.l.b16 %v296
    %v897 = vunpack.c.h.b16 %v296
    %v898 = vunpack.c.l.b16 %v297
    %v899 = vunpack.c.h.b16 %v297
    %v900 = vunpack.c.l.b16 %v298
    %v901 = vunpack.c.h.b16 %v298
    %v902 = vunpack.c.l.b16 %v299
    %v903 = vunpack.c.h.b16 %v299
    %v904 = vunpack.c.l.b16 %v300
    %v905 = vunpack.c.h.b16 %v300
    %v906 = vunpack.c.l.b16 %v301
    %v907 = vunpack.c.h.b16 %v301
    %v908 = vunpack.c.l.b16 %v302
    %v909 = vunpack.c.h.b16 %v302
    %v910 = vunpack.c.l.b16 %v303
    %v911 = vunpack.c.h.b16 %v303
    %v912 = vunpack.c.l.b16 %v304
    %v913 = vunpack.c.h.b16 %v304
    %v914 = vunpack.c.l.b16 %v305
    %v915 = vunpack.c.h.b16 %v305
    %v916 = vunpack.c.l.b16 %v306
    %v917 = vunpack.c.h.b16 %v306
    %v918 = vunpack.c.l.b16 %v307
    %v919 = vunpack.c.h.b16 %v307
    %v920 = vunpack.c.l.b16 %v308
    %v921 = vunpack.c.h.b16 %v308
    %v922 = vunpack.c.l.b16 %v309
    %v923 = vunpack.c.h.b16 %v309
    %v924 = vunpack.c.l.b16 %v310
    %v925 = vunpack.c.h.b16 %v310
    %v926 = vunpack.c.l.b16 %v311
    %v927 = vunpack.c.h.b16 %v311
    %v928 = vunpack.c.l.b16 %v312
    %v929 = vunpack.c.h.b16 %v312
    %v930 = vunpack.c.l.b16 %v313
    %v931 = vunpack.c.h.b16 %v313
    %v932 = vunpack.c.l.b16 %v314
    %v933 = vunpack.c.h.b16 %v314
    %v934 = vunpack.c.l.b16 %v315
    %v935 = vunpack.c.h.b16 %v315
    %v936 = vunpack.c.l.b16 %v316
    %v937 = vunpack.c.h.b16 %v316
    %v938 = vunpack.c.l.b16 %v317
    %v939 = vunpack.c.h.b16 %v317
    %v940 = vunpack.c.l.b16 %v318
    %v941 = vunpack.c.h.b16 %v318
    %v942 = vunpack.c.l.b16 %v319
    %v943 = vunpack.c.h.b16 %v319
    %v944 = vunpack.c.l.b16 %v320
    %v945 = vunpack.c.h.b16 %v320
    %v946 = vunpack.c.l.b16 %v321
    %v947 = vunpack.c.h.b16 %v321
    %v948 = vunpack.c.l.b16 %v322
    %v949 = vunpack.c.h.b16 %v322
    %v950 = vunpack.c.l.b16 %v323
    %v951 = vunpack.c.h.b16 %v323
    %v952 = vunpack.c.l.b16 %v324
    %v953 = vunpack.c.h.b16 %v324
    %v954 = vunpack.c.l.b16 %v325
    %v955 = vunpack.c.h.b16 %v325
    %v956 = vunpack.c.l.b16 %v326
    %v957 = vunpack.c.h.b16 %v326
    %v958 = vunpack.c.l.b16 %v327
    %v959 = vunpack.c.h.b16 %v327
    %v960 = vunpack.c.l.b16 %v328
    %v961 = vunpack.c.h.b16 %v328
    %v962 = vunpack.c.l.b16 %v329
    %v963 = vunpack.c.h.b16 %v329
    %v964 = vunpack.c.l.b16 %v330
    %v965 = vunpack.c.h.b16 %v330
    %v966 = vunpack.c.l.b16 %v331
    %v967 = vunpack.c.h.b16 %v331
    %v968 = vunpack.c.l.b16 %v332
    %v969 = vunpack.c.h.b16 %v332
    %v970 = vunpack.c.l.b16 %v333
    %v971 = vunpack.c.h.b16 %v333
    %v972 = vunpack.c.l.b16 %v334
    %v973 = vunpack.c.h.b16 %v334
    %v974 = vunpack.c.l.b16 %v335
    %v975 = vunpack.c.h.b16 %v335
    %v976 = vunpack.c.l.b16 %v336
    %v977 = vunpack.c.h.b16 %v336
    %v978 = vunpack.c.l.b16 %v337
    %v979 = vunpack.c.h.b16 %v337
    %v980 = vunpack.c.l.b16 %v338
    %v981 = vunpack.c.h.b16 %v338
    %v982 = vunpack.c.l.b16 %v339
    %v983 = vunpack.c.h.b16 %v339
    %v984 = vunpack.c.l.b16 %v340
    %v985 = vunpack.c.h.b16 %v340
    %v986 = vunpack.c.l.b16 %v341
    %v987 = vunpack.c.h.b16 %v341
    %v988 = vunpack.c.l.b16 %v342
    %v989 = vunpack.c.h.b16 %v342
    %v990 = vunpack.c.l.b16 %v343
    %v991 = vunpack.c.h.b16 %v343
    %v992 = vunpack.c.l.b16 %v344
    %v993 = vunpack.c.h.b16 %v344
    %v994 = vunpack.c.l.b16 %v345
    %v995 = vunpack.c.h.b16 %v345
    %v996 = vunpack.c.l.b16 %v346
    %v997 = vunpack.c.h.b16 %v346
    %v998 = vunpack.c.l.b16 %v347
    %v999 = vunpack.c.h.b16 %v347
    %v1000 = vunpack.c.l.b16 %v348
    %v1001 = vunpack.c.h.b16 %v348
    %v1002 = vunpack.c.l.b16 %v349
    %v1003 = vunpack.c.h.b16 %v349
    %v1004 = vunpack.c.l.b16 %v350
    %v1005 = vunpack.c.h.b16 %v350
    %v1006 = vunpack.c.l.b16 %v351
    %v1007 = vunpack.c.h.b16 %v351
    %v1008 = vunpack.c.l.b16 %v352
    %v1009 = vunpack.c.h.b16 %v352
    %v1010 = vunpack.c.l.b16 %v353
    %v1011 = vunpack.c.h.b16 %v353
    %v1012 = vunpack.c.l.b16 %v354
    %v1013 = vunpack.c.h.b16 %v354
    %v1014 = vunpack.c.l.b16 %v355
    %v1015 = vunpack.c.h.b16 %v355
    %v1016 = vunpack.c.l.b16 %v356
    %v1017 = vunpack.c.h.b16 %v356
    %v1018 = vunpack.c.l.b16 %v357
    %v1019 = vunpack.c.h.b16 %v357
    %v1020 = vunpack.c.l.b16 %v358
    %v1021 = vunpack.c.h.b16 %v358
    %v1022 = vunpack.c.l.b16 %v359
    %v1023 = vunpack.c.h.b16 %v359
    %v1024 = vunpack.c.l.b16 %v360
    %v1025 = vunpack.c.h.b16 %v360
    %v1026 = vunpack.c.l.b16 %v361
    %v1027 = vunpack.c.h.b16 %v361
    %v1028 = vunpack.c.l.b16 %v362
    %v1029 = vunpack.c.h.b16 %v362
    %v1030 = vunpack.c.l.b16 %v363
    %v1031 = vunpack.c.h.b16 %v363
    %v1032 = vunpack.c.l.b16 %v364
    %v1033 = vunpack.c.h.b16 %v364
    %v1034 = vunpack.c.l.b16 %v365
    %v1035 = vunpack.c.h.b16 %v365
    %v1036 = vunpack.c.l.b16 %v366
    %v1037 = vunpack.c.h.b16 %v366
    %v1038 = vunpack.c.l.b16 %v367
    %v1039 = vunpack.c.h.b16 %v367
    %v1040 = vunpack.c.l.b16 %v368
    %v1041 = vunpack.c.h.b16 %v368
    %v1042 = vunpack.c.l.b16 %v369
    %v1043 = vunpack.c.h.b16 %v369
    %v1044 = vunpack.c.l.b16 %v370
    %v1045 = vunpack.c.h.b16 %v370
    %v1046 = vunpack.c.l.b16 %v371
    %v1047 = vunpack.c.h.b16 %v371
    %v1048 = vunpack.c.l.b16 %v372
    %v1049 = vunpack.c.h.b16 %v372
    %v1050 = vunpack.c.l.b16 %v373
    %v1051 = vunpack.c.h.b16 %v373
    %v1052 = vunpack.c.l.b16 %v374
    %v1053 = vunpack.c.h.b16 %v374
    %v1054 = vunpack.c.l.b16 %v375
    %v1055 = vunpack.c.h.b16 %v375
    %v1056 = vunpack.c.l.b16 %v376
    %v1057 = vunpack.c.h.b16 %v376
    %v1058 = vunpack.c.l.b16 %v377
    %v1059 = vunpack.c.h.b16 %v377
    %v1060 = vunpack.c.l.b16 %v378
    %v1061 = vunpack.c.h.b16 %v378
    %v1062 = vunpack.c.l.b16 %v379
    %v1063 = vunpack.c.h.b16 %v379
    %v1064 = vunpack.c.l.b16 %v380
    %v1065 = vunpack.c.h.b16 %v380
    %v1066 = vunpack.c.l.b16 %v381
    %v1067 = vunpack.c.h.b16 %v381
    %v1068 = vunpack.c.l.b16 %v382
    %v1069 = vunpack.c.h.b16 %v382
    %v1070 = vunpack.c.l.b16 %v383
    %v1071 = vunpack.c.h.b16 %v383
    %v1072 = vunpack.c.l.b16 %v384
    %v1073 = vunpack.c.h.b16 %v384
    %v1074 = vunpack.c.l.b16 %v385
    %v1075 = vunpack.c.h.b16 %v385
    %v1076 = vunpack.c.l.b16 %v386
    %v1077 = vunpack.c.h.b16 %v386
    %v1078 = vunpack.c.l.b16 %v387
    %v1079 = vunpack.c.h.b16 %v387
    %v1080 = vunpack.c.l.b16 %v388
    %v1081 = vunpack.c.h.b16 %v388
    %v1082 = vunpack.c.l.b16 %v389
    %v1083 = vunpack.c.h.b16 %v389
    %v1084 = vunpack.c.l.b16 %v390
    %v1085 = vunpack.c.h.b16 %v390
    %v1086 = vunpack.c.l.b16 %v391
    %v1087 = vunpack.c.h.b16 %v391
    %v1088 = vunpack.c.l.b16 %v392
    %v1089 = vunpack.c.h.b16 %v392
    %v1090 = vunpack.c.l.b16 %v393
    %v1091 = vunpack.c.h.b16 %v393
    %v1092 = vunpack.c.l.b16 %v394
    %v1093 = vunpack.c.h.b16 %v394
    %v1094 = vunpack.c.l.b16 %v395
    %v1095 = vunpack.c.h.b16 %v395
    %v1096 = vunpack.c.l.b16 %v396
    %v1097 = vunpack.c.h.b16 %v396
    %v1098 = vunpack.c.l.b16 %v397
    %v1099 = vunpack.c.h.b16 %v397
    %v1100 = vunpack.c.l.b16 %v398
    %v1101 = vunpack.c.h.b16 %v398
    %v1102 = vunpack.c.l.b16 %v399
    %v1103 = vunpack.c.h.b16 %v399
    %v1104 = vunpack.c.l.b16 %v400
    %v1105 = vunpack.c.h.b16 %v400
    %v1106 = vunpack.c.l.b16 %v401
    %v1107 = vunpack.c.h.b16 %v401
    %v1108 = vunpack.c.l.b16 %v402
    %v1109 = vunpack.c.h.b16 %v402
    %v1110 = vunpack.c.l.b16 %v403
    %v1111 = vunpack.c.h.b16 %v403
    %v1112 = vunpack.c.l.b16 %v404
    %v1113 = vunpack.c.h.b16 %v404
    %v1114 = vunpack.c.l.b16 %v405
    %v1115 = vunpack.c.h.b16 %v405
    %v1116 = vunpack.c.l.b16 %v406
    %v1117 = vunpack.c.h.b16 %v406
    %v1118 = vunpack.c.l.b16 %v407
    %v1119 = vunpack.c.h.b16 %v407
    %v1120 = vunpack.c.l.b16 %v408
    %v1121 = vunpack.c.h.b16 %v408
    %v1122 = vunpack.c.l.b16 %v409
    %v1123 = vunpack.c.h.b16 %v409
    %v1124 = vunpack.c.l.b16 %v410
    %v1125 = vunpack.c.h.b16 %v410
    %v1126 = vunpack.c.l.b16 %v411
    %v1127 = vunpack.c.h.b16 %v411
    %v1128 = vunpack.c.l.b16 %v412
    %v1129 = vunpack.c.h.b16 %v412
    %v1130 = vunpack.c.l.b16 %v413
    %v1131 = vunpack.c.h.b16 %v413
    %v1132 = vunpack.c.l.b16 %v414
    %v1133 = vunpack.c.h.b16 %v414
    %v1134 = vunpack.c.l.b16 %v415
    %v1135 = vunpack.c.h.b16 %v415
    %v1136 = vunpack.c.l.b16 %v416
    %v1137 = vunpack.c.h.b16 %v416
    %v1138 = vunpack.c.l.b16 %v417
    %v1139 = vunpack.c.h.b16 %v417
    %v1140 = vunpack.c.l.b16 %v418
    %v1141 = vunpack.c.h.b16 %v418
    %v1142 = vunpack.c.l.b16 %v419
    %v1143 = vunpack.c.h.b16 %v419
    %v1144 = vunpack.c.l.b16 %v420
    %v1145 = vunpack.c.h.b16 %v420
    %v1146 = vunpack.c.l.b16 %v421
    %v1147 = vunpack.c.h.b16 %v421
    %v1148 = vunpack.c.l.b16 %v422
    %v1149 = vunpack.c.h.b16 %v422
    %v1150 = vunpack.c.l.b16 %v423
    %v1151 = vunpack.c.h.b16 %v423
    %v1152 = vunpack.c.l.b16 %v424
    %v1153 = vunpack.c.h.b16 %v424
    %v1154 = vunpack.c.l.b16 %v425
    %v1155 = vunpack.c.h.b16 %v425
    %v1156 = vunpack.c.l.b16 %v426
    %v1157 = vunpack.c.h.b16 %v426
    %v1158 = vunpack.c.l.b16 %v427
    %v1159 = vunpack.c.h.b16 %v427
    %v1160 = vunpack.c.l.b16 %v428
    %v1161 = vunpack.c.h.b16 %v428
    %v1162 = vunpack.c.l.b16 %v429
    %v1163 = vunpack.c.h.b16 %v429
    %v1164 = vunpack.c.l.b16 %v430
    %v1165 = vunpack.c.h.b16 %v430
    %v1166 = vunpack.c.l.b16 %v431
    %v1167 = vunpack.c.h.b16 %v431
    %v1168 = vunpack.c.l.b16 %v432
    %v1169 = vunpack.c.h.b16 %v432
    %v1170 = vunpack.c.l.b16 %v433
    %v1171 = vunpack.c.h.b16 %v433
    %v1172 = vunpack.c.l.b16 %v434
    %v1173 = vunpack.c.h.b16 %v434
    %v1174 = vunpack.c.l.b16 %v435
    %v1175 = vunpack.c.h.b16 %v435
    %v1176 = vunpack.c.l.b16 %v436
    %v1177 = vunpack.c.h.b16 %v436
    %v1178 = vunpack.c.l.b16 %v437
    %v1179 = vunpack.c.h.b16 %v437
    %v1180 = vunpack.c.l.b16 %v438
    %v1181 = vunpack.c.h.b16 %v438
    %v1182 = vunpack.c.l.b16 %v439
    %v1183 = vunpack.c.h.b16 %v439
    %v1184 = vunpack.c.l.b16 %v440
    %v1185 = vunpack.c.h.b16 %v440
    %v1186 = vunpack.c.l.b16 %v441
    %v1187 = vunpack.c.h.b16 %v441
    %v1188 = vunpack.c.l.b16 %v442
    %v1189 = vunpack.c.h.b16 %v442
    %v1190 = vunpack.c.l.b16 %v443
    %v1191 = vunpack.c.h.b16 %v443
    %v1192 = vunpack.c.l.b16 %v444
    %v1193 = vunpack.c.h.b16 %v444
    %v1194 = vunpack.c.l.b16 %v445
    %v1195 = vunpack.c.h.b16 %v445
    %v1196 = vunpack.c.l.b16 %v446
    %v1197 = vunpack.c.h.b16 %v446
    %v1198 = vunpack.c.l.b16 %v447
    %v1199 = vunpack.c.h.b16 %v447
    %v1200 = vunpack.c.l.b16 %v448
    %v1201 = vunpack.c.h.b16 %v448
    %v1202 = vunpack.c.l.b16 %v449
    %v1203 = vunpack.c.h.b16 %v449
    %v1204 = vunpack.c.l.b16 %v450
    %v1205 = vunpack.c.h.b16 %v450
    %v1206 = vunpack.c.l.b16 %v451
    %v1207 = vunpack.c.h.b16 %v451
    %v1208 = vunpack.c.l.b16 %v452
    %v1209 = vunpack.c.h.b16 %v452
    %v1210 = vunpack.c.l.b16 %v453
    %v1211 = vunpack.c.h.b16 %v453
    %v1212 = vunpack.c.l.b16 %v454
    %v1213 = vunpack.c.h.b16 %v454
    %v1214 = vunpack.c.l.b16 %v455
    %v1215 = vunpack.c.h.b16 %v455
    %v1216 = vunpack.c.l.b16 %v456
    %v1217 = vunpack.c.h.b16 %v456
    %v1218 = vunpack.c.l.b16 %v457
    %v1219 = vunpack.c.h.b16 %v457
    %v1220 = vunpack.c.l.b16 %v458
    %v1221 = vunpack.c.h.b16 %v458
    %v1222 = vunpack.c.l.b16 %v459
    %v1223 = vunpack.c.h.b16 %v459
    %v1224 = vunpack.c.l.b16 %v460
    %v1225 = vunpack.c.h.b16 %v460
    %v1226 = vunpack.c.l.b16 %v461
    %v1227 = vunpack.c.h.b16 %v461
    %v1228 = vunpack.c.l.b16 %v462
    %v1229 = vunpack.c.h.b16 %v462
    %v1230 = vunpack.c.l.b16 %v463
    %v1231 = vunpack.c.h.b16 %v463
    %v1232 = vunpack.c.l.b16 %v464
    %v1233 = vunpack.c.h.b16 %v464
    %v1234 = vunpack.c.l.b16 %v465
    %v1235 = vunpack.c.h.b16 %v465
    %v1236 = vunpack.c.l.b16 %v466
    %v1237 = vunpack.c.h.b16 %v466
    %v1238 = vunpack.c.l.b16 %v467
    %v1239 = vunpack.c.h.b16 %v467
    %v1240 = vunpack.c.l.b16 %v468
    %v1241 = vunpack.c.h.b16 %v468
    %v1242 = vunpack.c.l.b16 %v469
    %v1243 = vunpack.c.h.b16 %v469
    %v1244 = vunpack.c.l.b16 %v470
    %v1245 = vunpack.c.h.b16 %v470
    %v1246 = vunpack.c.l.b16 %v471
    %v1247 = vunpack.c.h.b16 %v471
    %v1248 = vunpack.c.l.b16 %v472
    %v1249 = vunpack.c.h.b16 %v472
    %v1250 = vunpack.c.l.b16 %v473
    %v1251 = vunpack.c.h.b16 %v473
    %v1252 = vunpack.c.l.b16 %v474
    %v1253 = vunpack.c.h.b16 %v474
    %v1254 = vunpack.c.l.b16 %v475
    %v1255 = vunpack.c.h.b16 %v475
    %v1256 = vunpack.c.l.b16 %v476
    %v1257 = vunpack.c.h.b16 %v476
    %v1258 = vunpack.c.l.b16 %v477
    %v1259 = vunpack.c.h.b16 %v477
    %v1260 = vunpack.c.l.b16 %v478
    %v1261 = vunpack.c.h.b16 %v478
    %v1262 = vunpack.c.l.b16 %v479
    %v1263 = vunpack.c.h.b16 %v479
    %v1264 = vunpack.c.l.b16 %v480
    %v1265 = vunpack.c.h.b16 %v480
    %v1266 = vunpack.c.l.b16 %v481
    %v1267 = vunpack.c.h.b16 %v481
    %v1268 = vunpack.c.l.b16 %v482
    %v1269 = vunpack.c.h.b16 %v482
    %v1270 = vunpack.c.l.b16 %v483
    %v1271 = vunpack.c.h.b16 %v483
    %v1272 = vunpack.c.l.b16 %v484
    %v1273 = vunpack.c.h.b16 %v484
    %v1274 = vunpack.c.l.b16 %v485
    %v1275 = vunpack.c.h.b16 %v485
    %v1276 = vpack.c.b16 %v768, %v764
    %v1277 = vpack.c.b16 %v769, %v765
    %v1278 = vpack.c.b16 %v770, %v766
    %v1279 = vpack.c.b16 %v771, %v767
    %v1280 = vpack.c.b16 %v776, %v772
    %v1281 = vpack.c.b16 %v777, %v773
    %v1282 = vpack.c.b16 %v778, %v774
    %v1283 = vpack.c.b16 %v779, %v775
    %v1284 = vpack.c.b16 %v784, %v780
    %v1285 = vpack.c.b16 %v785, %v781
    %v1286 = vpack.c.b16 %v786, %v782
    %v1287 = vpack.c.b16 %v787, %v783
    %v1288 = vpack.c.b16 %v792, %v788
    %v1289 = vpack.c.b16 %v793, %v789
    %v1290 = vpack.c.b16 %v794, %v790
    %v1291 = vpack.c.b16 %v795, %v791
    %v1292 = vpack.c.b16 %v800, %v796
    %v1293 = vpack.c.b16 %v801, %v797
    %v1294 = vpack.c.b16 %v802, %v798
    %v1295 = vpack.c.b16 %v803, %v799
    %v1296 = vpack.c.b16 %v808, %v804
    %v1297 = vpack.c.b16 %v809, %v805
    %v1298 = vpack.c.b16 %v810, %v806
    %v1299 = vpack.c.b16 %v811, %v807
    %v1300 = vpack.c.b16 %v816, %v812
    %v1301 = vpack.c.b16 %v817, %v813
    %v1302 = vpack.c.b16 %v818, %v814
    %v1303 = vpack.c.b16 %v819, %v815
    %v1304 = vpack.c.b16 %v824, %v820
    %v1305 = vpack.c.b16 %v825, %v821
    %v1306 = vpack.c.b16 %v826, %v822
    %v1307 = vpack.c.b16 %v827, %v823
    %v1308 = vpack.c.b16 %v832, %v828
    %v1309 = vpack.c.b16 %v833, %v829
    %v1310 = vpack.c.b16 %v834, %v830
    %v1311 = vpack.c.b16 %v835, %v831
    %v1312 = vpack.c.b16 %v840, %v836
    %v1313 = vpack.c.b16 %v841, %v837
    %v1314 = vpack.c.b16 %v842, %v838
    %v1315 = vpack.c.b16 %v843, %v839
    %v1316 = vpack.c.b16 %v848, %v844
    %v1317 = vpack.c.b16 %v849, %v845
    %v1318 = vpack.c.b16 %v850, %v846
    %v1319 = vpack.c.b16 %v851, %v847
    %v1320 = vpack.c.b16 %v856, %v852
    %v1321 = vpack.c.b16 %v857, %v853
    %v1322 = vpack.c.b16 %v858, %v854
    %v1323 = vpack.c.b16 %v859, %v855
    %v1324 = vpack.c.b16 %v864, %v860
    %v1325 = vpack.c.b16 %v865, %v861
    %v1326 = vpack.c.b16 %v866, %v862
    %v1327 = vpack.c.b16 %v867, %v863
    %v1328 = vpack.c.b16 %v872, %v868
    %v1329 = vpack.c.b16 %v873, %v869
    %v1330 = vpack.c.b16 %v874, %v870
    %v1331 = vpack.c.b16 %v875, %v871
    %v1332 = vpack.c.b16 %v880, %v876
    %v1333 = vpack.c.b16 %v881, %v877
    %v1334 = vpack.c.b16 %v882, %v878
    %v1335 = vpack.c.b16 %v883, %v879
    %v1336 = vpack.c.b16 %v888, %v884
    %v1337 = vpack.c.b16 %v889, %v885
    %v1338 = vpack.c.b16 %v890, %v886
    %v1339 = vpack.c.b16 %v891, %v887
    %v1340 = vpack.c.b16 %v896, %v892
    %v1341 = vpack.c.b16 %v897, %v893
    %v1342 = vpack.c.b16 %v898, %v894
    %v1343 = vpack.c.b16 %v899, %v895
    %v1344 = vpack.c.b16 %v904, %v900
    %v1345 = vpack.c.b16 %v905, %v901
    %v1346 = vpack.c.b16 %v906, %v902
    %v1347 = vpack.c.b16 %v907, %v903
    %v1348 = vpack.c.b16 %v912, %v908
    %v1349 = vpack.c.b16 %v913, %v909
    %v1350 = vpack.c.b16 %v914, %v910
    %v1351 = vpack.c.b16 %v915, %v911
    %v1352 = vpack.c.b16 %v920, %v916
    %v1353 = vpack.c.b16 %v921, %v917
    %v1354 = vpack.c.b16 %v922, %v918
    %v1355 = vpack.c.b16 %v923, %v919
    %v1356 = vpack.c.b16 %v928, %v924
    %v1357 = vpack.c.b16 %v929, %v925
    %v1358 = vpack.c.b16 %v930, %v926
    %v1359 = vpack.c.b16 %v931, %v927
    %v1360 = vpack.c.b16 %v936, %v932
    %v1361 = vpack.c.b16 %v937, %v933
    %v1362 = vpack.c.b16 %v938, %v934
    %v1363 = vpack.c.b16 %v939, %v935
    %v1364 = vpack.c.b16 %v944, %v940
    %v1365 = vpack.c.b16 %v945, %v941
    %v1366 = vpack.c.b16 %v946, %v942
    %v1367 = vpack.c.b16 %v947, %v943
    %v1368 = vpack.c.b16 %v952, %v948
    %v1369 = vpack.c.b16 %v953, %v949
    %v1370 = vpack.c.b16 %v954, %v950
    %v1371 = vpack.c.b16 %v955, %v951
    %v1372 = vpack.c.b16 %v960, %v956
    %v1373 = vpack.c.b16 %v961, %v957
    %v1374 = vpack.c.b16 %v962, %v958
    %v1375 = vpack.c.b16 %v963, %v959
    %v1376 = vpack.c.b16 %v968, %v964
    %v1377 = vpack.c.b16 %v969, %v965
    %v1378 = vpack.c.b16 %v970, %v966
    %v1379 = vpack.c.b16 %v971, %v967
    %v1380 = vpack.c.b16 %v976, %v972
    %v1381 = vpack.c.b16 %v977, %v973
    %v1382 = vpack.c.b16 %v978, %v974
    %v1383 = vpack.c.b16 %v979, %v975
    %v1384 = vpack.c.b16 %v984, %v980
    %v1385 = vpack.c.b16 %v985, %v981
    %v1386 = vpack.c.b16 %v986, %v982
    %v1387 = vpack.c.b16 %v987, %v983
    %v1388 = vpack.c.b16 %v992, %v988
    %v1389 = vpack.c.b16 %v993, %v989
    %v1390 = vpack.c.b16 %v994, %v990
    %v1391 = vpack.c.b16 %v995, %v991
    %v1392 = vpack.c.b16 %v1000, %v996
    %v1393 = vpack.c.b16 %v1001, %v997
    %v1394 = vpack.c.b16 %v1002, %v998
    %v1395 = vpack.c.b16 %v1003, %v999
    %v1396 = vpack.c.b16 %v1008, %v1004
    %v1397 = vpack.c.b16 %v1009, %v1005
    %v1398 = vpack.c.b16 %v1010, %v1006
    %v1399 = vpack.c.b16 %v1011, %v1007
    %v1400 = vpack.c.b16 %v1016, %v1012
    %v1401 = vpack.c.b16 %v1017, %v1013
    %v1402 = vpack.c.b16 %v1018, %v1014
    %v1403 = vpack.c.b16 %v1019, %v1015
    %v1404 = vpack.c.b16 %v1024, %v1020
    %v1405 = vpack.c.b16 %v1025, %v1021
    %v1406 = vpack.c.b16 %v1026, %v1022
    %v1407 = vpack.c.b16 %v1027, %v1023
    %v1408 = vpack.c.b16 %v1032, %v1028
    %v1409 = vpack.c.b16 %v1033, %v1029
    %v1410 = vpack.c.b16 %v1034, %v1030
    %v1411 = vpack.c.b16 %v1035, %v1031
    %v1412 = vpack.c.b16 %v1040, %v1036
    %v1413 = vpack.c.b16 %v1041, %v1037
    %v1414 = vpack.c.b16 %v1042, %v1038
    %v1415 = vpack.c.b16 %v1043, %v1039
    %v1416 = vpack.c.b16 %v1048, %v1044
    %v1417 = vpack.c.b16 %v1049, %v1045
    %v1418 = vpack.c.b16 %v1050, %v1046
    %v1419 = vpack.c.b16 %v1051, %v1047
    %v1420 = vpack.c.b16 %v1056, %v1052
    %v1421 = vpack.c.b16 %v1057, %v1053
    %v1422 = vpack.c.b16 %v1058, %v1054
    %v1423 = vpack.c.b16 %v1059, %v1055
    %v1424 = vpack.c.b16 %v1064, %v1060
    %v1425 = vpack.c.b16 %v1065, %v1061
    %v1426 = vpack.c.b16 %v1066, %v1062
    %v1427 = vpack.c.b16 %v1067, %v1063
    %v1428 = vpack.c.b16 %v1072, %v1068
    %v1429 = vpack.c.b16 %v1073, %v1069
    %v1430 = vpack.c.b16 %v1074, %v1070
    %v1431 = vpack.c.b16 %v1075, %v1071
    %v1432 = vpack.c.b16 %v1080, %v1076
    %v1433 = vpack.c.b16 %v1081, %v1077
    %v1434 = vpack.c.b16 %v1082, %v1078
    %v1435 = vpack.c.b16 %v1083, %v1079
    %v1436 = vpack.c.b16 %v1088, %v1084
    %v1437 = vpack.c.b16 %v1089, %v1085
    %v1438 = vpack.c.b16 %v1090, %v1086
    %v1439 = vpack.c.b16 %v1091, %v1087
    %v1440 = vpack.c.b16 %v1096, %v1092
    %v1441 = vpack.c.b16 %v1097, %v1093
    %v1442 = vpack.c.b16 %v1098, %v1094
    %v1443 = vpack.c.b16 %v1099, %v1095
    %v1444 = vpack.c.b16 %v1104, %v1100
    %v1445 = vpack.c.b16 %v1105, %v1101
    %v1446 = vpack.c.b16 %v1106, %v1102
    %v1447 = vpack.c.b16 %v1107, %v1103
    %v1448 = vpack.c.b16 %v1112, %v1108
    %v1449 = vpack.c.b16 %v1113, %v1109
    %v1450 = vpack.c.b16 %v1114, %v1110
    %v1451 = vpack.c.b16 %v1115, %v1111
    %v1452 = vpack.c.b16 %v1120, %v1116
    %v1453 = vpack.c.b16 %v1121, %v1117
    %v1454 = vpack.c.b16 %v1122, %v1118
    %v1455 = vpack.c.b16 %v1123, %v1119
    %v1456 = vpack.c.b16 %v1128, %v1124
    %v1457 = vpack.c.b16 %v1129, %v1125
    %v1458 = vpack.c.b16 %v1130, %v1126
    %v1459 = vpack.c.b16 %v1131, %v1127
    %v1460 = vpack.c.b16 %v1136, %v1132
    %v1461 = vpack.c.b16 %v1137, %v1133
    %v1462 = vpack.c.b16 %v1138, %v1134
    %v1463 = vpack.c.b16 %v1139, %v1135
    %v1464 = vpack.c.b16 %v1144, %v1140
    %v1465 = vpack.c.b16 %v1145, %v1141
    %v1466 = vpack.c.b16 %v1146, %v1142
    %v1467 = vpack.c.b16 %v1147, %v1143
    %v1468 = vpack.c.b16 %v1152, %v1148
    %v1469 = vpack.c.b16 %v1153, %v1149
    %v1470 = vpack.c.b16 %v1154, %v1150
    %v1471 = vpack.c.b16 %v1155, %v1151
    %v1472 = vpack.c.b16 %v1160, %v1156
    %v1473 = vpack.c.b16 %v1161, %v1157
    %v1474 = vpack.c.b16 %v1162, %v1158
    %v1475 = vpack.c.b16 %v1163, %v1159
    %v1476 = vpack.c.b16 %v1168, %v1164
    %v1477 = vpack.c.b16 %v1169, %v1165
    %v1478 = vpack.c.b16 %v1170, %v1166
    %v1479 = vpack.c.b16 %v1171, %v1167
    %v1480 = vpack.c.b16 %v1176, %v1172
    %v1481 = vpack.c.b16 %v1177, %v1173
    %v1482 = vpack.c.b16 %v1178, %v1174
    %v1483 = vpack.c.b16 %v1179, %v1175
    %v1484 = vpack.c.b16 %v1184, %v1180
    %v1485 = vpack.c.b16 %v1185, %v1181
    %v1486 = vpack.c.b16 %v1186, %v1182
    %v1487 = vpack.c.b16 %v1187, %v1183
    %v1488 = vpack.c.b16 %v1192, %v1188
    %v1489 = vpack.c.b16 %v1193, %v1189
    %v1490 = vpack.c.b16 %v1194, %v1190
    %v1491 = vpack.c.b16 %v1195, %v1191
    %v1492 = vpack.c.b16 %v1200, %v1196
    %v1493 = vpack.c.b16 %v1201, %v1197
    %v1494 = vpack.c.b16 %v1202, %v1198
    %v1495 = vpack.c.b16 %v1203, %v1199
    %v1496 = vpack.c.b16 %v1208, %v1204
    %v1497 = vpack.c.b16 %v1209, %v1205
    %v1498 = vpack.c.b16 %v1210, %v1206
    %v1499 = vpack.c.b16 %v1211, %v1207
    %v1500 = vpack.c.b16 %v1216, %v1212
    %v1501 = vpack.c.b16 %v1217, %v1213
    %v1502 = vpack.c.b16 %v1218, %v1214
    %v1503 = vpack.c.b16 %v1219, %v1215
    %v1504 = vpack.c.b16 %v1224, %v1220
    %v1505 = vpack.c.b16 %v1225, %v1221
    %v1506 = vpack.c.b16 %v1226, %v1222
    %v1507 = vpack.c.b16 %v1227, %v1223
    %v1508 = vpack.c.b16 %v1232, %v1228
    %v1509 = vpack.c.b16 %v1233, %v1229
    %v1510 = vpack.c.b16 %v1234, %v1230
    %v1511 = vpack.c.b16 %v1235, %v1231
    %v1512 = vpack.c.b16 %v1240, %v1236
    %v1513 = vpack.c.b16 %v1241, %v1237
    %v1514 = vpack.c.b16 %v1242, %v1238
    %v1515 = vpack.c.b16 %v1243, %v1239
    %v1516 = vpack.c.b16 %v1248, %v1244
    %v1517 = vpack.c.b16 %v1249, %v1245
    %v1518 = vpack.c.b16 %v1250, %v1246
    %v1519 = vpack.c.b16 %v1251, %v1247
    %v1520 = vpack.c.b16 %v1256, %v1252
    %v1521 = vpack.c.b16 %v1257, %v1253
    %v1522 = vpack.c.b16 %v1258, %v1254
    %v1523 = vpack.c.b16 %v1259, %v1255
    %v1524 = vpack.c.b16 %v1264, %v1260
    %v1525 = vpack.c.b16 %v1265, %v1261
    %v1526 = vpack.c.b16 %v1266, %v1262
    %v1527 = vpack.c.b16 %v1267, %v1263
    %v1528 = vpack.c.b16 %v1272, %v1268
    %v1529 = vpack.c.b16 %v1273, %v1269
    %v1530 = vpack.c.b16 %v1274, %v1270
    %v1531 = vpack.c.b16 %v1275, %v1271
    %1788 = vmatprep.subr.bf16.mxu0 %v1277
    %1789 = vmatpush1.bf16.msra.mxu0 %v1276
    %1790 = vmatprep.subr.bf16.mxu0 %v1281
    %1791 = vmatpush1.bf16.msra.mxu0 %v1280
    %1792 = vmatprep.subr.bf16.mxu0 %v1285
    %1793 = vmatpush1.bf16.msra.mxu0 %v1284
    %1794 = vmatprep.subr.bf16.mxu0 %v1289
    %1795 = vmatpush1.bf16.msra.mxu0 %v1288
    %1796 = vmatprep.subr.bf16.mxu0 %v1293
    %1797 = vmatpush1.bf16.msra.mxu0 %v1292
    %1798 = vmatprep.subr.bf16.mxu0 %v1297
    %1799 = vmatpush1.bf16.msra.mxu0 %v1296
    %1800 = vmatprep.subr.bf16.mxu0 %v1301
    %1801 = vmatpush1.bf16.msra.mxu0 %v1300
    %1802 = vmatprep.subr.bf16.mxu0 %v1305
    %1803 = vmatpush1.bf16.msra.mxu0 %v1304
    %1804 = vmatprep.subr.bf16.mxu0 %v1309
    %1805 = vmatpush1.bf16.msra.mxu0 %v1308
    %1806 = vmatprep.subr.bf16.mxu0 %v1313
    %1807 = vmatpush1.bf16.msra.mxu0 %v1312
    %1808 = vmatprep.subr.bf16.mxu0 %v1317
    %1809 = vmatpush1.bf16.msra.mxu0 %v1316
    %1810 = vmatprep.subr.bf16.mxu0 %v1321
    %1811 = vmatpush1.bf16.msra.mxu0 %v1320
    %1812 = vmatprep.subr.bf16.mxu0 %v1325
    %1813 = vmatpush1.bf16.msra.mxu0 %v1324
    %1814 = vmatprep.subr.bf16.mxu0 %v1329
    %1815 = vmatpush1.bf16.msra.mxu0 %v1328
    %1816 = vmatprep.subr.bf16.mxu0 %v1333
    %1817 = vmatpush1.bf16.msra.mxu0 %v1332
    %1818 = vmatprep.subr.bf16.mxu0 %v1337
    %1819 = vmatpush1.bf16.msra.mxu0 %v1336
    %1820 = vmatprep.mubr.bf16.mxu0 %v199
    %1821 = vmatmul.mubr.bf16.gmra.mrb[0].mxu0 %v198
    %v1822 = vpop.f32.mrb[0].mxu0
    %v1823 = vadd.f32 %v491, %v1822
    %v1824 = vpop.f32.mrb[0].mxu0
    %v1825 = vadd.f32 %v495, %v1824
    %v1826 = vpop.f32.mrb[0].mxu0
    %v1827 = vadd.f32 %v491, %v1826
    %v1828 = vpop.f32.mrb[0].mxu0
    %v1829 = vadd.f32 %v495, %v1828
    %1830 = vmatprep.mubr.bf16.mxu0 %v207
    %1831 = vmatmul.mubr.bf16.gmra.mrb[0].mxu0 %v206
    %v1832 = vpop.f32.mrb[0].mxu0
    %v1833 = vadd.f32 %v491, %v1832
    %v1834 = vpop.f32.mrb[0].mxu0
    %v1835 = vadd.f32 %v495, %v1834
    %v1836 = vpop.f32.mrb[0].mxu0
    %v1837 = vadd.f32 %v491, %v1836
    %v1838 = vpop.f32.mrb[0].mxu0
    %v1839 = vadd.f32 %v495, %v1838
    %1840 = vmatprep.mubr.bf16.mxu0 %v215
    %1841 = vmatmul.mubr.bf16.gmra.mrb[0].mxu0 %v214
    %v1842 = vpop.f32.mrb[0].mxu0
    %v1843 = vadd.f32 %v491, %v1842
    %v1844 = vpop.f32.mrb[0].mxu0
    %v1845 = vadd.f32 %v495, %v1844
    %v1846 = vpop.f32.mrb[0].mxu0
    %v1847 = vadd.f32 %v491, %v1846
    %v1848 = vpop.f32.mrb[0].mxu0
    %v1849 = vadd.f32 %v495, %v1848
    %1850 = vmatprep.mubr.bf16.mxu0 %v223
    %1851 = vmatmul.mubr.bf16.gmra.mrb[0].mxu0 %v222
    %v1852 = vpop.f32.mrb[0].mxu0
    %v1853 = vadd.f32 %v491, %v1852
    %v1854 = vpop.f32.mrb[0].mxu0
    %v1855 = vadd.f32 %v495, %v1854
    %v1856 = vpop.f32.mrb[0].mxu0
    %v1857 = vadd.f32 %v491, %v1856
    %v1858 = vpop.f32.mrb[0].mxu0
    %v1859 = vadd.f32 %v495, %v1858
    %1860 = vdwg.mxu0
    %1861 = vmatprep.subr.bf16.mxu0 %v1341
    %1862 = vmatpush1.bf16.msra.mxu0 %v1340
    %1863 = vmatprep.subr.bf16.mxu0 %v1345
    %1864 = vmatpush1.bf16.msra.mxu0 %v1344
    %1865 = vmatprep.subr.bf16.mxu0 %v1349
    %1866 = vmatpush1.bf16.msra.mxu0 %v1348
    %1867 = vmatprep.subr.bf16.mxu0 %v1353
    %1868 = vmatpush1.bf16.msra.mxu0 %v1352
    %1869 = vmatprep.subr.bf16.mxu0 %v1357
    %1870 = vmatpush1.bf16.msra.mxu0 %v1356
    %1871 = vmatprep.subr.bf16.mxu0 %v1361
    %1872 = vmatpush1.bf16.msra.mxu0 %v1360
    %1873 = vmatprep.subr.bf16.mxu0 %v1365
    %1874 = vmatpush1.bf16.msra.mxu0 %v1364
    %1875 = vmatprep.subr.bf16.mxu0 %v1369
    %1876 = vmatpush1.bf16.msra.mxu0 %v1368
    %1877 = vmatprep.subr.bf16.mxu0 %v1373
    %1878 = vmatpush1.bf16.msra.mxu0 %v1372
    %1879 = vmatprep.subr.bf16.mxu0 %v1377
    %1880 = vmatpush1.bf16.msra.mxu0 %v1376
    %1881 = vmatprep.subr.bf16.mxu0 %v1381
    %1882 = vmatpush1.bf16.msra.mxu0 %v1380
    %1883 = vmatprep.subr.bf16.mxu0 %v1385
    %1884 = vmatpush1.bf16.msra.mxu0 %v1384
    %1885 = vmatprep.subr.bf16.mxu0 %v1389
    %1886 = vmatpush1.bf16.msra.mxu0 %v1388
    %1887 = vmatprep.subr.bf16.mxu0 %v1393
    %1888 = vmatpush1.bf16.msra.mxu0 %v1392
    %1889 = vmatprep.subr.bf16.mxu0 %v1397
    %1890 = vmatpush1.bf16.msra.mxu0 %v1396
    %1891 = vmatprep.subr.bf16.mxu0 %v1401
    %1892 = vmatpush1.bf16.msra.mxu0 %v1400
    %1893 = vmatprep.mubr.bf16.mxu0 %v201
    %1894 = vmatmul.mubr.bf16.gmra.mrb[0].mxu0 %v200
    %v1895 = vpop.f32.mrb[0].mxu0
    %v1896 = vadd.f32 %v1823, %v1895
    %v1897 = vpop.f32.mrb[0].mxu0
    %v1898 = vadd.f32 %v1825, %v1897
    %v1899 = vpop.f32.mrb[0].mxu0
    %v1900 = vadd.f32 %v1827, %v1899
    %v1901 = vpop.f32.mrb[0].mxu0
    %v1902 = vadd.f32 %v1829, %v1901
    %1903 = vmatprep.mubr.bf16.mxu0 %v209
    %1904 = vmatmul.mubr.bf16.gmra.mrb[0].mxu0 %v208
    %v1905 = vpop.f32.mrb[0].mxu0
    %v1906 = vadd.f32 %v1833, %v1905
    %v1907 = vpop.f32.mrb[0].mxu0
    %v1908 = vadd.f32 %v1835, %v1907
    %v1909 = vpop.f32.mrb[0].mxu0
    %v1910 = vadd.f32 %v1837, %v1909
    %v1911 = vpop.f32.mrb[0].mxu0
    %v1912 = vadd.f32 %v1839, %v1911
    %1913 = vmatprep.mubr.bf16.mxu0 %v217
    %1914 = vmatmul.mubr.bf16.gmra.mrb[0].mxu0 %v216
    %v1915 = vpop.f32.mrb[0].mxu0
    %v1916 = vadd.f32 %v1843, %v1915
    %v1917 = vpop.f32.mrb[0].mxu0
    %v1918 = vadd.f32 %v1845, %v1917
    %v1919 = vpop.f32.mrb[0].mxu0
    %v1920 = vadd.f32 %v1847, %v1919
    %v1921 = vpop.f32.mrb[0].mxu0
    %v1922 = vadd.f32 %v1849, %v1921
    %1923 = vmatprep.mubr.bf16.mxu0 %v225
    %1924 = vmatmul.mubr.bf16.gmra.mrb[0].mxu0 %v224
    %v1925 = vpop.f32.mrb[0].mxu0
    %v1926 = vadd.f32 %v1853, %v1925
    %v1927 = vpop.f32.mrb[0].mxu0
    %v1928 = vadd.f32 %v1855, %v1927
    %v1929 = vpop.f32.mrb[0].mxu0
    %v1930 = vadd.f32 %v1857, %v1929
    %v1931 = vpop.f32.mrb[0].mxu0
    %v1932 = vadd.f32 %v1859, %v1931
    %1933 = vdwg.mxu0
    %1934 = vmatprep.subr.bf16.mxu0 %v1405
    %1935 = vmatpush1.bf16.msra.mxu0 %v1404
    %1936 = vmatprep.subr.bf16.mxu0 %v1409
    %1937 = vmatpush1.bf16.msra.mxu0 %v1408
    %1938 = vmatprep.subr.bf16.mxu0 %v1413
    %1939 = vmatpush1.bf16.msra.mxu0 %v1412
    %1940 = vmatprep.subr.bf16.mxu0 %v1417
    %1941 = vmatpush1.bf16.msra.mxu0 %v1416
    %1942 = vmatprep.subr.bf16.mxu0 %v1421
    %1943 = vmatpush1.bf16.msra.mxu0 %v1420
    %1944 = vmatprep.subr.bf16.mxu0 %v1425
    %1945 = vmatpush1.bf16.msra.mxu0 %v1424
    %1946 = vmatprep.subr.bf16.mxu0 %v1429
    %1947 = vmatpush1.bf16.msra.mxu0 %v1428
    %1948 = vmatprep.subr.bf16.mxu0 %v1433
    %1949 = vmatpush1.bf16.msra.mxu0 %v1432
    %1950 = vmatprep.subr.bf16.mxu0 %v1437
    %1951 = vmatpush1.bf16.msra.mxu0 %v1436
    %1952 = vmatprep.subr.bf16.mxu0 %v1441
    %1953 = vmatpush1.bf16.msra.mxu0 %v1440
    %1954 = vmatprep.subr.bf16.mxu0 %v1445
    %1955 = vmatpush1.bf16.msra.mxu0 %v1444
    %1956 = vmatprep.subr.bf16.mxu0 %v1449
    %1957 = vmatpush1.bf16.msra.mxu0 %v1448
    %1958 = vmatprep.subr.bf16.mxu0 %v1453
    %1959 = vmatpush1.bf16.msra.mxu0 %v1452
    %1960 = vmatprep.subr.bf16.mxu0 %v1457
    %1961 = vmatpush1.bf16.msra.mxu0 %v1456
    %1962 = vmatprep.subr.bf16.mxu0 %v1461
    %1963 = vmatpush1.bf16.msra.mxu0 %v1460
    %1964 = vmatprep.subr.bf16.mxu0 %v1465
    %1965 = vmatpush1.bf16.msra.mxu0 %v1464
    %1966 = vmatprep.mubr.bf16.mxu0 %v203
    %1967 = vmatmul.mubr.bf16.gmra.mrb[0].mxu0 %v202
    %v1968 = vpop.f32.mrb[0].mxu0
    %v1969 = vadd.f32 %v1896, %v1968
    %v1970 = vpop.f32.mrb[0].mxu0
    %v1971 = vadd.f32 %v1898, %v1970
    %v1972 = vpop.f32.mrb[0].mxu0
    %v1973 = vadd.f32 %v1900, %v1972
    %v1974 = vpop.f32.mrb[0].mxu0
    %v1975 = vadd.f32 %v1902, %v1974
    %1976 = vmatprep.mubr.bf16.mxu0 %v211
    %1977 = vmatmul.mubr.bf16.gmra.mrb[0].mxu0 %v210
    %v1978 = vpop.f32.mrb[0].mxu0
    %v1979 = vadd.f32 %v1906, %v1978
    %v1980 = vpop.f32.mrb[0].mxu0
    %v1981 = vadd.f32 %v1908, %v1980
    %v1982 = vpop.f32.mrb[0].mxu0
    %v1983 = vadd.f32 %v1910, %v1982
    %v1984 = vpop.f32.mrb[0].mxu0
    %v1985 = vadd.f32 %v1912, %v1984
    %1986 = vmatprep.mubr.bf16.mxu0 %v219
    %1987 = vmatmul.mubr.bf16.gmra.mrb[0].mxu0 %v218
    %v1988 = vpop.f32.mrb[0].mxu0
    %v1989 = vadd.f32 %v1916, %v1988
    %v1990 = vpop.f32.mrb[0].mxu0
    %v1991 = vadd.f32 %v1918, %v1990
    %v1992 = vpop.f32.mrb[0].mxu0
    %v1993 = vadd.f32 %v1920, %v1992
    %v1994 = vpop.f32.mrb[0].mxu0
    %v1995 = vadd.f32 %v1922, %v1994
    %1996 = vmatprep.mubr.bf16.mxu0 %v227
    %1997 = vmatmul.mubr.bf16.gmra.mrb[0].mxu0 %v226
    %v1998 = vpop.f32.mrb[0].mxu0
    %v1999 = vadd.f32 %v1926, %v1998
    %v2000 = vpop.f32.mrb[0].mxu0
    %v2001 = vadd.f32 %v1928, %v2000
    %v2002 = vpop.f32.mrb[0].mxu0
    %v2003 = vadd.f32 %v1930, %v2002
    %v2004 = vpop.f32.mrb[0].mxu0
    %v2005 = vadd.f32 %v1932, %v2004
    %2006 = vdwg.mxu0
    %2007 = vmatprep.subr.bf16.mxu0 %v1469
    %2008 = vmatpush1.bf16.msra.mxu0 %v1468
    %2009 = vmatprep.subr.bf16.mxu0 %v1473
    %2010 = vmatpush1.bf16.msra.mxu0 %v1472
    %2011 = vmatprep.subr.bf16.mxu0 %v1477
    %2012 = vmatpush1.bf16.msra.mxu0 %v1476
    %2013 = vmatprep.subr.bf16.mxu0 %v1481
    %2014 = vmatpush1.bf16.msra.mxu0 %v1480
    %2015 = vmatprep.subr.bf16.mxu0 %v1485
    %2016 = vmatpush1.bf16.msra.mxu0 %v1484
    %2017 = vmatprep.subr.bf16.mxu0 %v1489
    %2018 = vmatpush1.bf16.msra.mxu0 %v1488
    %2019 = vmatprep.subr.bf16.mxu0 %v1493
    %2020 = vmatpush1.bf16.msra.mxu0 %v1492
    %2021 = vmatprep.subr.bf16.mxu0 %v1497
    %2022 = vmatpush1.bf16.msra.mxu0 %v1496
    %2023 = vmatprep.subr.bf16.mxu0 %v1501
    %2024 = vmatpush1.bf16.msra.mxu0 %v1500
    %2025 = vmatprep.subr.bf16.mxu0 %v1505
    %2026 = vmatpush1.bf16.msra.mxu0 %v1504
    %2027 = vmatprep.subr.bf16.mxu0 %v1509
    %2028 = vmatpush1.bf16.msra.mxu0 %v1508
    %2029 = vmatprep.subr.bf16.mxu0 %v1513
    %2030 = vmatpush1.bf16.msra.mxu0 %v1512
    %2031 = vmatprep.subr.bf16.mxu0 %v1517
    %2032 = vmatpush1.bf16.msra.mxu0 %v1516
    %2033 = vmatprep.subr.bf16.mxu0 %v1521
    %2034 = vmatpush1.bf16.msra.mxu0 %v1520
    %2035 = vmatprep.subr.bf16.mxu0 %v1525
    %2036 = vmatpush1.bf16.msra.mxu0 %v1524
    %2037 = vmatprep.subr.bf16.mxu0 %v1529
    %2038 = vmatpush1.bf16.msra.mxu0 %v1528
    %2039 = vmatprep.mubr.bf16.mxu0 %v205
    %2040 = vmatmul.mubr.bf16.gmra.mrb[0].mxu0 %v204
    %v2041 = vpop.f32.mrb[0].mxu0
    %v2042 = vadd.f32 %v1969, %v2041
    %v2043 = vpop.f32.mrb[0].mxu0
    %v2044 = vadd.f32 %v1971, %v2043
    %v2045 = vpop.f32.mrb[0].mxu0
    %v2046 = vadd.f32 %v1973, %v2045
    %v2047 = vpop.f32.mrb[0].mxu0
    %v2048 = vadd.f32 %v1975, %v2047
    %2049 = vmatprep.mubr.bf16.mxu0 %v213
    %2050 = vmatmul.mubr.bf16.gmra.mrb[0].mxu0 %v212
    %v2051 = vpop.f32.mrb[0].mxu0
    %v2052 = vadd.f32 %v1979, %v2051
    %v2053 = vpop.f32.mrb[0].mxu0
    %v2054 = vadd.f32 %v1981, %v2053
    %v2055 = vpop.f32.mrb[0].mxu0
    %v2056 = vadd.f32 %v1983, %v2055
    %v2057 = vpop.f32.mrb[0].mxu0
    %v2058 = vadd.f32 %v1985, %v2057
    %2059 = vmatprep.mubr.bf16.mxu0 %v221
    %2060 = vmatmul.mubr.bf16.gmra.mrb[0].mxu0 %v220
    %v2061 = vpop.f32.mrb[0].mxu0
    %v2062 = vadd.f32 %v1989, %v2061
    %v2063 = vpop.f32.mrb[0].mxu0
    %v2064 = vadd.f32 %v1991, %v2063
    %v2065 = vpop.f32.mrb[0].mxu0
    %v2066 = vadd.f32 %v1993, %v2065
    %v2067 = vpop.f32.mrb[0].mxu0
    %v2068 = vadd.f32 %v1995, %v2067
    %2069 = vmatprep.mubr.bf16.mxu0 %v229
    %2070 = vmatmul.mubr.bf16.gmra.mrb[0].mxu0 %v228
    %v2071 = vpop.f32.mrb[0].mxu0
    %v2072 = vadd.f32 %v1999, %v2071
    %v2073 = vpop.f32.mrb[0].mxu0
    %v2074 = vadd.f32 %v2001, %v2073
    %v2075 = vpop.f32.mrb[0].mxu0
    %v2076 = vadd.f32 %v2003, %v2075
    %v2077 = vpop.f32.mrb[0].mxu0
    %v2078 = vadd.f32 %v2005, %v2077
    %2079 = vdwg.mxu0
    %2080 = vmatprep.subr.bf16.mxu0 %v1279
    %2081 = vmatpush1.bf16.msra.mxu0 %v1278
    %2082 = vmatprep.subr.bf16.mxu0 %v1283
    %2083 = vmatpush1.bf16.msra.mxu0 %v1282
    %2084 = vmatprep.subr.bf16.mxu0 %v1287
    %2085 = vmatpush1.bf16.msra.mxu0 %v1286
    %2086 = vmatprep.subr.bf16.mxu0 %v1291
    %2087 = vmatpush1.bf16.msra.mxu0 %v1290
    %2088 = vmatprep.subr.bf16.mxu0 %v1295
    %2089 = vmatpush1.bf16.msra.mxu0 %v1294
    %2090 = vmatprep.subr.bf16.mxu0 %v1299
    %2091 = vmatpush1.bf16.msra.mxu0 %v1298
    %2092 = vmatprep.subr.bf16.mxu0 %v1303
    %2093 = vmatpush1.bf16.msra.mxu0 %v1302
    %2094 = vmatprep.subr.bf16.mxu0 %v1307
    %2095 = vmatpush1.bf16.msra.mxu0 %v1306
    %2096 = vmatprep.subr.bf16.mxu0 %v1311
    %2097 = vmatpush1.bf16.msra.mxu0 %v1310
    %2098 = vmatprep.subr.bf16.mxu0 %v1315
    %2099 = vmatpush1.bf16.msra.mxu0 %v1314
    %2100 = vmatprep.subr.bf16.mxu0 %v1319
    %2101 = vmatpush1.bf16.msra.mxu0 %v1318
    %2102 = vmatprep.subr.bf16.mxu0 %v1323
    %2103 = vmatpush1.bf16.msra.mxu0 %v1322
    %2104 = vmatprep.subr.bf16.mxu0 %v1327
    %2105 = vmatpush1.bf16.msra.mxu0 %v1326
    %2106 = vmatprep.subr.bf16.mxu0 %v1331
    %2107 = vmatpush1.bf16.msra.mxu0 %v1330
    %2108 = vmatprep.subr.bf16.mxu0 %v1335
    %2109 = vmatpush1.bf16.msra.mxu0 %v1334
    %2110 = vmatprep.subr.bf16.mxu0 %v1339
    %2111 = vmatpush1.bf16.msra.mxu0 %v1338
    %2112 = vmatprep.mubr.bf16.mxu0 %v199
    %2113 = vmatmul.mubr.bf16.gmra.mrb[0].mxu0 %v198
    %v2114 = vpop.f32.mrb[0].mxu0
    %v2115 = vadd.f32 %v499, %v2114
    %v2116 = vpop.f32.mrb[0].mxu0
    %v2117 = vadd.f32 %v503, %v2116
    %v2118 = vpop.f32.mrb[0].mxu0
    %v2119 = vadd.f32 %v499, %v2118
    %v2120 = vpop.f32.mrb[0].mxu0
    %v2121 = vadd.f32 %v503, %v2120
    %2122 = vmatprep.mubr.bf16.mxu0 %v207
    %2123 = vmatmul.mubr.bf16.gmra.mrb[0].mxu0 %v206
    %v2124 = vpop.f32.mrb[0].mxu0
    %v2125 = vadd.f32 %v499, %v2124
    %v2126 = vpop.f32.mrb[0].mxu0
    %v2127 = vadd.f32 %v503, %v2126
    %v2128 = vpop.f32.mrb[0].mxu0
    %v2129 = vadd.f32 %v499, %v2128
    %v2130 = vpop.f32.mrb[0].mxu0
    %v2131 = vadd.f32 %v503, %v2130
    %2132 = vmatprep.mubr.bf16.mxu0 %v215
    %2133 = vmatmul.mubr.bf16.gmra.mrb[0].mxu0 %v214
    %v2134 = vpop.f32.mrb[0].mxu0
    %v2135 = vadd.f32 %v499, %v2134
    %v2136 = vpop.f32.mrb[0].mxu0
    %v2137 = vadd.f32 %v503, %v2136
    %v2138 = vpop.f32.mrb[0].mxu0
    %v2139 = vadd.f32 %v499, %v2138
    %v2140 = vpop.f32.mrb[0].mxu0
    %v2141 = vadd.f32 %v503, %v2140
    %2142 = vmatprep.mubr.bf16.mxu0 %v223
    %2143 = vmatmul.mubr.bf16.gmra.mrb[0].mxu0 %v222
    %v2144 = vpop.f32.mrb[0].mxu0
    %v2145 = vadd.f32 %v499, %v2144
    %v2146 = vpop.f32.mrb[0].mxu0
    %v2147 = vadd.f32 %v503, %v2146
    %v2148 = vpop.f32.mrb[0].mxu0
    %v2149 = vadd.f32 %v499, %v2148
    %v2150 = vpop.f32.mrb[0].mxu0
    %v2151 = vadd.f32 %v503, %v2150
    %2152 = vdwg.mxu0
    %2153 = vmatprep.subr.bf16.mxu0 %v1343
    %2154 = vmatpush1.bf16.msra.mxu0 %v1342
    %2155 = vmatprep.subr.bf16.mxu0 %v1347
    %2156 = vmatpush1.bf16.msra.mxu0 %v1346
    %2157 = vmatprep.subr.bf16.mxu0 %v1351
    %2158 = vmatpush1.bf16.msra.mxu0 %v1350
    %2159 = vmatprep.subr.bf16.mxu0 %v1355
    %2160 = vmatpush1.bf16.msra.mxu0 %v1354
    %2161 = vmatprep.subr.bf16.mxu0 %v1359
    %2162 = vmatpush1.bf16.msra.mxu0 %v1358
    %2163 = vmatprep.subr.bf16.mxu0 %v1363
    %2164 = vmatpush1.bf16.msra.mxu0 %v1362
    %2165 = vmatprep.subr.bf16.mxu0 %v1367
    %2166 = vmatpush1.bf16.msra.mxu0 %v1366
    %2167 = vmatprep.subr.bf16.mxu0 %v1371
    %2168 = vmatpush1.bf16.msra.mxu0 %v1370
    %2169 = vmatprep.subr.bf16.mxu0 %v1375
    %2170 = vmatpush1.bf16.msra.mxu0 %v1374
    %2171 = vmatprep.subr.bf16.mxu0 %v1379
    %2172 = vmatpush1.bf16.msra.mxu0 %v1378
    %2173 = vmatprep.subr.bf16.mxu0 %v1383
    %2174 = vmatpush1.bf16.msra.mxu0 %v1382
    %2175 = vmatprep.subr.bf16.mxu0 %v1387
    %2176 = vmatpush1.bf16.msra.mxu0 %v1386
    %2177 = vmatprep.subr.bf16.mxu0 %v1391
    %2178 = vmatpush1.bf16.msra.mxu0 %v1390
    %2179 = vmatprep.subr.bf16.mxu0 %v1395
    %2180 = vmatpush1.bf16.msra.mxu0 %v1394
    %2181 = vmatprep.subr.bf16.mxu0 %v1399
    %2182 = vmatpush1.bf16.msra.mxu0 %v1398
    %2183 = vmatprep.subr.bf16.mxu0 %v1403
    %2184 = vmatpush1.bf16.msra.mxu0 %v1402
    %2185 = vmatprep.mubr.bf16.mxu0 %v201
    %2186 = vmatmul.mubr.bf16.gmra.mrb[0].mxu0 %v200
    %v2187 = vpop.f32.mrb[0].mxu0
    %v2188 = vadd.f32 %v2115, %v2187
    %v2189 = vpop.f32.mrb[0].mxu0
    %v2190 = vadd.f32 %v2117, %v2189
    %v2191 = vpop.f32.mrb[0].mxu0
    %v2192 = vadd.f32 %v2119, %v2191
    %v2193 = vpop.f32.mrb[0].mxu0
    %v2194 = vadd.f32 %v2121, %v2193
    %2195 = vmatprep.mubr.bf16.mxu0 %v209
    %2196 = vmatmul.mubr.bf16.gmra.mrb[0].mxu0 %v208
    %v2197 = vpop.f32.mrb[0].mxu0
    %v2198 = vadd.f32 %v2125, %v2197
    %v2199 = vpop.f32.mrb[0].mxu0
    %v2200 = vadd.f32 %v2127, %v2199
    %v2201 = vpop.f32.mrb[0].mxu0
    %v2202 = vadd.f32 %v2129, %v2201
    %v2203 = vpop.f32.mrb[0].mxu0
    %v2204 = vadd.f32 %v2131, %v2203
    %2205 = vmatprep.mubr.bf16.mxu0 %v217
    %2206 = vmatmul.mubr.bf16.gmra.mrb[0].mxu0 %v216
    %v2207 = vpop.f32.mrb[0].mxu0
    %v2208 = vadd.f32 %v2135, %v2207
    %v2209 = vpop.f32.mrb[0].mxu0
    %v2210 = vadd.f32 %v2137, %v2209
    %v2211 = vpop.f32.mrb[0].mxu0
    %v2212 = vadd.f32 %v2139, %v2211
    %v2213 = vpop.f32.mrb[0].mxu0
    %v2214 = vadd.f32 %v2141, %v2213
    %2215 = vmatprep.mubr.bf16.mxu0 %v225
    %2216 = vmatmul.mubr.bf16.gmra.mrb[0].mxu0 %v224
    %v2217 = vpop.f32.mrb[0].mxu0
    %v2218 = vadd.f32 %v2145, %v2217
    %v2219 = vpop.f32.mrb[0].mxu0
    %v2220 = vadd.f32 %v2147, %v2219
    %v2221 = vpop.f32.mrb[0].mxu0
    %v2222 = vadd.f32 %v2149, %v2221
    %v2223 = vpop.f32.mrb[0].mxu0
    %v2224 = vadd.f32 %v2151, %v2223
    %2225 = vdwg.mxu0
    %2226 = vmatprep.subr.bf16.mxu0 %v1407
    %2227 = vmatpush1.bf16.msra.mxu0 %v1406
    %2228 = vmatprep.subr.bf16.mxu0 %v1411
    %2229 = vmatpush1.bf16.msra.mxu0 %v1410
    %2230 = vmatprep.subr.bf16.mxu0 %v1415
    %2231 = vmatpush1.bf16.msra.mxu0 %v1414
    %2232 = vmatprep.subr.bf16.mxu0 %v1419
    %2233 = vmatpush1.bf16.msra.mxu0 %v1418
    %2234 = vmatprep.subr.bf16.mxu0 %v1423
    %2235 = vmatpush1.bf16.msra.mxu0 %v1422
    %2236 = vmatprep.subr.bf16.mxu0 %v1427
    %2237 = vmatpush1.bf16.msra.mxu0 %v1426
    %2238 = vmatprep.subr.bf16.mxu0 %v1431
    %2239 = vmatpush1.bf16.msra.mxu0 %v1430
    %2240 = vmatprep.subr.bf16.mxu0 %v1435
    %2241 = vmatpush1.bf16.msra.mxu0 %v1434
    %2242 = vmatprep.subr.bf16.mxu0 %v1439
    %2243 = vmatpush1.bf16.msra.mxu0 %v1438
    %2244 = vmatprep.subr.bf16.mxu0 %v1443
    %2245 = vmatpush1.bf16.msra.mxu0 %v1442
    %2246 = vmatprep.subr.bf16.mxu0 %v1447
    %2247 = vmatpush1.bf16.msra.mxu0 %v1446
    %2248 = vmatprep.subr.bf16.mxu0 %v1451
    %2249 = vmatpush1.bf16.msra.mxu0 %v1450
    %2250 = vmatprep.subr.bf16.mxu0 %v1455
    %2251 = vmatpush1.bf16.msra.mxu0 %v1454
    %2252 = vmatprep.subr.bf16.mxu0 %v1459
    %2253 = vmatpush1.bf16.msra.mxu0 %v1458
    %2254 = vmatprep.subr.bf16.mxu0 %v1463
    %2255 = vmatpush1.bf16.msra.mxu0 %v1462
    %2256 = vmatprep.subr.bf16.mxu0 %v1467
    %2257 = vmatpush1.bf16.msra.mxu0 %v1466
    %2258 = vmatprep.mubr.bf16.mxu0 %v203
    %2259 = vmatmul.mubr.bf16.gmra.mrb[0].mxu0 %v202
    %v2260 = vpop.f32.mrb[0].mxu0
    %v2261 = vadd.f32 %v2188, %v2260
    %v2262 = vpop.f32.mrb[0].mxu0
    %v2263 = vadd.f32 %v2190, %v2262
    %v2264 = vpop.f32.mrb[0].mxu0
    %v2265 = vadd.f32 %v2192, %v2264
    %v2266 = vpop.f32.mrb[0].mxu0
    %v2267 = vadd.f32 %v2194, %v2266
    %2268 = vmatprep.mubr.bf16.mxu0 %v211
    %2269 = vmatmul.mubr.bf16.gmra.mrb[0].mxu0 %v210
    %v2270 = vpop.f32.mrb[0].mxu0
    %v2271 = vadd.f32 %v2198, %v2270
    %v2272 = vpop.f32.mrb[0].mxu0
    %v2273 = vadd.f32 %v2200, %v2272
    %v2274 = vpop.f32.mrb[0].mxu0
    %v2275 = vadd.f32 %v2202, %v2274
    %v2276 = vpop.f32.mrb[0].mxu0
    %v2277 = vadd.f32 %v2204, %v2276
    %2278 = vmatprep.mubr.bf16.mxu0 %v219
    %2279 = vmatmul.mubr.bf16.gmra.mrb[0].mxu0 %v218
    %v2280 = vpop.f32.mrb[0].mxu0
    %v2281 = vadd.f32 %v2208, %v2280
    %v2282 = vpop.f32.mrb[0].mxu0
    %v2283 = vadd.f32 %v2210, %v2282
    %v2284 = vpop.f32.mrb[0].mxu0
    %v2285 = vadd.f32 %v2212, %v2284
    %v2286 = vpop.f32.mrb[0].mxu0
    %v2287 = vadd.f32 %v2214, %v2286
    %2288 = vmatprep.mubr.bf16.mxu0 %v227
    %2289 = vmatmul.mubr.bf16.gmra.mrb[0].mxu0 %v226
    %v2290 = vpop.f32.mrb[0].mxu0
    %v2291 = vadd.f32 %v2218, %v2290
    %v2292 = vpop.f32.mrb[0].mxu0
    %v2293 = vadd.f32 %v2220, %v2292
    %v2294 = vpop.f32.mrb[0].mxu0
    %v2295 = vadd.f32 %v2222, %v2294
    %v2296 = vpop.f32.mrb[0].mxu0
    %v2297 = vadd.f32 %v2224, %v2296
    %2298 = vdwg.mxu0
    %2299 = vmatprep.subr.bf16.mxu0 %v1471
    %2300 = vmatpush1.bf16.msra.mxu0 %v1470
    %2301 = vmatprep.subr.bf16.mxu0 %v1475
    %2302 = vmatpush1.bf16.msra.mxu0 %v1474
    %2303 = vmatprep.subr.bf16.mxu0 %v1479
    %2304 = vmatpush1.bf16.msra.mxu0 %v1478
    %2305 = vmatprep.subr.bf16.mxu0 %v1483
    %2306 = vmatpush1.bf16.msra.mxu0 %v1482
    %2307 = vmatprep.subr.bf16.mxu0 %v1487
    %2308 = vmatpush1.bf16.msra.mxu0 %v1486
    %2309 = vmatprep.subr.bf16.mxu0 %v1491
    %2310 = vmatpush1.bf16.msra.mxu0 %v1490
    %2311 = vmatprep.subr.bf16.mxu0 %v1495
    %2312 = vmatpush1.bf16.msra.mxu0 %v1494
    %2313 = vmatprep.subr.bf16.mxu0 %v1499
    %2314 = vmatpush1.bf16.msra.mxu0 %v1498
    %2315 = vmatprep.subr.bf16.mxu0 %v1503
    %2316 = vmatpush1.bf16.msra.mxu0 %v1502
    %2317 = vmatprep.subr.bf16.mxu0 %v1507
    %2318 = vmatpush1.bf16.msra.mxu0 %v1506
    %2319 = vmatprep.subr.bf16.mxu0 %v1511
    %2320 = vmatpush1.bf16.msra.mxu0 %v1510
    %2321 = vmatprep.subr.bf16.mxu0 %v1515
    %2322 = vmatpush1.bf16.msra.mxu0 %v1514
    %2323 = vmatprep.subr.bf16.mxu0 %v1519
    %2324 = vmatpush1.bf16.msra.mxu0 %v1518
    %2325 = vmatprep.subr.bf16.mxu0 %v1523
    %2326 = vmatpush1.bf16.msra.mxu0 %v1522
    %2327 = vmatprep.subr.bf16.mxu0 %v1527
    %2328 = vmatpush1.bf16.msra.mxu0 %v1526
    %2329 = vmatprep.subr.bf16.mxu0 %v1531
    %2330 = vmatpush1.bf16.msra.mxu0 %v1530
    %2331 = vmatprep.mubr.bf16.mxu0 %v205
    %2332 = vmatmul.mubr.bf16.gmra.mrb[0].mxu0 %v204
    %v2333 = vpop.f32.mrb[0].mxu0
    %v2334 = vadd.f32 %v2261, %v2333
    %v2335 = vpop.f32.mrb[0].mxu0
    %v2336 = vadd.f32 %v2263, %v2335
    %v2337 = vpop.f32.mrb[0].mxu0
    %v2338 = vadd.f32 %v2265, %v2337
    %v2339 = vpop.f32.mrb[0].mxu0
    %v2340 = vadd.f32 %v2267, %v2339
    %2341 = vmatprep.mubr.bf16.mxu0 %v213
    %2342 = vmatmul.mubr.bf16.gmra.mrb[0].mxu0 %v212
    %v2343 = vpop.f32.mrb[0].mxu0
    %v2344 = vadd.f32 %v2271, %v2343
    %v2345 = vpop.f32.mrb[0].mxu0
    %v2346 = vadd.f32 %v2273, %v2345
    %v2347 = vpop.f32.mrb[0].mxu0
    %v2348 = vadd.f32 %v2275, %v2347
    %v2349 = vpop.f32.mrb[0].mxu0
    %v2350 = vadd.f32 %v2277, %v2349
    %2351 = vmatprep.mubr.bf16.mxu0 %v221
    %2352 = vmatmul.mubr.bf16.gmra.mrb[0].mxu0 %v220
    %v2353 = vpop.f32.mrb[0].mxu0
    %v2354 = vadd.f32 %v2281, %v2353
    %v2355 = vpop.f32.mrb[0].mxu0
    %v2356 = vadd.f32 %v2283, %v2355
    %v2357 = vpop.f32.mrb[0].mxu0
    %v2358 = vadd.f32 %v2285, %v2357
    %v2359 = vpop.f32.mrb[0].mxu0
    %v2360 = vadd.f32 %v2287, %v2359
    %2361 = vmatprep.mubr.bf16.mxu0 %v229
    %2362 = vmatmul.mubr.bf16.gmra.mrb[0].mxu0 %v228
    %v2363 = vpop.f32.mrb[0].mxu0
    %v2364 = vadd.f32 %v2291, %v2363
    %v2365 = vpop.f32.mrb[0].mxu0
    %v2366 = vadd.f32 %v2293, %v2365
    %v2367 = vpop.f32.mrb[0].mxu0
    %v2368 = vadd.f32 %v2295, %v2367
    %v2369 = vpop.f32.mrb[0].mxu0
    %v2370 = vadd.f32 %v2297, %v2369
    %2371 = vdwg.mxu0
    %v2372 = vmax.f32 %v2042, 0.0
    %v2373 = vmax.f32 %v2044, 0.0
    %v2374 = vmax.f32 %v2334, 0.0
    %v2375 = vmax.f32 %v2336, 0.0
    %v2376 = vmax.f32 %v2046, 0.0
    %v2377 = vmax.f32 %v2048, 0.0
    %v2378 = vmax.f32 %v2338, 0.0
    %v2379 = vmax.f32 %v2340, 0.0
    %v2380 = vmax.f32 %v2052, 0.0
    %v2381 = vmax.f32 %v2054, 0.0
    %v2382 = vmax.f32 %v2344, 0.0
    %v2383 = vmax.f32 %v2346, 0.0
    %v2384 = vmax.f32 %v2056, 0.0
    %v2385 = vmax.f32 %v2058, 0.0
    %v2386 = vmax.f32 %v2348, 0.0
    %v2387 = vmax.f32 %v2350, 0.0
    %v2388 = vmax.f32 %v2062, 0.0
    %v2389 = vmax.f32 %v2064, 0.0
    %v2390 = vmax.f32 %v2354, 0.0
    %v2391 = vmax.f32 %v2356, 0.0
    %v2392 = vmax.f32 %v2066, 0.0
    %v2393 = vmax.f32 %v2068, 0.0
    %v2394 = vmax.f32 %v2358, 0.0
    %v2395 = vmax.f32 %v2360, 0.0
    %v2396 = vmax.f32 %v2072, 0.0
    %v2397 = vmax.f32 %v2074, 0.0
    %v2398 = vmax.f32 %v2364, 0.0
    %v2399 = vmax.f32 %v2366, 0.0
    %v2400 = vmax.f32 %v2076, 0.0
    %v2401 = vmax.f32 %v2078, 0.0
    %v2402 = vmax.f32 %v2368, 0.0
    %v2403 = vmax.f32 %v2370, 0.0
    %v2404 = vpack.c.bf16 %v2376, %v2372
    %v2405 = vpack.c.bf16 %v2377, %v2373
    %v2406 = vpack.c.bf16 %v2378, %v2374
    %v2407 = vpack.c.bf16 %v2379, %v2375
    %v2408 = vpack.c.bf16 %v2384, %v2380
    %v2409 = vpack.c.bf16 %v2385, %v2381
    %v2410 = vpack.c.bf16 %v2386, %v2382
    %v2411 = vpack.c.bf16 %v2387, %v2383
    %v2412 = vpack.c.bf16 %v2392, %v2388
    %v2413 = vpack.c.bf16 %v2393, %v2389
    %v2414 = vpack.c.bf16 %v2394, %v2390
    %v2415 = vpack.c.bf16 %v2395, %v2391
    %v2416 = vpack.c.bf16 %v2400, %v2396
    %v2417 = vpack.c.bf16 %v2401, %v2397
    %v2418 = vpack.c.bf16 %v2402, %v2398
    %v2419 = vpack.c.bf16 %v2403, %v2399
    %v2420 = vld [vmem:[#allocation9] sm:$0xff]
    %v2421 = vld [vmem:[#allocation9 + $0x8] sm:$0xff]
    %v2422 = vld [vmem:[#allocation9 + $0x10] sm:$0xff]
    %v2423 = vld [vmem:[#allocation9 + $0x18] sm:$0xff]
    %v2424 = vld [vmem:[#allocation9 + $0x20] sm:$0xff]
    %v2425 = vld [vmem:[#allocation9 + $0x28] sm:$0xff]
    %v2426 = vld [vmem:[#allocation9 + $0x30] sm:$0xff]
    %v2427 = vld [vmem:[#allocation9 + $0x38] sm:$0xff]
    %v2428 = vld [vmem:[#allocation9 + $0x40] sm:$0xff]
    %v2429 = vld [vmem:[#allocation9 + $0x48] sm:$0xff]
    %v2430 = vld [vmem:[#allocation9 + $0x50] sm:$0xff]
    %v2431 = vld [vmem:[#allocation9 + $0x58] sm:$0xff]
    %v2432 = vld [vmem:[#allocation9 + $0x60] sm:$0xff]
    %v2433 = vld [vmem:[#allocation9 + $0x68] sm:$0xff]
    %v2434 = vld [vmem:[#allocation9 + $0x70] sm:$0xff]
    %v2435 = vld [vmem:[#allocation9 + $0x78] sm:$0xff]
    %v2436 = vld [vmem:[#allocation9 + $0x80] sm:$0xff]
    %v2437 = vld [vmem:[#allocation9 + $0x88] sm:$0xff]
    %v2438 = vld [vmem:[#allocation9 + $0x90] sm:$0xff]
    %v2439 = vld [vmem:[#allocation9 + $0x98] sm:$0xff]
    %v2440 = vld [vmem:[#allocation9 + $0xa0] sm:$0xff]
    %v2441 = vld [vmem:[#allocation9 + $0xa8] sm:$0xff]
    %v2442 = vld [vmem:[#allocation9 + $0xb0] sm:$0xff]
    %v2443 = vld [vmem:[#allocation9 + $0xb8] sm:$0xff]
    %v2444 = vld [vmem:[#allocation9 + $0xc0] sm:$0xff]
    %v2445 = vld [vmem:[#allocation9 + $0xc8] sm:$0xff]
    %v2446 = vld [vmem:[#allocation9 + $0xd0] sm:$0xff]
    %v2447 = vld [vmem:[#allocation9 + $0xd8] sm:$0xff]
    %v2448 = vld [vmem:[#allocation9 + $0xe0] sm:$0xff]
    %v2449 = vld [vmem:[#allocation9 + $0xe8] sm:$0xff]
    %v2450 = vld [vmem:[#allocation9 + $0xf0] sm:$0xff]
    %v2451 = vld [vmem:[#allocation9 + $0xf8] sm:$0xff]
    %v2452 = vld [vmem:[#allocation9 + $0x100] sm:$0xff]
    %v2453 = vld [vmem:[#allocation9 + $0x108] sm:$0xff]
    %v2454 = vld [vmem:[#allocation9 + $0x110] sm:$0xff]
    %v2455 = vld [vmem:[#allocation9 + $0x118] sm:$0xff]
    %v2456 = vld [vmem:[#allocation9 + $0x120] sm:$0xff]
    %v2457 = vld [vmem:[#allocation9 + $0x128] sm:$0xff]
    %v2458 = vld [vmem:[#allocation9 + $0x130] sm:$0xff]
    %v2459 = vld [vmem:[#allocation9 + $0x138] sm:$0xff]
    %v2460 = vld [vmem:[#allocation9 + $0x140] sm:$0xff]
    %v2461 = vld [vmem:[#allocation9 + $0x148] sm:$0xff]
    %v2462 = vld [vmem:[#allocation9 + $0x150] sm:$0xff]
    %v2463 = vld [vmem:[#allocation9 + $0x158] sm:$0xff]
    %v2464 = vld [vmem:[#allocation9 + $0x160] sm:$0xff]
    %v2465 = vld [vmem:[#allocation9 + $0x168] sm:$0xff]
    %v2466 = vld [vmem:[#allocation9 + $0x170] sm:$0xff]
    %v2467 = vld [vmem:[#allocation9 + $0x178] sm:$0xff]
    %v2468 = vld [vmem:[#allocation9 + $0x180] sm:$0xff]
    %v2469 = vld [vmem:[#allocation9 + $0x188] sm:$0xff]
    %v2470 = vld [vmem:[#allocation9 + $0x190] sm:$0xff]
    %v2471 = vld [vmem:[#allocation9 + $0x198] sm:$0xff]
    %v2472 = vld [vmem:[#allocation9 + $0x1a0] sm:$0xff]
    %v2473 = vld [vmem:[#allocation9 + $0x1a8] sm:$0xff]
    %v2474 = vld [vmem:[#allocation9 + $0x1b0] sm:$0xff]
    %v2475 = vld [vmem:[#allocation9 + $0x1b8] sm:$0xff]
    %v2476 = vld [vmem:[#allocation9 + $0x1c0] sm:$0xff]
    %v2477 = vld [vmem:[#allocation9 + $0x1c8] sm:$0xff]
    %v2478 = vld [vmem:[#allocation9 + $0x1d0] sm:$0xff]
    %v2479 = vld [vmem:[#allocation9 + $0x1d8] sm:$0xff]
    %v2480 = vld [vmem:[#allocation9 + $0x1e0] sm:$0xff]
    %v2481 = vld [vmem:[#allocation9 + $0x1e8] sm:$0xff]
    %v2482 = vld [vmem:[#allocation9 + $0x1f0] sm:$0xff]
    %v2483 = vld [vmem:[#allocation9 + $0x1f8] sm:$0xff]
    %v2484 = vld [vmem:[#allocation9 + $0x200] sm:$0xff]
    %v2485 = vld [vmem:[#allocation9 + $0x208] sm:$0xff]
    %v2486 = vld [vmem:[#allocation9 + $0x210] sm:$0xff]
    %v2487 = vld [vmem:[#allocation9 + $0x218] sm:$0xff]
    %v2488 = vld [vmem:[#allocation9 + $0x220] sm:$0xff]
    %v2489 = vld [vmem:[#allocation9 + $0x228] sm:$0xff]
    %v2490 = vld [vmem:[#allocation9 + $0x230] sm:$0xff]
    %v2491 = vld [vmem:[#allocation9 + $0x238] sm:$0xff]
    %v2492 = vld [vmem:[#allocation9 + $0x240] sm:$0xff]
    %v2493 = vld [vmem:[#allocation9 + $0x248] sm:$0xff]
    %v2494 = vld [vmem:[#allocation9 + $0x250] sm:$0xff]
    %v2495 = vld [vmem:[#allocation9 + $0x258] sm:$0xff]
    %v2496 = vld [vmem:[#allocation9 + $0x260] sm:$0xff]
    %v2497 = vld [vmem:[#allocation9 + $0x268] sm:$0xff]
    %v2498 = vld [vmem:[#allocation9 + $0x270] sm:$0xff]
    %v2499 = vld [vmem:[#allocation9 + $0x278] sm:$0xff]
    %v2500 = vld [vmem:[#allocation9 + $0x280] sm:$0xff]
    %v2501 = vld [vmem:[#allocation9 + $0x288] sm:$0xff]
    %v2502 = vld [vmem:[#allocation9 + $0x290] sm:$0xff]
    %v2503 = vld [vmem:[#allocation9 + $0x298] sm:$0xff]
    %v2504 = vld [vmem:[#allocation9 + $0x2a0] sm:$0xff]
    %v2505 = vld [vmem:[#allocation9 + $0x2a8] sm:$0xff]
    %v2506 = vld [vmem:[#allocation9 + $0x2b0] sm:$0xff]
    %v2507 = vld [vmem:[#allocation9 + $0x2b8] sm:$0xff]
    %v2508 = vld [vmem:[#allocation9 + $0x2c0] sm:$0xff]
    %v2509 = vld [vmem:[#allocation9 + $0x2c8] sm:$0xff]
    %v2510 = vld [vmem:[#allocation9 + $0x2d0] sm:$0xff]
    %v2511 = vld [vmem:[#allocation9 + $0x2d8] sm:$0xff]
    %v2512 = vld [vmem:[#allocation9 + $0x2e0] sm:$0xff]
    %v2513 = vld [vmem:[#allocation9 + $0x2e8] sm:$0xff]
    %v2514 = vld [vmem:[#allocation9 + $0x2f0] sm:$0xff]
    %v2515 = vld [vmem:[#allocation9 + $0x2f8] sm:$0xff]
    %v2516 = vld [vmem:[#allocation9 + $0x300] sm:$0xff]
    %v2517 = vld [vmem:[#allocation9 + $0x308] sm:$0xff]
    %v2518 = vld [vmem:[#allocation9 + $0x310] sm:$0xff]
    %v2519 = vld [vmem:[#allocation9 + $0x318] sm:$0xff]
    %v2520 = vld [vmem:[#allocation9 + $0x320] sm:$0xff]
    %v2521 = vld [vmem:[#allocation9 + $0x328] sm:$0xff]
    %v2522 = vld [vmem:[#allocation9 + $0x330] sm:$0xff]
    %v2523 = vld [vmem:[#allocation9 + $0x338] sm:$0xff]
    %v2524 = vld [vmem:[#allocation9 + $0x340] sm:$0xff]
    %v2525 = vld [vmem:[#allocation9 + $0x348] sm:$0xff]
    %v2526 = vld [vmem:[#allocation9 + $0x350] sm:$0xff]
    %v2527 = vld [vmem:[#allocation9 + $0x358] sm:$0xff]
    %v2528 = vld [vmem:[#allocation9 + $0x360] sm:$0xff]
    %v2529 = vld [vmem:[#allocation9 + $0x368] sm:$0xff]
    %v2530 = vld [vmem:[#allocation9 + $0x370] sm:$0xff]
    %v2531 = vld [vmem:[#allocation9 + $0x378] sm:$0xff]
    %v2532 = vld [vmem:[#allocation9 + $0x380] sm:$0xff]
    %v2533 = vld [vmem:[#allocation9 + $0x388] sm:$0xff]
    %v2534 = vld [vmem:[#allocation9 + $0x390] sm:$0xff]
    %v2535 = vld [vmem:[#allocation9 + $0x398] sm:$0xff]
    %v2536 = vld [vmem:[#allocation9 + $0x3a0] sm:$0xff]
    %v2537 = vld [vmem:[#allocation9 + $0x3a8] sm:$0xff]
    %v2538 = vld [vmem:[#allocation9 + $0x3b0] sm:$0xff]
    %v2539 = vld [vmem:[#allocation9 + $0x3b8] sm:$0xff]
    %v2540 = vld [vmem:[#allocation9 + $0x3c0] sm:$0xff]
    %v2541 = vld [vmem:[#allocation9 + $0x3c8] sm:$0xff]
    %v2542 = vld [vmem:[#allocation9 + $0x3d0] sm:$0xff]
    %v2543 = vld [vmem:[#allocation9 + $0x3d8] sm:$0xff]
    %v2544 = vld [vmem:[#allocation9 + $0x3e0] sm:$0xff]
    %v2545 = vld [vmem:[#allocation9 + $0x3e8] sm:$0xff]
    %v2546 = vld [vmem:[#allocation9 + $0x3f0] sm:$0xff]
    %v2547 = vld [vmem:[#allocation9 + $0x3f8] sm:$0xff]
    %v2548 = vld [vmem:[#allocation11] sm:$0xf]
    %v2550 = vlaneseq
    %v2551 = vshrl.u32 %v2550, 7
    %v2552 = vsub.s32 0, %v2551
    %v2553 = vrot.slane %v2548, %v2552
    %v2554 = vlaneseq
    %v2555 = vshrl.u32 %v2554, 7
    %v2556 = vsub.s32 1, %v2555
    %v2557 = vrot.slane %v2548, %v2556
    %v2558 = vlaneseq
    %v2559 = vshrl.u32 %v2558, 7
    %v2560 = vsub.s32 2, %v2559
    %v2561 = vrot.slane %v2548, %v2560
    %v2562 = vlaneseq
    %v2563 = vshrl.u32 %v2562, 7
    %v2564 = vsub.s32 3, %v2563
    %v2565 = vrot.slane %v2548, %v2564
    %v2698 = vunpack.c.l.b16 %v2420
    %v2699 = vunpack.c.h.b16 %v2420
    %v2700 = vunpack.c.l.b16 %v2421
    %v2701 = vunpack.c.h.b16 %v2421
    %v2702 = vunpack.c.l.b16 %v2422
    %v2703 = vunpack.c.h.b16 %v2422
    %v2704 = vunpack.c.l.b16 %v2423
    %v2705 = vunpack.c.h.b16 %v2423
    %v2706 = vunpack.c.l.b16 %v2424
    %v2707 = vunpack.c.h.b16 %v2424
    %v2708 = vunpack.c.l.b16 %v2425
    %v2709 = vunpack.c.h.b16 %v2425
    %v2710 = vunpack.c.l.b16 %v2426
    %v2711 = vunpack.c.h.b16 %v2426
    %v2712 = vunpack.c.l.b16 %v2427
    %v2713 = vunpack.c.h.b16 %v2427
    %v2714 = vunpack.c.l.b16 %v2428
    %v2715 = vunpack.c.h.b16 %v2428
    %v2716 = vunpack.c.l.b16 %v2429
    %v2717 = vunpack.c.h.b16 %v2429
    %v2718 = vunpack.c.l.b16 %v2430
    %v2719 = vunpack.c.h.b16 %v2430
    %v2720 = vunpack.c.l.b16 %v2431
    %v2721 = vunpack.c.h.b16 %v2431
    %v2722 = vunpack.c.l.b16 %v2432
    %v2723 = vunpack.c.h.b16 %v2432
    %v2724 = vunpack.c.l.b16 %v2433
    %v2725 = vunpack.c.h.b16 %v2433
    %v2726 = vunpack.c.l.b16 %v2434
    %v2727 = vunpack.c.h.b16 %v2434
    %v2728 = vunpack.c.l.b16 %v2435
    %v2729 = vunpack.c.h.b16 %v2435
    %v2730 = vunpack.c.l.b16 %v2436
    %v2731 = vunpack.c.h.b16 %v2436
    %v2732 = vunpack.c.l.b16 %v2437
    %v2733 = vunpack.c.h.b16 %v2437
    %v2734 = vunpack.c.l.b16 %v2438
    %v2735 = vunpack.c.h.b16 %v2438
    %v2736 = vunpack.c.l.b16 %v2439
    %v2737 = vunpack.c.h.b16 %v2439
    %v2738 = vunpack.c.l.b16 %v2440
    %v2739 = vunpack.c.h.b16 %v2440
    %v2740 = vunpack.c.l.b16 %v2441
    %v2741 = vunpack.c.h.b16 %v2441
    %v2742 = vunpack.c.l.b16 %v2442
    %v2743 = vunpack.c.h.b16 %v2442
    %v2744 = vunpack.c.l.b16 %v2443
    %v2745 = vunpack.c.h.b16 %v2443
    %v2746 = vunpack.c.l.b16 %v2444
    %v2747 = vunpack.c.h.b16 %v2444
    %v2748 = vunpack.c.l.b16 %v2445
    %v2749 = vunpack.c.h.b16 %v2445
    %v2750 = vunpack.c.l.b16 %v2446
    %v2751 = vunpack.c.h.b16 %v2446
    %v2752 = vunpack.c.l.b16 %v2447
    %v2753 = vunpack.c.h.b16 %v2447
    %v2754 = vunpack.c.l.b16 %v2448
    %v2755 = vunpack.c.h.b16 %v2448
    %v2756 = vunpack.c.l.b16 %v2449
    %v2757 = vunpack.c.h.b16 %v2449
    %v2758 = vunpack.c.l.b16 %v2450
    %v2759 = vunpack.c.h.b16 %v2450
    %v2760 = vunpack.c.l.b16 %v2451
    %v2761 = vunpack.c.h.b16 %v2451
    %v2762 = vunpack.c.l.b16 %v2452
    %v2763 = vunpack.c.h.b16 %v2452
    %v2764 = vunpack.c.l.b16 %v2453
    %v2765 = vunpack.c.h.b16 %v2453
    %v2766 = vunpack.c.l.b16 %v2454
    %v2767 = vunpack.c.h.b16 %v2454
    %v2768 = vunpack.c.l.b16 %v2455
    %v2769 = vunpack.c.h.b16 %v2455
    %v2770 = vunpack.c.l.b16 %v2456
    %v2771 = vunpack.c.h.b16 %v2456
    %v2772 = vunpack.c.l.b16 %v2457
    %v2773 = vunpack.c.h.b16 %v2457
    %v2774 = vunpack.c.l.b16 %v2458
    %v2775 = vunpack.c.h.b16 %v2458
    %v2776 = vunpack.c.l.b16 %v2459
    %v2777 = vunpack.c.h.b16 %v2459
    %v2778 = vunpack.c.l.b16 %v2460
    %v2779 = vunpack.c.h.b16 %v2460
    %v2780 = vunpack.c.l.b16 %v2461
    %v2781 = vunpack.c.h.b16 %v2461
    %v2782 = vunpack.c.l.b16 %v2462
    %v2783 = vunpack.c.h.b16 %v2462
    %v2784 = vunpack.c.l.b16 %v2463
    %v2785 = vunpack.c.h.b16 %v2463
    %v2786 = vunpack.c.l.b16 %v2464
    %v2787 = vunpack.c.h.b16 %v2464
    %v2788 = vunpack.c.l.b16 %v2465
    %v2789 = vunpack.c.h.b16 %v2465
    %v2790 = vunpack.c.l.b16 %v2466
    %v2791 = vunpack.c.h.b16 %v2466
    %v2792 = vunpack.c.l.b16 %v2467
    %v2793 = vunpack.c.h.b16 %v2467
    %v2794 = vunpack.c.l.b16 %v2468
    %v2795 = vunpack.c.h.b16 %v2468
    %v2796 = vunpack.c.l.b16 %v2469
    %v2797 = vunpack.c.h.b16 %v2469
    %v2798 = vunpack.c.l.b16 %v2470
    %v2799 = vunpack.c.h.b16 %v2470
    %v2800 = vunpack.c.l.b16 %v2471
    %v2801 = vunpack.c.h.b16 %v2471
    %v2802 = vunpack.c.l.b16 %v2472
    %v2803 = vunpack.c.h.b16 %v2472
    %v2804 = vunpack.c.l.b16 %v2473
    %v2805 = vunpack.c.h.b16 %v2473
    %v2806 = vunpack.c.l.b16 %v2474
    %v2807 = vunpack.c.h.b16 %v2474
    %v2808 = vunpack.c.l.b16 %v2475
    %v2809 = vunpack.c.h.b16 %v2475
    %v2810 = vunpack.c.l.b16 %v2476
    %v2811 = vunpack.c.h.b16 %v2476
    %v2812 = vunpack.c.l.b16 %v2477
    %v2813 = vunpack.c.h.b16 %v2477
    %v2814 = vunpack.c.l.b16 %v2478
    %v2815 = vunpack.c.h.b16 %v2478
    %v2816 = vunpack.c.l.b16 %v2479
    %v2817 = vunpack.c.h.b16 %v2479
    %v2818 = vunpack.c.l.b16 %v2480
    %v2819 = vunpack.c.h.b16 %v2480
    %v2820 = vunpack.c.l.b16 %v2481
    %v2821 = vunpack.c.h.b16 %v2481
    %v2822 = vunpack.c.l.b16 %v2482
    %v2823 = vunpack.c.h.b16 %v2482
    %v2824 = vunpack.c.l.b16 %v2483
    %v2825 = vunpack.c.h.b16 %v2483
    %v2826 = vunpack.c.l.b16 %v2484
    %v2827 = vunpack.c.h.b16 %v2484
    %v2828 = vunpack.c.l.b16 %v2485
    %v2829 = vunpack.c.h.b16 %v2485
    %v2830 = vunpack.c.l.b16 %v2486
    %v2831 = vunpack.c.h.b16 %v2486
    %v2832 = vunpack.c.l.b16 %v2487
    %v2833 = vunpack.c.h.b16 %v2487
    %v2834 = vunpack.c.l.b16 %v2488
    %v2835 = vunpack.c.h.b16 %v2488
    %v2836 = vunpack.c.l.b16 %v2489
    %v2837 = vunpack.c.h.b16 %v2489
    %v2838 = vunpack.c.l.b16 %v2490
    %v2839 = vunpack.c.h.b16 %v2490
    %v2840 = vunpack.c.l.b16 %v2491
    %v2841 = vunpack.c.h.b16 %v2491
    %v2842 = vunpack.c.l.b16 %v2492
    %v2843 = vunpack.c.h.b16 %v2492
    %v2844 = vunpack.c.l.b16 %v2493
    %v2845 = vunpack.c.h.b16 %v2493
    %v2846 = vunpack.c.l.b16 %v2494
    %v2847 = vunpack.c.h.b16 %v2494
    %v2848 = vunpack.c.l.b16 %v2495
    %v2849 = vunpack.c.h.b16 %v2495
    %v2850 = vunpack.c.l.b16 %v2496
    %v2851 = vunpack.c.h.b16 %v2496
    %v2852 = vunpack.c.l.b16 %v2497
    %v2853 = vunpack.c.h.b16 %v2497
    %v2854 = vunpack.c.l.b16 %v2498
    %v2855 = vunpack.c.h.b16 %v2498
    %v2856 = vunpack.c.l.b16 %v2499
    %v2857 = vunpack.c.h.b16 %v2499
    %v2858 = vunpack.c.l.b16 %v2500
    %v2859 = vunpack.c.h.b16 %v2500
    %v2860 = vunpack.c.l.b16 %v2501
    %v2861 = vunpack.c.h.b16 %v2501
    %v2862 = vunpack.c.l.b16 %v2502
    %v2863 = vunpack.c.h.b16 %v2502
    %v2864 = vunpack.c.l.b16 %v2503
    %v2865 = vunpack.c.h.b16 %v2503
    %v2866 = vunpack.c.l.b16 %v2504
    %v2867 = vunpack.c.h.b16 %v2504
    %v2868 = vunpack.c.l.b16 %v2505
    %v2869 = vunpack.c.h.b16 %v2505
    %v2870 = vunpack.c.l.b16 %v2506
    %v2871 = vunpack.c.h.b16 %v2506
    %v2872 = vunpack.c.l.b16 %v2507
    %v2873 = vunpack.c.h.b16 %v2507
    %v2874 = vunpack.c.l.b16 %v2508
    %v2875 = vunpack.c.h.b16 %v2508
    %v2876 = vunpack.c.l.b16 %v2509
    %v2877 = vunpack.c.h.b16 %v2509
    %v2878 = vunpack.c.l.b16 %v2510
    %v2879 = vunpack.c.h.b16 %v2510
    %v2880 = vunpack.c.l.b16 %v2511
    %v2881 = vunpack.c.h.b16 %v2511
    %v2882 = vunpack.c.l.b16 %v2512
    %v2883 = vunpack.c.h.b16 %v2512
    %v2884 = vunpack.c.l.b16 %v2513
    %v2885 = vunpack.c.h.b16 %v2513
    %v2886 = vunpack.c.l.b16 %v2514
    %v2887 = vunpack.c.h.b16 %v2514
    %v2888 = vunpack.c.l.b16 %v2515
    %v2889 = vunpack.c.h.b16 %v2515
    %v2890 = vunpack.c.l.b16 %v2516
    %v2891 = vunpack.c.h.b16 %v2516
    %v2892 = vunpack.c.l.b16 %v2517
    %v2893 = vunpack.c.h.b16 %v2517
    %v2894 = vunpack.c.l.b16 %v2518
    %v2895 = vunpack.c.h.b16 %v2518
    %v2896 = vunpack.c.l.b16 %v2519
    %v2897 = vunpack.c.h.b16 %v2519
    %v2898 = vunpack.c.l.b16 %v2520
    %v2899 = vunpack.c.h.b16 %v2520
    %v2900 = vunpack.c.l.b16 %v2521
    %v2901 = vunpack.c.h.b16 %v2521
    %v2902 = vunpack.c.l.b16 %v2522
    %v2903 = vunpack.c.h.b16 %v2522
    %v2904 = vunpack.c.l.b16 %v2523
    %v2905 = vunpack.c.h.b16 %v2523
    %v2906 = vunpack.c.l.b16 %v2524
    %v2907 = vunpack.c.h.b16 %v2524
    %v2908 = vunpack.c.l.b16 %v2525
    %v2909 = vunpack.c.h.b16 %v2525
    %v2910 = vunpack.c.l.b16 %v2526
    %v2911 = vunpack.c.h.b16 %v2526
    %v2912 = vunpack.c.l.b16 %v2527
    %v2913 = vunpack.c.h.b16 %v2527
    %v2914 = vunpack.c.l.b16 %v2528
    %v2915 = vunpack.c.h.b16 %v2528
    %v2916 = vunpack.c.l.b16 %v2529
    %v2917 = vunpack.c.h.b16 %v2529
    %v2918 = vunpack.c.l.b16 %v2530
    %v2919 = vunpack.c.h.b16 %v2530
    %v2920 = vunpack.c.l.b16 %v2531
    %v2921 = vunpack.c.h.b16 %v2531
    %v2922 = vunpack.c.l.b16 %v2532
    %v2923 = vunpack.c.h.b16 %v2532
    %v2924 = vunpack.c.l.b16 %v2533
    %v2925 = vunpack.c.h.b16 %v2533
    %v2926 = vunpack.c.l.b16 %v2534
    %v2927 = vunpack.c.h.b16 %v2534
    %v2928 = vunpack.c.l.b16 %v2535
    %v2929 = vunpack.c.h.b16 %v2535
    %v2930 = vunpack.c.l.b16 %v2536
    %v2931 = vunpack.c.h.b16 %v2536
    %v2932 = vunpack.c.l.b16 %v2537
    %v2933 = vunpack.c.h.b16 %v2537
    %v2934 = vunpack.c.l.b16 %v2538
    %v2935 = vunpack.c.h.b16 %v2538
    %v2936 = vunpack.c.l.b16 %v2539
    %v2937 = vunpack.c.h.b16 %v2539
    %v2938 = vunpack.c.l.b16 %v2540
    %v2939 = vunpack.c.h.b16 %v2540
    %v2940 = vunpack.c.l.b16 %v2541
    %v2941 = vunpack.c.h.b16 %v2541
    %v2942 = vunpack.c.l.b16 %v2542
    %v2943 = vunpack.c.h.b16 %v2542
    %v2944 = vunpack.c.l.b16 %v2543
    %v2945 = vunpack.c.h.b16 %v2543
    %v2946 = vunpack.c.l.b16 %v2544
    %v2947 = vunpack.c.h.b16 %v2544
    %v2948 = vunpack.c.l.b16 %v2545
    %v2949 = vunpack.c.h.b16 %v2545
    %v2950 = vunpack.c.l.b16 %v2546
    %v2951 = vunpack.c.h.b16 %v2546
    %v2952 = vunpack.c.l.b16 %v2547
    %v2953 = vunpack.c.h.b16 %v2547
    %v2954 = vpack.c.b16 %v2702, %v2698
    %v2955 = vpack.c.b16 %v2703, %v2699
    %v2956 = vpack.c.b16 %v2704, %v2700
    %v2957 = vpack.c.b16 %v2705, %v2701
    %v2958 = vpack.c.b16 %v2710, %v2706
    %v2959 = vpack.c.b16 %v2711, %v2707
    %v2960 = vpack.c.b16 %v2712, %v2708
    %v2961 = vpack.c.b16 %v2713, %v2709
    %v2962 = vpack.c.b16 %v2718, %v2714
    %v2963 = vpack.c.b16 %v2719, %v2715
    %v2964 = vpack.c.b16 %v2720, %v2716
    %v2965 = vpack.c.b16 %v2721, %v2717
    %v2966 = vpack.c.b16 %v2726, %v2722
    %v2967 = vpack.c.b16 %v2727, %v2723
    %v2968 = vpack.c.b16 %v2728, %v2724
    %v2969 = vpack.c.b16 %v2729, %v2725
    %v2970 = vpack.c.b16 %v2734, %v2730
    %v2971 = vpack.c.b16 %v2735, %v2731
    %v2972 = vpack.c.b16 %v2736, %v2732
    %v2973 = vpack.c.b16 %v2737, %v2733
    %v2974 = vpack.c.b16 %v2742, %v2738
    %v2975 = vpack.c.b16 %v2743, %v2739
    %v2976 = vpack.c.b16 %v2744, %v2740
    %v2977 = vpack.c.b16 %v2745, %v2741
    %v2978 = vpack.c.b16 %v2750, %v2746
    %v2979 = vpack.c.b16 %v2751, %v2747
    %v2980 = vpack.c.b16 %v2752, %v2748
    %v2981 = vpack.c.b16 %v2753, %v2749
    %v2982 = vpack.c.b16 %v2758, %v2754
    %v2983 = vpack.c.b16 %v2759, %v2755
    %v2984 = vpack.c.b16 %v2760, %v2756
    %v2985 = vpack.c.b16 %v2761, %v2757
    %v2986 = vpack.c.b16 %v2766, %v2762
    %v2987 = vpack.c.b16 %v2767, %v2763
    %v2988 = vpack.c.b16 %v2768, %v2764
    %v2989 = vpack.c.b16 %v2769, %v2765
    %v2990 = vpack.c.b16 %v2774, %v2770
    %v2991 = vpack.c.b16 %v2775, %v2771
    %v2992 = vpack.c.b16 %v2776, %v2772
    %v2993 = vpack.c.b16 %v2777, %v2773
    %v2994 = vpack.c.b16 %v2782, %v2778
    %v2995 = vpack.c.b16 %v2783, %v2779
    %v2996 = vpack.c.b16 %v2784, %v2780
    %v2997 = vpack.c.b16 %v2785, %v2781
    %v2998 = vpack.c.b16 %v2790, %v2786
    %v2999 = vpack.c.b16 %v2791, %v2787
    %v3000 = vpack.c.b16 %v2792, %v2788
    %v3001 = vpack.c.b16 %v2793, %v2789
    %v3002 = vpack.c.b16 %v2798, %v2794
    %v3003 = vpack.c.b16 %v2799, %v2795
    %v3004 = vpack.c.b16 %v2800, %v2796
    %v3005 = vpack.c.b16 %v2801, %v2797
    %v3006 = vpack.c.b16 %v2806, %v2802
    %v3007 = vpack.c.b16 %v2807, %v2803
    %v3008 = vpack.c.b16 %v2808, %v2804
    %v3009 = vpack.c.b16 %v2809, %v2805
    %v3010 = vpack.c.b16 %v2814, %v2810
    %v3011 = vpack.c.b16 %v2815, %v2811
    %v3012 = vpack.c.b16 %v2816, %v2812
    %v3013 = vpack.c.b16 %v2817, %v2813
    %v3014 = vpack.c.b16 %v2822, %v2818
    %v3015 = vpack.c.b16 %v2823, %v2819
    %v3016 = vpack.c.b16 %v2824, %v2820
    %v3017 = vpack.c.b16 %v2825, %v2821
    %v3018 = vpack.c.b16 %v2830, %v2826
    %v3019 = vpack.c.b16 %v2831, %v2827
    %v3020 = vpack.c.b16 %v2832, %v2828
    %v3021 = vpack.c.b16 %v2833, %v2829
    %v3022 = vpack.c.b16 %v2838, %v2834
    %v3023 = vpack.c.b16 %v2839, %v2835
    %v3024 = vpack.c.b16 %v2840, %v2836
    %v3025 = vpack.c.b16 %v2841, %v2837
    %v3026 = vpack.c.b16 %v2846, %v2842
    %v3027 = vpack.c.b16 %v2847, %v2843
    %v3028 = vpack.c.b16 %v2848, %v2844
    %v3029 = vpack.c.b16 %v2849, %v2845
    %v3030 = vpack.c.b16 %v2854, %v2850
    %v3031 = vpack.c.b16 %v2855, %v2851
    %v3032 = vpack.c.b16 %v2856, %v2852
    %v3033 = vpack.c.b16 %v2857, %v2853
    %v3034 = vpack.c.b16 %v2862, %v2858
    %v3035 = vpack.c.b16 %v2863, %v2859
    %v3036 = vpack.c.b16 %v2864, %v2860
    %v3037 = vpack.c.b16 %v2865, %v2861
    %v3038 = vpack.c.b16 %v2870, %v2866
    %v3039 = vpack.c.b16 %v2871, %v2867
    %v3040 = vpack.c.b16 %v2872, %v2868
    %v3041 = vpack.c.b16 %v2873, %v2869
    %v3042 = vpack.c.b16 %v2878, %v2874
    %v3043 = vpack.c.b16 %v2879, %v2875
    %v3044 = vpack.c.b16 %v2880, %v2876
    %v3045 = vpack.c.b16 %v2881, %v2877
    %v3046 = vpack.c.b16 %v2886, %v2882
    %v3047 = vpack.c.b16 %v2887, %v2883
    %v3048 = vpack.c.b16 %v2888, %v2884
    %v3049 = vpack.c.b16 %v2889, %v2885
    %v3050 = vpack.c.b16 %v2894, %v2890
    %v3051 = vpack.c.b16 %v2895, %v2891
    %v3052 = vpack.c.b16 %v2896, %v2892
    %v3053 = vpack.c.b16 %v2897, %v2893
    %v3054 = vpack.c.b16 %v2902, %v2898
    %v3055 = vpack.c.b16 %v2903, %v2899
    %v3056 = vpack.c.b16 %v2904, %v2900
    %v3057 = vpack.c.b16 %v2905, %v2901
    %v3058 = vpack.c.b16 %v2910, %v2906
    %v3059 = vpack.c.b16 %v2911, %v2907
    %v3060 = vpack.c.b16 %v2912, %v2908
    %v3061 = vpack.c.b16 %v2913, %v2909
    %v3062 = vpack.c.b16 %v2918, %v2914
    %v3063 = vpack.c.b16 %v2919, %v2915
    %v3064 = vpack.c.b16 %v2920, %v2916
    %v3065 = vpack.c.b16 %v2921, %v2917
    %v3066 = vpack.c.b16 %v2926, %v2922
    %v3067 = vpack.c.b16 %v2927, %v2923
    %v3068 = vpack.c.b16 %v2928, %v2924
    %v3069 = vpack.c.b16 %v2929, %v2925
    %v3070 = vpack.c.b16 %v2934, %v2930
    %v3071 = vpack.c.b16 %v2935, %v2931
    %v3072 = vpack.c.b16 %v2936, %v2932
    %v3073 = vpack.c.b16 %v2937, %v2933
    %v3074 = vpack.c.b16 %v2942, %v2938
    %v3075 = vpack.c.b16 %v2943, %v2939
    %v3076 = vpack.c.b16 %v2944, %v2940
    %v3077 = vpack.c.b16 %v2945, %v2941
    %v3078 = vpack.c.b16 %v2950, %v2946
    %v3079 = vpack.c.b16 %v2951, %v2947
    %v3080 = vpack.c.b16 %v2952, %v2948
    %v3081 = vpack.c.b16 %v2953, %v2949
    %3210 = vmatprep.subr.bf16.mxu0 %v2955
    %3211 = vmatpush1.bf16.msra.mxu0 %v2954
    %3212 = vmatprep.subr.bf16.mxu0 %v2959
    %3213 = vmatpush1.bf16.msra.mxu0 %v2958
    %3214 = vmatprep.subr.bf16.mxu0 %v2963
    %3215 = vmatpush1.bf16.msra.mxu0 %v2962
    %3216 = vmatprep.subr.bf16.mxu0 %v2967
    %3217 = vmatpush1.bf16.msra.mxu0 %v2966
    %3218 = vmatprep.subr.bf16.mxu0 %v2971
    %3219 = vmatpush1.bf16.msra.mxu0 %v2970
    %3220 = vmatprep.subr.bf16.mxu0 %v2975
    %3221 = vmatpush1.bf16.msra.mxu0 %v2974
    %3222 = vmatprep.subr.bf16.mxu0 %v2979
    %3223 = vmatpush1.bf16.msra.mxu0 %v2978
    %3224 = vmatprep.subr.bf16.mxu0 %v2983
    %3225 = vmatpush1.bf16.msra.mxu0 %v2982
    %3226 = vmatprep.subr.bf16.mxu0 %v2987
    %3227 = vmatpush1.bf16.msra.mxu0 %v2986
    %3228 = vmatprep.subr.bf16.mxu0 %v2991
    %3229 = vmatpush1.bf16.msra.mxu0 %v2990
    %3230 = vmatprep.subr.bf16.mxu0 %v2995
    %3231 = vmatpush1.bf16.msra.mxu0 %v2994
    %3232 = vmatprep.subr.bf16.mxu0 %v2999
    %3233 = vmatpush1.bf16.msra.mxu0 %v2998
    %3234 = vmatprep.subr.bf16.mxu0 %v3003
    %3235 = vmatpush1.bf16.msra.mxu0 %v3002
    %3236 = vmatprep.subr.bf16.mxu0 %v3007
    %3237 = vmatpush1.bf16.msra.mxu0 %v3006
    %3238 = vmatprep.subr.bf16.mxu0 %v3011
    %3239 = vmatpush1.bf16.msra.mxu0 %v3010
    %3240 = vmatprep.subr.bf16.mxu0 %v3015
    %3241 = vmatpush1.bf16.msra.mxu0 %v3014
    %3242 = vmatprep.mubr.bf16.mxu0 %v2405
    %3243 = vmatmul.mubr.bf16.gmra.mrb[0].mxu0 %v2404
    %v3244 = vpop.f32.mrb[0].mxu0
    %v3245 = vadd.f32 %v2553, %v3244
    %v3246 = vpop.f32.mrb[0].mxu0
    %v3247 = vadd.f32 %v2557, %v3246
    %v3248 = vpop.f32.mrb[0].mxu0
    %v3249 = vadd.f32 %v2553, %v3248
    %v3250 = vpop.f32.mrb[0].mxu0
    %v3251 = vadd.f32 %v2557, %v3250
    %3252 = vmatprep.mubr.bf16.mxu0 %v2409
    %3253 = vmatmul.mubr.bf16.gmra.mrb[0].mxu0 %v2408
    %v3254 = vpop.f32.mrb[0].mxu0
    %v3255 = vadd.f32 %v2553, %v3254
    %v3256 = vpop.f32.mrb[0].mxu0
    %v3257 = vadd.f32 %v2557, %v3256
    %v3258 = vpop.f32.mrb[0].mxu0
    %v3259 = vadd.f32 %v2553, %v3258
    %v3260 = vpop.f32.mrb[0].mxu0
    %v3261 = vadd.f32 %v2557, %v3260
    %3262 = vmatprep.mubr.bf16.mxu0 %v2413
    %3263 = vmatmul.mubr.bf16.gmra.mrb[0].mxu0 %v2412
    %v3264 = vpop.f32.mrb[0].mxu0
    %v3265 = vadd.f32 %v2553, %v3264
    %v3266 = vpop.f32.mrb[0].mxu0
    %v3267 = vadd.f32 %v2557, %v3266
    %v3268 = vpop.f32.mrb[0].mxu0
    %v3269 = vadd.f32 %v2553, %v3268
    %v3270 = vpop.f32.mrb[0].mxu0
    %v3271 = vadd.f32 %v2557, %v3270
    %3272 = vmatprep.mubr.bf16.mxu0 %v2417
    %3273 = vmatmul.mubr.bf16.gmra.mrb[0].mxu0 %v2416
    %v3274 = vpop.f32.mrb[0].mxu0
    %v3275 = vadd.f32 %v2553, %v3274
    %v3276 = vpop.f32.mrb[0].mxu0
    %v3277 = vadd.f32 %v2557, %v3276
    %v3278 = vpop.f32.mrb[0].mxu0
    %v3279 = vadd.f32 %v2553, %v3278
    %v3280 = vpop.f32.mrb[0].mxu0
    %v3281 = vadd.f32 %v2557, %v3280
    %3282 = vdwg.mxu0
    %3283 = vmatprep.subr.bf16.mxu0 %v3019
    %3284 = vmatpush1.bf16.msra.mxu0 %v3018
    %3285 = vmatprep.subr.bf16.mxu0 %v3023
    %3286 = vmatpush1.bf16.msra.mxu0 %v3022
    %3287 = vmatprep.subr.bf16.mxu0 %v3027
    %3288 = vmatpush1.bf16.msra.mxu0 %v3026
    %3289 = vmatprep.subr.bf16.mxu0 %v3031
    %3290 = vmatpush1.bf16.msra.mxu0 %v3030
    %3291 = vmatprep.subr.bf16.mxu0 %v3035
    %3292 = vmatpush1.bf16.msra.mxu0 %v3034
    %3293 = vmatprep.subr.bf16.mxu0 %v3039
    %3294 = vmatpush1.bf16.msra.mxu0 %v3038
    %3295 = vmatprep.subr.bf16.mxu0 %v3043
    %3296 = vmatpush1.bf16.msra.mxu0 %v3042
    %3297 = vmatprep.subr.bf16.mxu0 %v3047
    %3298 = vmatpush1.bf16.msra.mxu0 %v3046
    %3299 = vmatprep.subr.bf16.mxu0 %v3051
    %3300 = vmatpush1.bf16.msra.mxu0 %v3050
    %3301 = vmatprep.subr.bf16.mxu0 %v3055
    %3302 = vmatpush1.bf16.msra.mxu0 %v3054
    %3303 = vmatprep.subr.bf16.mxu0 %v3059
    %3304 = vmatpush1.bf16.msra.mxu0 %v3058
    %3305 = vmatprep.subr.bf16.mxu0 %v3063
    %3306 = vmatpush1.bf16.msra.mxu0 %v3062
    %3307 = vmatprep.subr.bf16.mxu0 %v3067
    %3308 = vmatpush1.bf16.msra.mxu0 %v3066
    %3309 = vmatprep.subr.bf16.mxu0 %v3071
    %3310 = vmatpush1.bf16.msra.mxu0 %v3070
    %3311 = vmatprep.subr.bf16.mxu0 %v3075
    %3312 = vmatpush1.bf16.msra.mxu0 %v3074
    %3313 = vmatprep.subr.bf16.mxu0 %v3079
    %3314 = vmatpush1.bf16.msra.mxu0 %v3078
    %3315 = vmatprep.mubr.bf16.mxu0 %v2407
    %3316 = vmatmul.mubr.bf16.gmra.mrb[0].mxu0 %v2406
    %v3317 = vpop.f32.mrb[0].mxu0
    %v3318 = vadd.f32 %v3245, %v3317
    %v3319 = vpop.f32.mrb[0].mxu0
    %v3320 = vadd.f32 %v3247, %v3319
    %v3321 = vpop.f32.mrb[0].mxu0
    %v3322 = vadd.f32 %v3249, %v3321
    %v3323 = vpop.f32.mrb[0].mxu0
    %v3324 = vadd.f32 %v3251, %v3323
    %3325 = vmatprep.mubr.bf16.mxu0 %v2411
    %3326 = vmatmul.mubr.bf16.gmra.mrb[0].mxu0 %v2410
    %v3327 = vpop.f32.mrb[0].mxu0
    %v3328 = vadd.f32 %v3255, %v3327
    %v3329 = vpop.f32.mrb[0].mxu0
    %v3330 = vadd.f32 %v3257, %v3329
    %v3331 = vpop.f32.mrb[0].mxu0
    %v3332 = vadd.f32 %v3259, %v3331
    %v3333 = vpop.f32.mrb[0].mxu0
    %v3334 = vadd.f32 %v3261, %v3333
    %3335 = vmatprep.mubr.bf16.mxu0 %v2415
    %3336 = vmatmul.mubr.bf16.gmra.mrb[0].mxu0 %v2414
    %v3337 = vpop.f32.mrb[0].mxu0
    %v3338 = vadd.f32 %v3265, %v3337
    %v3339 = vpop.f32.mrb[0].mxu0
    %v3340 = vadd.f32 %v3267, %v3339
    %v3341 = vpop.f32.mrb[0].mxu0
    %v3342 = vadd.f32 %v3269, %v3341
    %v3343 = vpop.f32.mrb[0].mxu0
    %v3344 = vadd.f32 %v3271, %v3343
    %3345 = vmatprep.mubr.bf16.mxu0 %v2419
    %3346 = vmatmul.mubr.bf16.gmra.mrb[0].mxu0 %v2418
    %v3347 = vpop.f32.mrb[0].mxu0
    %v3348 = vadd.f32 %v3275, %v3347
    %v3349 = vpop.f32.mrb[0].mxu0
    %v3350 = vadd.f32 %v3277, %v3349
    %v3351 = vpop.f32.mrb[0].mxu0
    %v3352 = vadd.f32 %v3279, %v3351
    %v3353 = vpop.f32.mrb[0].mxu0
    %v3354 = vadd.f32 %v3281, %v3353
    %3355 = vdwg.mxu0
    %3356 = vmatprep.subr.bf16.mxu0 %v2957
    %3357 = vmatpush1.bf16.msra.mxu0 %v2956
    %3358 = vmatprep.subr.bf16.mxu0 %v2961
    %3359 = vmatpush1.bf16.msra.mxu0 %v2960
    %3360 = vmatprep.subr.bf16.mxu0 %v2965
    %3361 = vmatpush1.bf16.msra.mxu0 %v2964
    %3362 = vmatprep.subr.bf16.mxu0 %v2969
    %3363 = vmatpush1.bf16.msra.mxu0 %v2968
    %3364 = vmatprep.subr.bf16.mxu0 %v2973
    %3365 = vmatpush1.bf16.msra.mxu0 %v2972
    %3366 = vmatprep.subr.bf16.mxu0 %v2977
    %3367 = vmatpush1.bf16.msra.mxu0 %v2976
    %3368 = vmatprep.subr.bf16.mxu0 %v2981
    %3369 = vmatpush1.bf16.msra.mxu0 %v2980
    %3370 = vmatprep.subr.bf16.mxu0 %v2985
    %3371 = vmatpush1.bf16.msra.mxu0 %v2984
    %3372 = vmatprep.subr.bf16.mxu0 %v2989
    %3373 = vmatpush1.bf16.msra.mxu0 %v2988
    %3374 = vmatprep.subr.bf16.mxu0 %v2993
    %3375 = vmatpush1.bf16.msra.mxu0 %v2992
    %3376 = vmatprep.subr.bf16.mxu0 %v2997
    %3377 = vmatpush1.bf16.msra.mxu0 %v2996
    %3378 = vmatprep.subr.bf16.mxu0 %v3001
    %3379 = vmatpush1.bf16.msra.mxu0 %v3000
    %3380 = vmatprep.subr.bf16.mxu0 %v3005
    %3381 = vmatpush1.bf16.msra.mxu0 %v3004
    %3382 = vmatprep.subr.bf16.mxu0 %v3009
    %3383 = vmatpush1.bf16.msra.mxu0 %v3008
    %3384 = vmatprep.subr.bf16.mxu0 %v3013
    %3385 = vmatpush1.bf16.msra.mxu0 %v3012
    %3386 = vmatprep.subr.bf16.mxu0 %v3017
    %3387 = vmatpush1.bf16.msra.mxu0 %v3016
    %3388 = vmatprep.mubr.bf16.mxu0 %v2405
    %3389 = vmatmul.mubr.bf16.gmra.mrb[0].mxu0 %v2404
    %v3390 = vpop.f32.mrb[0].mxu0
    %v3391 = vadd.f32 %v2561, %v3390
    %v3392 = vpop.f32.mrb[0].mxu0
    %v3393 = vadd.f32 %v2565, %v3392
    %v3394 = vpop.f32.mrb[0].mxu0
    %v3395 = vadd.f32 %v2561, %v3394
    %v3396 = vpop.f32.mrb[0].mxu0
    %v3397 = vadd.f32 %v2565, %v3396
    %3398 = vmatprep.mubr.bf16.mxu0 %v2409
    %3399 = vmatmul.mubr.bf16.gmra.mrb[0].mxu0 %v2408
    %v3400 = vpop.f32.mrb[0].mxu0
    %v3401 = vadd.f32 %v2561, %v3400
    %v3402 = vpop.f32.mrb[0].mxu0
    %v3403 = vadd.f32 %v2565, %v3402
    %v3404 = vpop.f32.mrb[0].mxu0
    %v3405 = vadd.f32 %v2561, %v3404
    %v3406 = vpop.f32.mrb[0].mxu0
    %v3407 = vadd.f32 %v2565, %v3406
    %3408 = vmatprep.mubr.bf16.mxu0 %v2413
    %3409 = vmatmul.mubr.bf16.gmra.mrb[0].mxu0 %v2412
    %v3410 = vpop.f32.mrb[0].mxu0
    %v3411 = vadd.f32 %v2561, %v3410
    %v3412 = vpop.f32.mrb[0].mxu0
    %v3413 = vadd.f32 %v2565, %v3412
    %v3414 = vpop.f32.mrb[0].mxu0
    %v3415 = vadd.f32 %v2561, %v3414
    %v3416 = vpop.f32.mrb[0].mxu0
    %v3417 = vadd.f32 %v2565, %v3416
    %3418 = vmatprep.mubr.bf16.mxu0 %v2417
    %3419 = vmatmul.mubr.bf16.gmra.mrb[0].mxu0 %v2416
    %v3420 = vpop.f32.mrb[0].mxu0
    %v3421 = vadd.f32 %v2561, %v3420
    %v3422 = vpop.f32.mrb[0].mxu0
    %v3423 = vadd.f32 %v2565, %v3422
    %v3424 = vpop.f32.mrb[0].mxu0
    %v3425 = vadd.f32 %v2561, %v3424
    %v3426 = vpop.f32.mrb[0].mxu0
    %v3427 = vadd.f32 %v2565, %v3426
    %3428 = vdwg.mxu0
    %3429 = vmatprep.subr.bf16.mxu0 %v3021
    %3430 = vmatpush1.bf16.msra.mxu0 %v3020
    %3431 = vmatprep.subr.bf16.mxu0 %v3025
    %3432 = vmatpush1.bf16.msra.mxu0 %v3024
    %3433 = vmatprep.subr.bf16.mxu0 %v3029
    %3434 = vmatpush1.bf16.msra.mxu0 %v3028
    %3435 = vmatprep.subr.bf16.mxu0 %v3033
    %3436 = vmatpush1.bf16.msra.mxu0 %v3032
    %3437 = vmatprep.subr.bf16.mxu0 %v3037
    %3438 = vmatpush1.bf16.msra.mxu0 %v3036
    %3439 = vmatprep.subr.bf16.mxu0 %v3041
    %3440 = vmatpush1.bf16.msra.mxu0 %v3040
    %3441 = vmatprep.subr.bf16.mxu0 %v3045
    %3442 = vmatpush1.bf16.msra.mxu0 %v3044
    %3443 = vmatprep.subr.bf16.mxu0 %v3049
    %3444 = vmatpush1.bf16.msra.mxu0 %v3048
    %3445 = vmatprep.subr.bf16.mxu0 %v3053
    %3446 = vmatpush1.bf16.msra.mxu0 %v3052
    %3447 = vmatprep.subr.bf16.mxu0 %v3057
    %3448 = vmatpush1.bf16.msra.mxu0 %v3056
    %3449 = vmatprep.subr.bf16.mxu0 %v3061
    %3450 = vmatpush1.bf16.msra.mxu0 %v3060
    %3451 = vmatprep.subr.bf16.mxu0 %v3065
    %3452 = vmatpush1.bf16.msra.mxu0 %v3064
    %3453 = vmatprep.subr.bf16.mxu0 %v3069
    %3454 = vmatpush1.bf16.msra.mxu0 %v3068
    %3455 = vmatprep.subr.bf16.mxu0 %v3073
    %3456 = vmatpush1.bf16.msra.mxu0 %v3072
    %3457 = vmatprep.subr.bf16.mxu0 %v3077
    %3458 = vmatpush1.bf16.msra.mxu0 %v3076
    %3459 = vmatprep.subr.bf16.mxu0 %v3081
    %3460 = vmatpush1.bf16.msra.mxu0 %v3080
    %3461 = vmatprep.mubr.bf16.mxu0 %v2407
    %3462 = vmatmul.mubr.bf16.gmra.mrb[0].mxu0 %v2406
    %v3463 = vpop.f32.mrb[0].mxu0
    %v3464 = vadd.f32 %v3391, %v3463
    %v3465 = vpop.f32.mrb[0].mxu0
    %v3466 = vadd.f32 %v3393, %v3465
    %v3467 = vpop.f32.mrb[0].mxu0
    %v3468 = vadd.f32 %v3395, %v3467
    %v3469 = vpop.f32.mrb[0].mxu0
    %v3470 = vadd.f32 %v3397, %v3469
    %3471 = vmatprep.mubr.bf16.mxu0 %v2411
    %3472 = vmatmul.mubr.bf16.gmra.mrb[0].mxu0 %v2410
    %v3473 = vpop.f32.mrb[0].mxu0
    %v3474 = vadd.f32 %v3401, %v3473
    %v3475 = vpop.f32.mrb[0].mxu0
    %v3476 = vadd.f32 %v3403, %v3475
    %v3477 = vpop.f32.mrb[0].mxu0
    %v3478 = vadd.f32 %v3405, %v3477
    %v3479 = vpop.f32.mrb[0].mxu0
    %v3480 = vadd.f32 %v3407, %v3479
    %3481 = vmatprep.mubr.bf16.mxu0 %v2415
    %3482 = vmatmul.mubr.bf16.gmra.mrb[0].mxu0 %v2414
    %v3483 = vpop.f32.mrb[0].mxu0
    %v3484 = vadd.f32 %v3411, %v3483
    %v3485 = vpop.f32.mrb[0].mxu0
    %v3486 = vadd.f32 %v3413, %v3485
    %v3487 = vpop.f32.mrb[0].mxu0
    %v3488 = vadd.f32 %v3415, %v3487
    %v3489 = vpop.f32.mrb[0].mxu0
    %v3490 = vadd.f32 %v3417, %v3489
    %3491 = vmatprep.mubr.bf16.mxu0 %v2419
    %3492 = vmatmul.mubr.bf16.gmra.mrb[0].mxu0 %v2418
    %v3493 = vpop.f32.mrb[0].mxu0
    %v3494 = vadd.f32 %v3421, %v3493
    %v3495 = vpop.f32.mrb[0].mxu0
    %v3496 = vadd.f32 %v3423, %v3495
    %v3497 = vpop.f32.mrb[0].mxu0
    %v3498 = vadd.f32 %v3425, %v3497
    %v3499 = vpop.f32.mrb[0].mxu0
    %v3500 = vadd.f32 %v3427, %v3499
    %3501 = vdwg.mxu0
    %v3502 = vtanh.pop %v3318
    %v3503 = vtanh.pop %v3320
    %v3504 = vtanh.pop %v3322
    %v3505 = vtanh.pop %v3324
    %v3506 = vtanh.pop %v3328
    %v3507 = vtanh.pop %v3330
    %v3508 = vtanh.pop %v3332
    %v3509 = vtanh.pop %v3334
    %v3510 = vtanh.pop %v3338
    %v3511 = vtanh.pop %v3340
    %v3512 = vtanh.pop %v3342
    %v3513 = vtanh.pop %v3344
    %v3514 = vtanh.pop %v3348
    %v3515 = vtanh.pop %v3350
    %v3516 = vtanh.pop %v3352
    %v3517 = vtanh.pop %v3354
    %v3518 = vxor.u32 %v3464, 2147483648
    %v3519 = vxor.u32 %v3466, 2147483648
    %v3520 = vxor.u32 %v3468, 2147483648
    %v3521 = vxor.u32 %v3470, 2147483648
    %v3522 = vxor.u32 %v3474, 2147483648
    %v3523 = vxor.u32 %v3476, 2147483648
    %v3524 = vxor.u32 %v3478, 2147483648
    %v3525 = vxor.u32 %v3480, 2147483648
    %v3526 = vxor.u32 %v3484, 2147483648
    %v3527 = vxor.u32 %v3486, 2147483648
    %v3528 = vxor.u32 %v3488, 2147483648
    %v3529 = vxor.u32 %v3490, 2147483648
    %v3530 = vxor.u32 %v3494, 2147483648
    %v3531 = vxor.u32 %v3496, 2147483648
    %v3532 = vxor.u32 %v3498, 2147483648
    %v3533 = vxor.u32 %v3500, 2147483648
    %v3534 = vmul.f32 %v3518, 1.442695
    %v3535 = vpow.pop %v3534
    %v3536 = vmul.f32 %v3519, 1.442695
    %v3537 = vpow.pop %v3536
    %v3538 = vmul.f32 %v3520, 1.442695
    %v3539 = vpow.pop %v3538
    %v3540 = vmul.f32 %v3521, 1.442695
    %v3541 = vpow.pop %v3540
    %v3542 = vmul.f32 %v3522, 1.442695
    %v3543 = vpow.pop %v3542
    %v3544 = vmul.f32 %v3523, 1.442695
    %v3545 = vpow.pop %v3544
    %v3546 = vmul.f32 %v3524, 1.442695
    %v3547 = vpow.pop %v3546
    %v3548 = vmul.f32 %v3525, 1.442695
    %v3549 = vpow.pop %v3548
    %v3550 = vmul.f32 %v3526, 1.442695
    %v3551 = vpow.pop %v3550
    %v3552 = vmul.f32 %v3527, 1.442695
    %v3553 = vpow.pop %v3552
    %v3554 = vmul.f32 %v3528, 1.442695
    %v3555 = vpow.pop %v3554
    %v3556 = vmul.f32 %v3529, 1.442695
    %v3557 = vpow.pop %v3556
    %v3558 = vmul.f32 %v3530, 1.442695
    %v3559 = vpow.pop %v3558
    %v3560 = vmul.f32 %v3531, 1.442695
    %v3561 = vpow.pop %v3560
    %v3562 = vmul.f32 %v3532, 1.442695
    %v3563 = vpow.pop %v3562
    %v3564 = vmul.f32 %v3533, 1.442695
    %v3565 = vpow.pop %v3564
    %v3566 = vadd.f32 %v3535, 1.0
    %v3567 = vadd.f32 %v3537, 1.0
    %v3568 = vadd.f32 %v3539, 1.0
    %v3569 = vadd.f32 %v3541, 1.0
    %v3570 = vadd.f32 %v3543, 1.0
    %v3571 = vadd.f32 %v3545, 1.0
    %v3572 = vadd.f32 %v3547, 1.0
    %v3573 = vadd.f32 %v3549, 1.0
    %v3574 = vadd.f32 %v3551, 1.0
    %v3575 = vadd.f32 %v3553, 1.0
    %v3576 = vadd.f32 %v3555, 1.0
    %v3577 = vadd.f32 %v3557, 1.0
    %v3578 = vadd.f32 %v3559, 1.0
    %v3579 = vadd.f32 %v3561, 1.0
    %v3580 = vadd.f32 %v3563, 1.0
    %v3581 = vadd.f32 %v3565, 1.0
    %v3582 = vrcp.pop %v3566
    %v3583 = vmul.f32 1.0, %v3582
    %v3584 = vrcp.pop %v3567
    %v3585 = vmul.f32 1.0, %v3584
    %v3586 = vrcp.pop %v3568
    %v3587 = vmul.f32 1.0, %v3586
    %v3588 = vrcp.pop %v3569
    %v3589 = vmul.f32 1.0, %v3588
    %v3590 = vrcp.pop %v3570
    %v3591 = vmul.f32 1.0, %v3590
    %v3592 = vrcp.pop %v3571
    %v3593 = vmul.f32 1.0, %v3592
    %v3594 = vrcp.pop %v3572
    %v3595 = vmul.f32 1.0, %v3594
    %v3596 = vrcp.pop %v3573
    %v3597 = vmul.f32 1.0, %v3596
    %v3598 = vrcp.pop %v3574
    %v3599 = vmul.f32 1.0, %v3598
    %v3600 = vrcp.pop %v3575
    %v3601 = vmul.f32 1.0, %v3600
    %v3602 = vrcp.pop %v3576
    %v3603 = vmul.f32 1.0, %v3602
    %v3604 = vrcp.pop %v3577
    %v3605 = vmul.f32 1.0, %v3604
    %v3606 = vrcp.pop %v3578
    %v3607 = vmul.f32 1.0, %v3606
    %v3608 = vrcp.pop %v3579
    %v3609 = vmul.f32 1.0, %v3608
    %v3610 = vrcp.pop %v3580
    %v3611 = vmul.f32 1.0, %v3610
    %v3612 = vrcp.pop %v3581
    %v3613 = vmul.f32 1.0, %v3612
    %v3614 = vmul.f32 %v3502, %v3583
    %v3615 = vmul.f32 %v3503, %v3585
    %v3616 = vmul.f32 %v3504, %v3587
    %v3617 = vmul.f32 %v3505, %v3589
    %v3618 = vmul.f32 %v3506, %v3591
    %v3619 = vmul.f32 %v3507, %v3593
    %v3620 = vmul.f32 %v3508, %v3595
    %v3621 = vmul.f32 %v3509, %v3597
    %v3622 = vmul.f32 %v3510, %v3599
    %v3623 = vmul.f32 %v3511, %v3601
    %v3624 = vmul.f32 %v3512, %v3603
    %v3625 = vmul.f32 %v3513, %v3605
    %v3626 = vmul.f32 %v3514, %v3607
    %v3627 = vmul.f32 %v3515, %v3609
    %v3628 = vmul.f32 %v3516, %v3611
    %v3629 = vmul.f32 %v3517, %v3613
    %v3630 = vld [vmem:[#allocation12] sm:$0x3]
    %v3632 = vlaneseq
    %v3633 = vshrl.u32 %v3632, 7
    %v3634 = vsub.s32 0, %v3633
    %v3635 = vrot.slane %v3630, %v3634
    %v3636 = vlaneseq
    %v3637 = vshrl.u32 %v3636, 7
    %v3638 = vsub.s32 1, %v3637
    %v3639 = vrot.slane %v3630, %v3638
    %v3642 = vmul.f32 %v3614, %v3635
    %v3643 = vmul.f32 %v3615, %v3639
    %v3644 = vmul.f32 %v3616, %v3635
    %v3645 = vmul.f32 %v3617, %v3639
    %v3646 = vmul.f32 %v3618, %v3635
    %v3647 = vmul.f32 %v3619, %v3639
    %v3648 = vmul.f32 %v3620, %v3635
    %v3649 = vmul.f32 %v3621, %v3639
    %v3650 = vmul.f32 %v3622, %v3635
    %v3651 = vmul.f32 %v3623, %v3639
    %v3652 = vmul.f32 %v3624, %v3635
    %v3653 = vmul.f32 %v3625, %v3639
    %v3654 = vmul.f32 %v3626, %v3635
    %v3655 = vmul.f32 %v3627, %v3639
    %v3656 = vmul.f32 %v3628, %v3635
    %v3657 = vmul.f32 %v3629, %v3639
    %v3658 = vadd.f32 %v3642, %v3643
    %3659 = vadd.xlane.f32.xlu0 %v3658
    %v3660 = vpop.xlane.xlu0 %3659
    %v3661 = vadd.f32 %v3644, %v3645
    %3662 = vadd.xlane.f32.xlu0 %v3661
    %v3663 = vpop.xlane.xlu0 %3662
    %v3664 = vadd.f32 %v3646, %v3647
    %3665 = vadd.xlane.f32.xlu0 %v3664
    %v3666 = vpop.xlane.xlu0 %3665
    %v3667 = vadd.f32 %v3648, %v3649
    %3668 = vadd.xlane.f32.xlu0 %v3667
    %v3669 = vpop.xlane.xlu0 %3668
    %v3670 = vadd.f32 %v3650, %v3651
    %3671 = vadd.xlane.f32.xlu0 %v3670
    %v3672 = vpop.xlane.xlu0 %3671
    %v3673 = vadd.f32 %v3652, %v3653
    %3674 = vadd.xlane.f32.xlu0 %v3673
    %v3675 = vpop.xlane.xlu0 %3674
    %v3676 = vadd.f32 %v3654, %v3655
    %3677 = vadd.xlane.f32.xlu0 %v3676
    %v3678 = vpop.xlane.xlu0 %3677
    %v3679 = vadd.f32 %v3656, %v3657
    %3680 = vadd.xlane.f32.xlu0 %v3679
    %v3681 = vpop.xlane.xlu0 %3680
    %v3682 = vld [vmem:[#allocation2] sm:$0x1]
    %v3684 = vlaneseq
    %v3685 = vshrl.u32 %v3684, 7
    %v3686 = vsub.s32 0, %v3685
    %v3687 = vrot.slane %v3682, %v3686
    %v3689 = vadd.f32 %v3660, %v3687
    %v3690 = vadd.f32 %v3663, %v3687
    %v3691 = vadd.f32 %v3666, %v3687
    %v3692 = vadd.f32 %v3669, %v3687
    %v3693 = vadd.f32 %v3672, %v3687
    %v3694 = vadd.f32 %v3675, %v3687
    %v3695 = vadd.f32 %v3678, %v3687
    %v3696 = vadd.f32 %v3681, %v3687
    %v3697 = vld [vmem:[#allocation14] sm:$0xff]
    %v3699 = vlaneseq
    %v3700 = vshrl.u32 %v3699, 7
    %v3701 = vsub.s32 0, %v3700
    %v3702 = vrot.slane %v3697, %v3701
    %v3703 = vlaneseq
    %v3704 = vshrl.u32 %v3703, 7
    %v3705 = vsub.s32 2, %v3704
    %v3706 = vrot.slane %v3697, %v3705
    %v3707 = vlaneseq
    %v3708 = vshrl.u32 %v3707, 7
    %v3709 = vsub.s32 4, %v3708
    %v3710 = vrot.slane %v3697, %v3709
    %v3711 = vlaneseq
    %v3712 = vshrl.u32 %v3711, 7
    %v3713 = vsub.s32 6, %v3712
    %v3714 = vrot.slane %v3697, %v3713
    %v3719 = vlaneseq
    %v3720 = vshrl.u32 %v3719, 7
    %v3721 = vsub.s32 0, %v3720
    %v3722 = vrot.slane %v3702, %v3721
    %v3723 = vlaneseq
    %v3724 = vshrl.u32 %v3723, 7
    %v3725 = vsub.s32 0, %v3724
    %v3726 = vrot.slane %v3706, %v3725
    %v3727 = vlaneseq
    %v3728 = vshrl.u32 %v3727, 7
    %v3729 = vsub.s32 0, %v3728
    %v3730 = vrot.slane %v3710, %v3729
    %v3731 = vlaneseq
    %v3732 = vshrl.u32 %v3731, 7
    %v3733 = vsub.s32 0, %v3732
    %v3734 = vrot.slane %v3714, %v3733
    %v3735 = vmul.f32 %v2372, %v3722
    %v3736 = vmul.f32 %v2373, %v3726
    %v3737 = vmul.f32 %v2374, %v3730
    %v3738 = vmul.f32 %v2375, %v3734
    %v3739 = vmul.f32 %v2376, %v3722
    %v3740 = vmul.f32 %v2377, %v3726
    %v3741 = vmul.f32 %v2378, %v3730
    %v3742 = vmul.f32 %v2379, %v3734
    %v3743 = vmul.f32 %v2380, %v3722
    %v3744 = vmul.f32 %v2381, %v3726
    %v3745 = vmul.f32 %v2382, %v3730
    %v3746 = vmul.f32 %v2383, %v3734
    %v3747 = vmul.f32 %v2384, %v3722
    %v3748 = vmul.f32 %v2385, %v3726
    %v3749 = vmul.f32 %v2386, %v3730
    %v3750 = vmul.f32 %v2387, %v3734
    %v3751 = vmul.f32 %v2388, %v3722
    %v3752 = vmul.f32 %v2389, %v3726
    %v3753 = vmul.f32 %v2390, %v3730
    %v3754 = vmul.f32 %v2391, %v3734
    %v3755 = vmul.f32 %v2392, %v3722
    %v3756 = vmul.f32 %v2393, %v3726
    %v3757 = vmul.f32 %v2394, %v3730
    %v3758 = vmul.f32 %v2395, %v3734
    %v3759 = vmul.f32 %v2396, %v3722
    %v3760 = vmul.f32 %v2397, %v3726
    %v3761 = vmul.f32 %v2398, %v3730
    %v3762 = vmul.f32 %v2399, %v3734
    %v3763 = vmul.f32 %v2400, %v3722
    %v3764 = vmul.f32 %v2401, %v3726
    %v3765 = vmul.f32 %v2402, %v3730
    %v3766 = vmul.f32 %v2403, %v3734
    %v3767 = vadd.f32 %v3735, %v3736
    %v3768 = vadd.f32 %v3767, %v3737
    %v3769 = vadd.f32 %v3768, %v3738
    %3770 = vadd.xlane.f32.xlu0 %v3769
    %v3771 = vpop.xlane.xlu0 %3770
    %v3772 = vadd.f32 %v3739, %v3740
    %v3773 = vadd.f32 %v3772, %v3741
    %v3774 = vadd.f32 %v3773, %v3742
    %3775 = vadd.xlane.f32.xlu0 %v3774
    %v3776 = vpop.xlane.xlu0 %3775
    %v3777 = vadd.f32 %v3743, %v3744
    %v3778 = vadd.f32 %v3777, %v3745
    %v3779 = vadd.f32 %v3778, %v3746
    %3780 = vadd.xlane.f32.xlu0 %v3779
    %v3781 = vpop.xlane.xlu0 %3780
    %v3782 = vadd.f32 %v3747, %v3748
    %v3783 = vadd.f32 %v3782, %v3749
    %v3784 = vadd.f32 %v3783, %v3750
    %3785 = vadd.xlane.f32.xlu0 %v3784
    %v3786 = vpop.xlane.xlu0 %3785
    %v3787 = vadd.f32 %v3751, %v3752
    %v3788 = vadd.f32 %v3787, %v3753
    %v3789 = vadd.f32 %v3788, %v3754
    %3790 = vadd.xlane.f32.xlu0 %v3789
    %v3791 = vpop.xlane.xlu0 %3790
    %v3792 = vadd.f32 %v3755, %v3756
    %v3793 = vadd.f32 %v3792, %v3757
    %v3794 = vadd.f32 %v3793, %v3758
    %3795 = vadd.xlane.f32.xlu0 %v3794
    %v3796 = vpop.xlane.xlu0 %3795
    %v3797 = vadd.f32 %v3759, %v3760
    %v3798 = vadd.f32 %v3797, %v3761
    %v3799 = vadd.f32 %v3798, %v3762
    %3800 = vadd.xlane.f32.xlu0 %v3799
    %v3801 = vpop.xlane.xlu0 %3800
    %v3802 = vadd.f32 %v3763, %v3764
    %v3803 = vadd.f32 %v3802, %v3765
    %v3804 = vadd.f32 %v3803, %v3766
    %3805 = vadd.xlane.f32.xlu0 %v3804
    %v3806 = vpop.xlane.xlu0 %3805
    %v3807 = vld [vmem:[#allocation15] sm:$0x1]
    %v3809 = vlaneseq
    %v3810 = vshrl.u32 %v3809, 7
    %v3811 = vsub.s32 0, %v3810
    %v3812 = vrot.slane %v3807, %v3811
    %v3814 = vadd.f32 %v3771, %v3812
    %v3815 = vadd.f32 %v3776, %v3812
    %v3816 = vadd.f32 %v3781, %v3812
    %v3817 = vadd.f32 %v3786, %v3812
    %v3818 = vadd.f32 %v3791, %v3812
    %v3819 = vadd.f32 %v3796, %v3812
    %v3820 = vadd.f32 %v3801, %v3812
    %v3821 = vadd.f32 %v3806, %v3812
    %v3822 = vlaneseq
    %v3823 = vshrl.u32 %v3822, 7
    %v3824 = vsub.s32 1, %v3823
    %v3825 = vrot.slane %v3697, %v3824
    %v3826 = vlaneseq
    %v3827 = vshrl.u32 %v3826, 7
    %v3828 = vsub.s32 3, %v3827
    %v3829 = vrot.slane %v3697, %v3828
    %v3830 = vlaneseq
    %v3831 = vshrl.u32 %v3830, 7
    %v3832 = vsub.s32 5, %v3831
    %v3833 = vrot.slane %v3697, %v3832
    %v3834 = vlaneseq
    %v3835 = vshrl.u32 %v3834, 7
    %v3836 = vsub.s32 7, %v3835
    %v3837 = vrot.slane %v3697, %v3836
    %v3842 = vlaneseq
    %v3843 = vshrl.u32 %v3842, 7
    %v3844 = vsub.s32 1, %v3843
    %v3845 = vrot.slane %v3825, %v3844
    %v3846 = vlaneseq
    %v3847 = vshrl.u32 %v3846, 7
    %v3848 = vsub.s32 1, %v3847
    %v3849 = vrot.slane %v3829, %v3848
    %v3850 = vlaneseq
    %v3851 = vshrl.u32 %v3850, 7
    %v3852 = vsub.s32 1, %v3851
    %v3853 = vrot.slane %v3833, %v3852
    %v3854 = vlaneseq
    %v3855 = vshrl.u32 %v3854, 7
    %v3856 = vsub.s32 1, %v3855
    %v3857 = vrot.slane %v3837, %v3856
    %v3858 = vmul.f32 %v2372, %v3845
    %v3859 = vmul.f32 %v2373, %v3849
    %v3860 = vmul.f32 %v2374, %v3853
    %v3861 = vmul.f32 %v2375, %v3857
    %v3862 = vmul.f32 %v2376, %v3845
    %v3863 = vmul.f32 %v2377, %v3849
    %v3864 = vmul.f32 %v2378, %v3853
    %v3865 = vmul.f32 %v2379, %v3857
    %v3866 = vmul.f32 %v2380, %v3845
    %v3867 = vmul.f32 %v2381, %v3849
    %v3868 = vmul.f32 %v2382, %v3853
    %v3869 = vmul.f32 %v2383, %v3857
    %v3870 = vmul.f32 %v2384, %v3845
    %v3871 = vmul.f32 %v2385, %v3849
    %v3872 = vmul.f32 %v2386, %v3853
    %v3873 = vmul.f32 %v2387, %v3857
    %v3874 = vmul.f32 %v2388, %v3845
    %v3875 = vmul.f32 %v2389, %v3849
    %v3876 = vmul.f32 %v2390, %v3853
    %v3877 = vmul.f32 %v2391, %v3857
    %v3878 = vmul.f32 %v2392, %v3845
    %v3879 = vmul.f32 %v2393, %v3849
    %v3880 = vmul.f32 %v2394, %v3853
    %v3881 = vmul.f32 %v2395, %v3857
    %v3882 = vmul.f32 %v2396, %v3845
    %v3883 = vmul.f32 %v2397, %v3849
    %v3884 = vmul.f32 %v2398, %v3853
    %v3885 = vmul.f32 %v2399, %v3857
    %v3886 = vmul.f32 %v2400, %v3845
    %v3887 = vmul.f32 %v2401, %v3849
    %v3888 = vmul.f32 %v2402, %v3853
    %v3889 = vmul.f32 %v2403, %v3857
    %v3890 = vadd.f32 %v3858, %v3859
    %v3891 = vadd.f32 %v3890, %v3860
    %v3892 = vadd.f32 %v3891, %v3861
    %3893 = vadd.xlane.f32.xlu0 %v3892
    %v3894 = vpop.xlane.xlu0 %3893
    %v3895 = vadd.f32 %v3862, %v3863
    %v3896 = vadd.f32 %v3895, %v3864
    %v3897 = vadd.f32 %v3896, %v3865
    %3898 = vadd.xlane.f32.xlu0 %v3897
    %v3899 = vpop.xlane.xlu0 %3898
    %v3900 = vadd.f32 %v3866, %v3867
    %v3901 = vadd.f32 %v3900, %v3868
    %v3902 = vadd.f32 %v3901, %v3869
    %3903 = vadd.xlane.f32.xlu0 %v3902
    %v3904 = vpop.xlane.xlu0 %3903
    %v3905 = vadd.f32 %v3870, %v3871
    %v3906 = vadd.f32 %v3905, %v3872
    %v3907 = vadd.f32 %v3906, %v3873
    %3908 = vadd.xlane.f32.xlu0 %v3907
    %v3909 = vpop.xlane.xlu0 %3908
    %v3910 = vadd.f32 %v3874, %v3875
    %v3911 = vadd.f32 %v3910, %v3876
    %v3912 = vadd.f32 %v3911, %v3877
    %3913 = vadd.xlane.f32.xlu0 %v3912
    %v3914 = vpop.xlane.xlu0 %3913
    %v3915 = vadd.f32 %v3878, %v3879
    %v3916 = vadd.f32 %v3915, %v3880
    %v3917 = vadd.f32 %v3916, %v3881
    %3918 = vadd.xlane.f32.xlu0 %v3917
    %v3919 = vpop.xlane.xlu0 %3918
    %v3920 = vadd.f32 %v3882, %v3883
    %v3921 = vadd.f32 %v3920, %v3884
    %v3922 = vadd.f32 %v3921, %v3885
    %3923 = vadd.xlane.f32.xlu0 %v3922
    %v3924 = vpop.xlane.xlu0 %3923
    %v3925 = vadd.f32 %v3886, %v3887
    %v3926 = vadd.f32 %v3925, %v3888
    %v3927 = vadd.f32 %v3926, %v3889
    %3928 = vadd.xlane.f32.xlu0 %v3927
    %v3929 = vpop.xlane.xlu0 %3928
    %v3930 = vadd.f32 %v3894, %v3812
    %v3931 = vadd.f32 %v3899, %v3812
    %v3932 = vadd.f32 %v3904, %v3812
    %v3933 = vadd.f32 %v3909, %v3812
    %v3934 = vadd.f32 %v3914, %v3812
    %v3935 = vadd.f32 %v3919, %v3812
    %v3936 = vadd.f32 %v3924, %v3812
    %v3937 = vadd.f32 %v3929, %v3812
    %v3938 = vlaneseq
    %v3939 = vand.u32 %v3938, 127
    %vm3940 = vcmp.eq.s32.totalorder %v3939, 0
    %vm3941 = vcmp.eq.s32.totalorder %v3939, 1
    %vm3942 = vcmp.eq.s32.totalorder %v3939, 2
    %3944 = vset.pattern.permute.xlu0 1
    %3945 = vperm.xlu0 %3944, %v3930
    %v3946 = vpop.permute.xlu0 %3945
    %3949 = vset.pattern.permute.xlu0 1
    %3950 = vperm.xlu0 %3949, %v3931
    %v3951 = vpop.permute.xlu0 %3950
    %3954 = vset.pattern.permute.xlu0 1
    %3955 = vperm.xlu0 %3954, %v3932
    %v3956 = vpop.permute.xlu0 %3955
    %3959 = vset.pattern.permute.xlu0 1
    %3960 = vperm.xlu0 %3959, %v3933
    %v3961 = vpop.permute.xlu0 %3960
    %3964 = vset.pattern.permute.xlu0 1
    %3965 = vperm.xlu0 %3964, %v3934
    %v3966 = vpop.permute.xlu0 %3965
    %3969 = vset.pattern.permute.xlu0 1
    %3970 = vperm.xlu0 %3969, %v3935
    %v3971 = vpop.permute.xlu0 %3970
    %3974 = vset.pattern.permute.xlu0 1
    %3975 = vperm.xlu0 %3974, %v3936
    %v3976 = vpop.permute.xlu0 %3975
    %3979 = vset.pattern.permute.xlu0 1
    %3980 = vperm.xlu0 %3979, %v3937
    %v3981 = vpop.permute.xlu0 %3980
    %v3983 = vsel %vm3942, %v3946, 0.0
    %v3984 = vsel %vm3942, %v3951, 0.0
    %v3985 = vsel %vm3942, %v3956, 0.0
    %v3986 = vsel %vm3942, %v3961, 0.0
    %v3987 = vsel %vm3942, %v3966, 0.0
    %v3988 = vsel %vm3942, %v3971, 0.0
    %v3989 = vsel %vm3942, %v3976, 0.0
    %v3990 = vsel %vm3942, %v3981, 0.0
    %3992 = vset.pattern.permute.xlu0 0
    %3993 = vperm.xlu0 %3992, %v3814
    %v3994 = vpop.permute.xlu0 %3993
    %3997 = vset.pattern.permute.xlu0 0
    %3998 = vperm.xlu0 %3997, %v3815
    %v3999 = vpop.permute.xlu0 %3998
    %4002 = vset.pattern.permute.xlu0 0
    %4003 = vperm.xlu0 %4002, %v3816
    %v4004 = vpop.permute.xlu0 %4003
    %4007 = vset.pattern.permute.xlu0 0
    %4008 = vperm.xlu0 %4007, %v3817
    %v4009 = vpop.permute.xlu0 %4008
    %4012 = vset.pattern.permute.xlu0 0
    %4013 = vperm.xlu0 %4012, %v3818
    %v4014 = vpop.permute.xlu0 %4013
    %4017 = vset.pattern.permute.xlu0 0
    %4018 = vperm.xlu0 %4017, %v3819
    %v4019 = vpop.permute.xlu0 %4018
    %4022 = vset.pattern.permute.xlu0 0
    %4023 = vperm.xlu0 %4022, %v3820
    %v4024 = vpop.permute.xlu0 %4023
    %4027 = vset.pattern.permute.xlu0 0
    %4028 = vperm.xlu0 %4027, %v3821
    %v4029 = vpop.permute.xlu0 %4028
    %v4031 = vsel %vm3941, %v3994, %v3983
    %v4032 = vsel %vm3941, %v3999, %v3984
    %v4033 = vsel %vm3941, %v4004, %v3985
    %v4034 = vsel %vm3941, %v4009, %v3986
    %v4035 = vsel %vm3941, %v4014, %v3987
    %v4036 = vsel %vm3941, %v4019, %v3988
    %v4037 = vsel %vm3941, %v4024, %v3989
    %v4038 = vsel %vm3941, %v4029, %v3990
    %4040 = vset.pattern.permute.xlu0 0
    %4041 = vperm.xlu0 %4040, %v3689
    %v4042 = vpop.permute.xlu0 %4041
    %4045 = vset.pattern.permute.xlu0 0
    %4046 = vperm.xlu0 %4045, %v3690
    %v4047 = vpop.permute.xlu0 %4046
    %4050 = vset.pattern.permute.xlu0 0
    %4051 = vperm.xlu0 %4050, %v3691
    %v4052 = vpop.permute.xlu0 %4051
    %4055 = vset.pattern.permute.xlu0 0
    %4056 = vperm.xlu0 %4055, %v3692
    %v4057 = vpop.permute.xlu0 %4056
    %4060 = vset.pattern.permute.xlu0 0
    %4061 = vperm.xlu0 %4060, %v3693
    %v4062 = vpop.permute.xlu0 %4061
    %4065 = vset.pattern.permute.xlu0 0
    %4066 = vperm.xlu0 %4065, %v3694
    %v4067 = vpop.permute.xlu0 %4066
    %4070 = vset.pattern.permute.xlu0 0
    %4071 = vperm.xlu0 %4070, %v3695
    %v4072 = vpop.permute.xlu0 %4071
    %4075 = vset.pattern.permute.xlu0 0
    %4076 = vperm.xlu0 %4075, %v3696
    %v4077 = vpop.permute.xlu0 %4076
    %v4079 = vsel %vm3940, %v4042, %v4031
    %v4080 = vsel %vm3940, %v4047, %v4032
    %v4081 = vsel %vm3940, %v4052, %v4033
    %v4082 = vsel %vm3940, %v4057, %v4034
    %v4083 = vsel %vm3940, %v4062, %v4035
    %v4084 = vsel %vm3940, %v4067, %v4036
    %v4085 = vsel %vm3940, %v4072, %v4037
    %v4086 = vsel %vm3940, %v4077, %v4038
    %4087 = vst [vmem:[#allocation17] sm:$0xff] %v4079
    %4088 = vst [vmem:[#allocation17 + $0x8] sm:$0xff] %v4080
    %4089 = vst [vmem:[#allocation17 + $0x10] sm:$0xff] %v4081
    %4090 = vst [vmem:[#allocation17 + $0x18] sm:$0xff] %v4082
    %4091 = vst [vmem:[#allocation17 + $0x20] sm:$0xff] %v4083
    %4092 = vst [vmem:[#allocation17 + $0x28] sm:$0xff] %v4084
    %4093 = vst [vmem:[#allocation17 + $0x30] sm:$0xff] %v4085
    %4094 = vst [vmem:[#allocation17 + $0x38] sm:$0xff] %v4086
    // Predicated region
    $region70: #{clam_core.1} parent=1 // pred_check
      _
    $region71: #{clam_core.1} parent=1 // pred_check_branch
      %4096 = sbr.rel (0) target = $region73
    $region72: #{clam_core.1} parent=1 // pred_region
      %s4098 = ssub.s32 1024, 1024
      %4099 = vsyncadd [#allocation5], %s4098
      %s4100 = sshll.u32 [#allocation17], 4
      %s4101 = int_to_ptr.vmem [resolvable:$true] %s4100
      %4106 = dma.vmem_to_hbm [thread:$0]  %s4101, 1024, %s9, [#allocation5], 128, 128, 8
    $region73: #{clam_core.1} parent=1 // pred_fallthru
      _
    // Predicated region
    $region74: #{clam_core.1} parent=1 // pred_check
      _
    $region75: #{clam_core.1} parent=1 // pred_check_branch
      %4108 = sbr.rel (0) target = $region77
    $region76: #{clam_core.1} parent=1 // pred_region
      %4109 = dma.done [#allocation5], 1024
    $region77: #{clam_core.1} parent=1 // pred_fallthru
      _
    %4110 = vsyncpa [#allocation4], 1
    %4111 = vsyncpa [#allocation7], 1
    %4112 = vsyncpa [#allocation10], 1
    %4113 = vsyncpa [#allocation13], 1
    %4114 = vsyncpa [#allocation16], 1
    %4115 = vsyncpa [#allocation5], 1

</llo_original>
